<compile_context>
chip_gen: v6e
topology: v6e:2x2x1
jax: 0.10.0
libtpu: 0.0.40
codegen_flags: <defaults>
</compile_context>

<pallas_src>
import functools

import jax
import jax.numpy as jnp
from jax.experimental import pallas as pl
from jax.experimental.pallas import tpu as pltpu


# ----------------------------------------------------------------------------
# Pass 1: multi-layer LSTM recurrence (time-blocked; h/c state in VMEM scratch).
# ----------------------------------------------------------------------------
def _lstm_scan_kernel(x_ref, wih_ref, whh_ref, b_ref, hout_ref, h_scr, c_scr):
    tb = pl.program_id(0)
    L, B, H = h_scr.shape
    TT = x_ref.shape[0]

    @pl.when(tb == 0)
    def _init():
        h_scr[...] = jnp.zeros_like(h_scr)
        c_scr[...] = jnp.zeros_like(c_scr)

    def cell(gates, c_prev):
        # PyTorch gate order along the 4H axis: i, f, g, o.
        i = jax.nn.sigmoid(gates[:, 0 * H:1 * H])
        f = jax.nn.sigmoid(gates[:, 1 * H:2 * H])
        g = jnp.tanh(gates[:, 2 * H:3 * H])
        o = jax.nn.sigmoid(gates[:, 3 * H:4 * H])
        c_new = f * c_prev + i * g
        h_new = o * jnp.tanh(c_new)
        return h_new, c_new

    def step(tt, carry):
        inp = x_ref[tt]                                  # (B, H) compute dtype
        for l in range(L):                               # static unroll over layers
            # Two accumulating dots (f32 accumulation). The inp-dot has no
            # dependency on the recurrent state; only h_prev@W_hh is serial.
            gates = (jnp.dot(inp, wih_ref[l],
                             preferred_element_type=jnp.float32)
                     + jnp.dot(h_scr[l].astype(wih_ref.dtype), whh_ref[l],
                               preferred_element_type=jnp.float32)
                     + b_ref[l])                          # (B, 4H) f32
            h_new, c_new = cell(gates, c_scr[l])
            h_scr[l] = h_new
            c_scr[l] = c_new
            inp = h_new.astype(x_ref.dtype)
        hout_ref[tt] = inp                                # top-layer h (compute dtype)
        return carry

    # Partial unroll: scheduling visibility without blowing vreg live ranges.
    jax.lax.fori_loop(0, TT, step, 0, unroll=min(TT, 8))


# ----------------------------------------------------------------------------
# Pass 2: projection + masked CE; rows parallel, vocab streamed (online LSE).
# ----------------------------------------------------------------------------
def _proj_ce_kernel(h_ref, tgt_ref, m_ref, wout_ref, bout_ref, nll_ref,
                    m_run, se_run, tl_run):
    j = pl.program_id(1)
    nv = pl.num_programs(1)
    MB = h_ref.shape[0]
    VT = wout_ref.shape[-1]

    @pl.when(j == 0)
    def _init():
        m_run[...] = jnp.full_like(m_run, -jnp.inf)
        se_run[...] = jnp.zeros_like(se_run)
        tl_run[...] = jnp.zeros_like(tl_run)

    logits = (jnp.dot(h_ref[...], wout_ref[...],
                      preferred_element_type=jnp.float32)
              + bout_ref[...])                                    # (MB, VT) f32

    # Online (streaming-V) log-sum-exp.
    m_prev = m_run[...]
    m_new = jnp.maximum(m_prev, jnp.max(logits, axis=-1, keepdims=True))
    se_run[...] = (se_run[...] * jnp.exp(m_prev - m_new)
                   + jnp.sum(jnp.exp(logits - m_new), axis=-1, keepdims=True))
    m_run[...] = m_new

    # Target-logit gather for this V tile (iota offset by the tile base).
    tgt = tgt_ref[...]                                            # (MB, 1) int32
    iota = jax.lax.broadcasted_iota(jnp.int32, (MB, VT), 1) + j * VT
    tl_run[...] += jnp.sum(jnp.where(iota == tgt, logits, 0.0),
                           axis=-1, keepdims=True)

    @pl.when(j == nv - 1)
    def _finish():
        lse = m_run[...] + jnp.log(se_run[...])
        nll_ref[...] = (lse - tl_run[...]) * m_ref[...]           # masked per-token NLL


# ----------------------------------------------------------------------------
# Wrapper
# ----------------------------------------------------------------------------
def _block_and_pad(n, candidates):
    """Largest candidate dividing n; otherwise pad n up to a candidate multiple."""
    for c in candidates:
        if c <= n and n % c == 0:
            return c, n
    c = next((c for c in candidates if c <= n), candidates[-1])
    return c, ((n + c - 1) // c) * c


def _weight_spec(shape, index_map, single_buffer):
    if single_buffer:
        # Constant-index weight blocks: skip double-buffering (v7x VMEM lever).
        return pl.BlockSpec(shape, index_map, pipeline_mode=pl.Buffered(1))
    return pl.BlockSpec(shape, index_map)


def seq_model_loss_pallas(S, mask, params, *, compute_dtype=jnp.bfloat16,
                          single_buffer_weights=False):
    """S: (B, T) int32 tokens, mask: (B, T) float32. Returns scalar loss."""
    emb = params["emb"]        # (Vocab, H)  f32
    wih = params["wih"]        # (L, H, 4H)  gate order i,f,g,o
    whh = params["whh"]        # (L, H, 4H)
    b = params["b"]            # (L, 1, 4H)  (= b_ih + b_hh); kept f32 (tiny)
    wout = params["wout"]      # (H, Vocab)
    bout = params["bout"]      # (1, Vocab); kept f32 (tiny)

    B, T = S.shape
    L, H, H4 = wih.shape
    V = wout.shape[-1]
    cdt = compute_dtype

    # ---- glue: embedding lookup + shift-by-one pad (time-major) ----
    h_S = jnp.take(emb, S, axis=0)                                # (B, T, H)
    x = jnp.pad(h_S[:, :-1], ((0, 0), (1, 0), (0, 0)))            # (B, T, H)
    x_tm = jnp.transpose(x, (1, 0, 2)).astype(cdt)                # (T, B, H)

    TT, T_pad = _block_and_pad(T, (32, 16, 8))
    if T_pad != T:
        x_tm = jnp.pad(x_tm, ((0, T_pad - T), (0, 0), (0, 0)))    # trailing pad steps

    wih_c = wih.astype(cdt)
    whh_c = whh.astype(cdt)
    b_f32 = b.astype(jnp.float32)

    # ---- pass 1: sequential LSTM recurrence ----
    h_top = pl.pallas_call(
        _lstm_scan_kernel,
        out_shape=jax.ShapeDtypeStruct((T_pad, B, H), cdt),
        grid_spec=pltpu.PrefetchScalarGridSpec(
            num_scalar_prefetch=0,
            grid=(T_pad // TT,),
            in_specs=[
                pl.BlockSpec((TT, B, H), lambda t: (t, 0, 0)),             # x (streamed)
                _weight_spec((L, H, H4), lambda t: (0, 0, 0), single_buffer_weights),
                _weight_spec((L, H, H4), lambda t: (0, 0, 0), single_buffer_weights),
                _weight_spec((L, 1, H4), lambda t: (0, 0, 0), single_buffer_weights),
            ],
            out_specs=pl.BlockSpec((TT, B, H), lambda t: (t, 0, 0)),
            scratch_shapes=[
                pltpu.VMEM((L, B, H), jnp.float32),   # h state (f32 carry)
                pltpu.VMEM((L, B, H), jnp.float32),   # c state (f32 carry)
            ],
        ),
        compiler_params=pltpu.CompilerParams(
            dimension_semantics=("arbitrary",),
            vmem_limit_bytes=48 * 1024 * 1024),
    )(x_tm, wih_c, whh_c, b_f32)

    h_top = h_top[:T]                                             # drop time padding

    # ---- pass 2: projection + masked CE over (T*B, V) ----
    TB = T * B
    h_flat = h_top.reshape(TB, H)                                 # compute dtype
    tgt_flat = jnp.transpose(S, (1, 0)).reshape(TB, 1).astype(jnp.int32)
    m_flat = jnp.transpose(mask, (1, 0)).reshape(TB, 1).astype(jnp.float32)

    MB, TB_pad = _block_and_pad(TB, (512, 256, 128, 64, 32, 16, 8))
    if TB_pad != TB:
        pad = TB_pad - TB
        h_flat = jnp.pad(h_flat, ((0, pad), (0, 0)))
        tgt_flat = jnp.pad(tgt_flat, ((0, pad), (0, 0)))
        m_flat = jnp.pad(m_flat, ((0, pad), (0, 0)))              # pad rows masked out

    VT = next((c for c in (2048, 1024, 512, 256, 128) if c <= V and V % c == 0), V)
    nV = V // VT
    # TODO(synk): if a production vocab is not a multiple of 128, pad W_out
    # columns and set their bias to -inf instead of a single full-V tile.

    wout_c = wout.astype(cdt)
    bout_f32 = bout.astype(jnp.float32)

    nll = pl.pallas_call(
        _proj_ce_kernel,
        out_shape=jax.ShapeDtypeStruct((TB_pad, 1), jnp.float32),
        grid_spec=pltpu.PrefetchScalarGridSpec(
            num_scalar_prefetch=0,
            grid=(TB_pad // MB, nV),
            in_specs=[
                pl.BlockSpec((MB, H), lambda i, j: (i, 0)),      # h rows
                pl.BlockSpec((MB, 1), lambda i, j: (i, 0)),      # targets
                pl.BlockSpec((MB, 1), lambda i, j: (i, 0)),      # mask
                pl.BlockSpec((H, VT), lambda i, j: (0, j)),      # W_out V tile
                pl.BlockSpec((1, VT), lambda i, j: (0, j)),      # b_out V tile
            ],
            out_specs=pl.BlockSpec((MB, 1), lambda i, j: (i, 0)),
            scratch_shapes=[
                pltpu.VMEM((MB, 1), jnp.float32),    # running max
                pltpu.VMEM((MB, 1), jnp.float32),    # running sum-exp
                pltpu.VMEM((MB, 1), jnp.float32),    # running target logit
            ],
        ),
        compiler_params=pltpu.CompilerParams(
            dimension_semantics=("parallel", "arbitrary"),       # rows across TCs
            vmem_limit_bytes=48 * 1024 * 1024),
    )(h_flat, tgt_flat, m_flat, wout_c, bout_f32)

    # Per-token partials reduced in f32 in the wrapper (precision + v7x parallel).
    return jnp.sum(nll) / jnp.sum(m_flat)


# ----------------------------------------------------------------------------
# Pure-JAX reference (for correctness check).
# ----------------------------------------------------------------------------
def seq_model_loss_ref(S, mask, params):
    emb, wih, whh, b = params["emb"], params["wih"], params["whh"], params["b"]
    wout, bout = params["wout"], params["bout"]
    B, T = S.shape
    L, H, _ = wih.shape

    h_S = jnp.take(emb, S, axis=0)
    x = jnp.pad(h_S[:, :-1], ((0, 0), (1, 0), (0, 0))).astype(jnp.float32)

    h = jnp.zeros((L, B, H), jnp.float32)
    c = jnp.zeros((L, B, H), jnp.float32)
    outs = []
    for t in range(T):
        inp = x[:, t]
        new_h, new_c = [], []
        for l in range(L):
            gates = inp @ wih[l] + h[l] @ whh[l] + b[l, 0]
            i = jax.nn.sigmoid(gates[:, 0 * H:1 * H])
            f = jax.nn.sigmoid(gates[:, 1 * H:2 * H])
            g = jnp.tanh(gates[:, 2 * H:3 * H])
            o = jax.nn.sigmoid(gates[:, 3 * H:4 * H])
            cl = f * c[l] + i * g
            hl = o * jnp.tanh(cl)
            new_h.append(hl)
            new_c.append(cl)
            inp = hl
        h = jnp.stack(new_h)
        c = jnp.stack(new_c)
        outs.append(inp)
    h_top = jnp.stack(outs, axis=1)                       # (B, T, H)
    logits = h_top @ wout + bout                          # (B, T, V)
    logp = jax.nn.log_softmax(logits, axis=-1)
    nll = -jnp.take_along_axis(logp, S[..., None], axis=-1)[..., 0]
    return jnp.sum(nll * mask) / jnp.sum(mask)


def make_params(key, vocab, hidden, depth):
    ks = jax.random.split(key, 6)

    def xavier(k, shape):
        fan_in, fan_out = shape[-2], shape[-1]
        lim = jnp.sqrt(6.0 / (fan_in + fan_out))
        return jax.random.uniform(k, shape, jnp.float32, -lim, lim)

    emb = xavier(ks[0], (vocab, hidden))
    wih = xavier(ks[1], (depth, hidden, 4 * hidden))
    whh = xavier(ks[2], (depth, hidden, 4 * hidden))
    b = 0.1 * jax.random.normal(ks[3], (depth, 1, 4 * hidden), jnp.float32)
    wout = xavier(ks[4], (hidden, vocab))
    bout = 0.1 * jax.random.normal(ks[5], (1, vocab), jnp.float32)
    return dict(emb=emb, wih=wih, whh=whh, b=b, wout=wout, bout=bout)


if __name__ == "__main__":
    B, T, H, V, L = 2, 8, 32, 20, 2
    key = jax.random.PRNGKey(0)
    kp, ks, km = jax.random.split(key, 3)

    params = make_params(kp, vocab=V, hidden=H, depth=L)
    S = jax.random.randint(ks, (B, T), 0, V, dtype=jnp.int32)
    mask = (jax.random.uniform(km, (B, T)) > 0.25).astype(jnp.float32)
    mask = mask.at[:, 0].set(1.0)  # make sure mask.sum() > 0

    loss_ref = seq_model_loss_ref(S, mask, params)

    # f32 compute path: exact algorithm check against the f32 reference.
    loss_f32 = jax.jit(functools.partial(
        seq_model_loss_pallas, compute_dtype=jnp.float32))(S, mask, params)
    loss_f32 = jax.block_until_ready(loss_f32)
    assert jnp.allclose(loss_f32, loss_ref, rtol=1e-3, atol=1e-3), (loss_f32, loss_ref)

    # bf16 compute path (production config: bf16 MXU operands, f32 accumulation).
    loss_bf16 = jax.jit(functools.partial(
        seq_model_loss_pallas, compute_dtype=jnp.bfloat16))(S, mask, params)
    loss_bf16 = jax.block_until_ready(loss_bf16)
    assert jnp.allclose(loss_bf16, loss_ref, rtol=3e-2, atol=3e-2), (loss_bf16, loss_ref)

    # Optional v7x VMEM lever: single-buffered constant weight blocks.
    # Guarded: pipeline_mode=pl.Buffered(1) support varies across JAX builds.
    try:
        loss_sb = jax.jit(functools.partial(
            seq_model_loss_pallas, compute_dtype=jnp.bfloat16,
            single_buffer_weights=True))(S, mask, params)
        jax.block_until_ready(loss_sb)
    except Exception:
        pass  # fall back silently; default path above is already verified

    print("KERNEL_OK")
</pallas_src>

<mosaic_0001>
module attributes {stable_mosaic.version = 11 : i64} {
  func.func @_proj_ce_kernel(%arg0: i32, %arg1: i32, %arg2: memref<16x32xf32, #tpu.memory_space<vmem>>, %arg3: memref<16x1xi32, #tpu.memory_space<vmem>>, %arg4: memref<16x1xf32, #tpu.memory_space<vmem>>, %arg5: memref<32x20xf32, #tpu.memory_space<vmem>>, %arg6: memref<1x20xf32, #tpu.memory_space<vmem>>, %arg7: memref<16x1xf32, #tpu.memory_space<vmem>>, %arg8: memref<16x1xf32, #tpu.memory_space<vmem>>, %arg9: memref<16x1xf32, #tpu.memory_space<vmem>>, %arg10: memref<16x1xf32, #tpu.memory_space<vmem>>) attributes {dimension_semantics = [#tpu.dimension_semantics<parallel>, #tpu.dimension_semantics<arbitrary>], iteration_bounds = array<i64: 1, 1>, scalar_prefetch = 0 : i64, scratch_operands = 3 : i64, tpu.core_type = #tpu.core_type<tc>, window_params = [{transform_indices = @transform_0, window_bounds = array<i64: 16, 32>}, {transform_indices = @transform_1, window_bounds = array<i64: 16, 1>}, {transform_indices = @transform_2, window_bounds = array<i64: 16, 1>}, {transform_indices = @transform_3, window_bounds = array<i64: 32, 20>}, {transform_indices = @transform_4, window_bounds = array<i64: 1, 20>}, {transform_indices = @transform_5, window_bounds = array<i64: 16, 1>}]} {
    %c0_i32 = arith.constant 0 : i32
    %0 = arith.cmpi eq, %arg1, %c0_i32 : i32
    %1 = arith.extui %0 : i1 to i32
    %c0_i32_0 = arith.constant 0 : i32
    %2 = arith.cmpi ne, %1, %c0_i32_0 : i32
    scf.if %2 {
      %cst_26 = arith.constant 0xFF800000 : f32
      %42 = vector.broadcast %cst_26 : f32 to vector<16x1xf32>
      %c0_27 = arith.constant 0 : index
      %c0_28 = arith.constant 0 : index
      %43 = vector.load %arg8[%c0_27, %c0_28] : memref<16x1xf32, #tpu.memory_space<vmem>>, vector<16x1xf32>
      tpu.vector_store %arg8[%c0_27, %c0_28], %42 {strides = array<i32>} : memref<16x1xf32, #tpu.memory_space<vmem>>, vector<16x1xf32>,
      %cst_29 = arith.constant 0.000000e+00 : f32
      %44 = vector.broadcast %cst_29 : f32 to vector<16x1xf32>
      %c0_30 = arith.constant 0 : index
      %c0_31 = arith.constant 0 : index
      %45 = vector.load %arg9[%c0_30, %c0_31] : memref<16x1xf32, #tpu.memory_space<vmem>>, vector<16x1xf32>
      tpu.vector_store %arg9[%c0_30, %c0_31], %44 {strides = array<i32>} : memref<16x1xf32, #tpu.memory_space<vmem>>, vector<16x1xf32>,
      %cst_32 = arith.constant 0.000000e+00 : f32
      %46 = vector.broadcast %cst_32 : f32 to vector<16x1xf32>
      %c0_33 = arith.constant 0 : index
      %c0_34 = arith.constant 0 : index
      %47 = vector.load %arg10[%c0_33, %c0_34] : memref<16x1xf32, #tpu.memory_space<vmem>>, vector<16x1xf32>
      tpu.vector_store %arg10[%c0_33, %c0_34], %46 {strides = array<i32>} : memref<16x1xf32, #tpu.memory_space<vmem>>, vector<16x1xf32>,
    } else {
    }
    %c0 = arith.constant 0 : index
    %c0_1 = arith.constant 0 : index
    %3 = vector.load %arg2[%c0, %c0_1] : memref<16x32xf32, #tpu.memory_space<vmem>>, vector<16x32xf32>
    %c0_2 = arith.constant 0 : index
    %c0_3 = arith.constant 0 : index
    %4 = vector.load %arg5[%c0_2, %c0_3] : memref<32x20xf32, #tpu.memory_space<vmem>>, vector<32x20xf32>
    %cst = arith.constant dense<0.000000e+00> : vector<16x20xf32>
    %5 = tpu.matmul %3, %4, %cst {dimension_numbers = #tpu.dot_dimension_numbers<[1], [0], [0], [1], [0, 0, 1, 1], [], []>} : vector<16x32xf32>, vector<32x20xf32>, vector<16x20xf32> -> vector<16x20xf32>
    %c0_4 = arith.constant 0 : index
    %c0_5 = arith.constant 0 : index
    %6 = vector.load %arg6[%c0_4, %c0_5] : memref<1x20xf32, #tpu.memory_space<vmem>>, vector<1x20xf32>
    %7 = vector.broadcast %6 : vector<1x20xf32> to vector<16x20xf32>
    %8 = arith.addf %5, %7 : vector<16x20xf32>
    %c0_6 = arith.constant 0 : index
    %c0_7 = arith.constant 0 : index
    %9 = vector.load %arg8[%c0_6, %c0_7] : memref<16x1xf32, #tpu.memory_space<vmem>>, vector<16x1xf32>
    %cst_8 = arith.constant dense<0xFF800000> : vector<16xf32>
    %10 = vector.multi_reduction <maximumf>, %8, %cst_8 [1] : vector<16x20xf32> to vector<16xf32>
    %11 = vector.shape_cast %10 : vector<16xf32> to vector<16x1xf32>
    %12 = arith.maximumf %9, %11 : vector<16x1xf32>
    %c0_9 = arith.constant 0 : index
    %c0_10 = arith.constant 0 : index
    %13 = vector.load %arg9[%c0_9, %c0_10] : memref<16x1xf32, #tpu.memory_space<vmem>>, vector<16x1xf32>
    %14 = arith.subf %9, %12 : vector<16x1xf32>
    %15 = math.exp %14 : vector<16x1xf32>
    %16 = arith.mulf %13, %15 : vector<16x1xf32>
    %17 = vector.broadcast %12 : vector<16x1xf32> to vector<16x20xf32>
    %18 = arith.subf %8, %17 : vector<16x20xf32>
    %19 = math.exp %18 : vector<16x20xf32>
    %cst_11 = arith.constant dense<0.000000e+00> : vector<16xf32>
    %20 = vector.multi_reduction <add>, %19, %cst_11 [1] : vector<16x20xf32> to vector<16xf32>
    %21 = vector.shape_cast %20 : vector<16xf32> to vector<16x1xf32>
    %22 = arith.addf %16, %21 : vector<16x1xf32>
    %c0_12 = arith.constant 0 : index
    %c0_13 = arith.constant 0 : index
    %23 = vector.load %arg9[%c0_12, %c0_13] : memref<16x1xf32, #tpu.memory_space<vmem>>, vector<16x1xf32>
    tpu.vector_store %arg9[%c0_12, %c0_13], %22 {strides = array<i32>} : memref<16x1xf32, #tpu.memory_space<vmem>>, vector<16x1xf32>,
    %c0_14 = arith.constant 0 : index
    %c0_15 = arith.constant 0 : index
    %24 = vector.load %arg8[%c0_14, %c0_15] : memref<16x1xf32, #tpu.memory_space<vmem>>, vector<16x1xf32>
    tpu.vector_store %arg8[%c0_14, %c0_15], %12 {strides = array<i32>} : memref<16x1xf32, #tpu.memory_space<vmem>>, vector<16x1xf32>,
    %c0_16 = arith.constant 0 : index
    %c0_17 = arith.constant 0 : index
    %25 = vector.load %arg3[%c0_16, %c0_17] : memref<16x1xi32, #tpu.memory_space<vmem>>, vector<16x1xi32>
    %26 = tpu.iota {dimensions = array<i32: 1>} : vector<16x20xi32>
    %c20_i32 = arith.constant 20 : i32
    %27 = arith.muli %arg1, %c20_i32 : i32
    %28 = vector.broadcast %27 : i32 to vector<16x20xi32>
    %29 = arith.addi %26, %28 : vector<16x20xi32>
    %c0_18 = arith.constant 0 : index
    %c0_19 = arith.constant 0 : index
    %30 = vector.load %arg10[%c0_18, %c0_19] : memref<16x1xf32, #tpu.memory_space<vmem>>, vector<16x1xf32>
    %31 = vector.broadcast %25 : vector<16x1xi32> to vector<16x20xi32>
    %32 = arith.cmpi eq, %29, %31 : vector<16x20xi32>
    %cst_20 = arith.constant 0.000000e+00 : f32
    %33 = vector.broadcast %cst_20 : f32 to vector<16x20xf32>
    %34 = arith.select %32, %8, %33 : vector<16x20xi1>, vector<16x20xf32>
    %cst_21 = arith.constant dense<0.000000e+00> : vector<16xf32>
    %35 = vector.multi_reduction <add>, %34, %cst_21 [1] : vector<16x20xf32> to vector<16xf32>
    %36 = vector.shape_cast %35 : vector<16xf32> to vector<16x1xf32>
    %37 = arith.addf %30, %36 : vector<16x1xf32>
    %c0_22 = arith.constant 0 : index
    %c0_23 = arith.constant 0 : index
    %38 = vector.load %arg10[%c0_22, %c0_23] : memref<16x1xf32, #tpu.memory_space<vmem>>, vector<16x1xf32>
    tpu.vector_store %arg10[%c0_22, %c0_23], %37 {strides = array<i32>} : memref<16x1xf32, #tpu.memory_space<vmem>>, vector<16x1xf32>,
    %c0_i32_24 = arith.constant 0 : i32
    %39 = arith.cmpi eq, %arg1, %c0_i32_24 : i32
    %40 = arith.extui %39 : i1 to i32
    %c0_i32_25 = arith.constant 0 : i32
    %41 = arith.cmpi ne, %40, %c0_i32_25 : i32
    scf.if %41 {
      %c0_26 = arith.constant 0 : index
      %c0_27 = arith.constant 0 : index
      %42 = vector.load %arg8[%c0_26, %c0_27] : memref<16x1xf32, #tpu.memory_space<vmem>>, vector<16x1xf32>
      %c0_28 = arith.constant 0 : index
      %c0_29 = arith.constant 0 : index
      %43 = vector.load %arg9[%c0_28, %c0_29] : memref<16x1xf32, #tpu.memory_space<vmem>>, vector<16x1xf32>
      %44 = math.log %43 : vector<16x1xf32>
      %45 = arith.addf %42, %44 : vector<16x1xf32>
      %c0_30 = arith.constant 0 : index
      %c0_31 = arith.constant 0 : index
      %46 = vector.load %arg10[%c0_30, %c0_31] : memref<16x1xf32, #tpu.memory_space<vmem>>, vector<16x1xf32>
      %47 = arith.subf %45, %46 : vector<16x1xf32>
      %c0_32 = arith.constant 0 : index
      %c0_33 = arith.constant 0 : index
      %48 = vector.load %arg4[%c0_32, %c0_33] : memref<16x1xf32, #tpu.memory_space<vmem>>, vector<16x1xf32>
      %49 = arith.mulf %47, %48 : vector<16x1xf32>
      %c0_34 = arith.constant 0 : index
      %c0_35 = arith.constant 0 : index
      %50 = vector.load %arg7[%c0_34, %c0_35] : memref<16x1xf32, #tpu.memory_space<vmem>>, vector<16x1xf32>
      tpu.vector_store %arg7[%c0_34, %c0_35], %49 {strides = array<i32>} : memref<16x1xf32, #tpu.memory_space<vmem>>, vector<16x1xf32>,
    } else {
    }
    return
  }
  func.func @transform_0(%arg0: i32, %arg1: i32) -> (i32, i32) {
    %c0_i32 = arith.constant 0 : i32
    %c0_i32_0 = arith.constant 0 : i32
    return %arg0, %c0_i32 : i32, i32
  }
  func.func @transform_1(%arg0: i32, %arg1: i32) -> (i32, i32) {
    %c0_i32 = arith.constant 0 : i32
    %c0_i32_0 = arith.constant 0 : i32
    return %arg0, %c0_i32 : i32, i32
  }
  func.func @transform_2(%arg0: i32, %arg1: i32) -> (i32, i32) {
    %c0_i32 = arith.constant 0 : i32
    %c0_i32_0 = arith.constant 0 : i32
    return %arg0, %c0_i32 : i32, i32
  }
  func.func @transform_3(%arg0: i32, %arg1: i32) -> (i32, i32) {
    %c0_i32 = arith.constant 0 : i32
    %c0_i32_0 = arith.constant 0 : i32
    return %c0_i32, %arg1 : i32, i32
  }
  func.func @transform_4(%arg0: i32, %arg1: i32) -> (i32, i32) {
    %c0_i32 = arith.constant 0 : i32
    %c0_i32_0 = arith.constant 0 : i32
    return %c0_i32, %arg1 : i32, i32
  }
  func.func @transform_5(%arg0: i32, %arg1: i32) -> (i32, i32) {
    %c0_i32 = arith.constant 0 : i32
    %c0_i32_0 = arith.constant 0 : i32
    return %arg0, %c0_i32 : i32, i32
  }
}

module attributes {stable_mosaic.version = 11 : i64} {
  func.func @_lstm_scan_kernel(%arg0: i32, %arg1: memref<8x2x32xf32, #tpu.memory_space<vmem>>, %arg2: memref<2x32x128xf32, #tpu.memory_space<vmem>>, %arg3: memref<2x32x128xf32, #tpu.memory_space<vmem>>, %arg4: memref<2x1x128xf32, #tpu.memory_space<vmem>>, %arg5: memref<8x2x32xf32, #tpu.memory_space<vmem>>, %arg6: memref<2x2x32xf32, #tpu.memory_space<vmem>>, %arg7: memref<2x2x32xf32, #tpu.memory_space<vmem>>) attributes {dimension_semantics = [#tpu.dimension_semantics<arbitrary>], iteration_bounds = array<i64: 1>, scalar_prefetch = 0 : i64, scratch_operands = 2 : i64, tpu.core_type = #tpu.core_type<tc>, window_params = [{transform_indices = @transform_0, window_bounds = array<i64: 8, 2, 32>}, {pipeline_mode = #tpu.pipeline_mode<synchronous>, transform_indices = @transform_1, window_bounds = array<i64: 2, 32, 128>}, {pipeline_mode = #tpu.pipeline_mode<synchronous>, transform_indices = @transform_2, window_bounds = array<i64: 2, 32, 128>}, {pipeline_mode = #tpu.pipeline_mode<synchronous>, transform_indices = @transform_3, window_bounds = array<i64: 2, 1, 128>}, {transform_indices = @transform_4, window_bounds = array<i64: 8, 2, 32>}]} {
    %c0_i32 = arith.constant 0 : i32
    %0 = arith.cmpi eq, %arg0, %c0_i32 : i32
    %1 = arith.extui %0 : i1 to i32
    %c0_i32_0 = arith.constant 0 : i32
    %2 = arith.cmpi ne, %1, %c0_i32_0 : i32
    scf.if %2 {
      %cst_447 = arith.constant 0.000000e+00 : f32
      %795 = vector.broadcast %cst_447 : f32 to vector<2x2x32xf32>
      %c0_448 = arith.constant 0 : index
      %c0_449 = arith.constant 0 : index
      %c0_450 = arith.constant 0 : index
      %796 = vector.load %arg6[%c0_448, %c0_449, %c0_450] : memref<2x2x32xf32, #tpu.memory_space<vmem>>, vector<2x2x32xf32>
      tpu.vector_store %arg6[%c0_448, %c0_449, %c0_450], %795 {strides = array<i32>} : memref<2x2x32xf32, #tpu.memory_space<vmem>>, vector<2x2x32xf32>,
      %cst_451 = arith.constant 0.000000e+00 : f32
      %797 = vector.broadcast %cst_451 : f32 to vector<2x2x32xf32>
      %c0_452 = arith.constant 0 : index
      %c0_453 = arith.constant 0 : index
      %c0_454 = arith.constant 0 : index
      %798 = vector.load %arg7[%c0_452, %c0_453, %c0_454] : memref<2x2x32xf32, #tpu.memory_space<vmem>>, vector<2x2x32xf32>
      tpu.vector_store %arg7[%c0_452, %c0_453, %c0_454], %797 {strides = array<i32>} : memref<2x2x32xf32, #tpu.memory_space<vmem>>, vector<2x2x32xf32>,
    } else {
    }
    %c0_i32_1 = arith.constant 0 : i32
    %3 = arith.index_cast %c0_i32_1 : i32 to index
    %c0 = arith.constant 0 : index
    %c0_2 = arith.constant 0 : index
    %4 = vector.load %arg1[%3, %c0, %c0_2] : memref<8x2x32xf32, #tpu.memory_space<vmem>>, vector<1x2x32xf32>
    %5 = vector.shape_cast %4 : vector<1x2x32xf32> to vector<2x32xf32>
    %c0_3 = arith.constant 0 : index
    %c0_4 = arith.constant 0 : index
    %c0_5 = arith.constant 0 : index
    %6 = vector.load %arg2[%c0_3, %c0_4, %c0_5] : memref<2x32x128xf32, #tpu.memory_space<vmem>>, vector<1x32x128xf32>
    %7 = vector.shape_cast %6 : vector<1x32x128xf32> to vector<32x128xf32>
    %cst = arith.constant dense<0.000000e+00> : vector<2x128xf32>
    %8 = tpu.matmul %5, %7, %cst {dimension_numbers = #tpu.dot_dimension_numbers<[1], [0], [0], [1], [0, 0, 1, 1], [], []>} : vector<2x32xf32>, vector<32x128xf32>, vector<2x128xf32> -> vector<2x128xf32>
    %c0_6 = arith.constant 0 : index
    %c0_7 = arith.constant 0 : index
    %c0_8 = arith.constant 0 : index
    %9 = vector.load %arg6[%c0_6, %c0_7, %c0_8] : memref<2x2x32xf32, #tpu.memory_space<vmem>>, vector<1x2x32xf32>
    %10 = vector.shape_cast %9 : vector<1x2x32xf32> to vector<2x32xf32>
    %c0_9 = arith.constant 0 : index
    %c0_10 = arith.constant 0 : index
    %c0_11 = arith.constant 0 : index
    %11 = vector.load %arg3[%c0_9, %c0_10, %c0_11] : memref<2x32x128xf32, #tpu.memory_space<vmem>>, vector<1x32x128xf32>
    %12 = vector.shape_cast %11 : vector<1x32x128xf32> to vector<32x128xf32>
    %cst_12 = arith.constant dense<0.000000e+00> : vector<2x128xf32>
    %13 = tpu.matmul %10, %12, %cst_12 {dimension_numbers = #tpu.dot_dimension_numbers<[1], [0], [0], [1], [0, 0, 1, 1], [], []>} : vector<2x32xf32>, vector<32x128xf32>, vector<2x128xf32> -> vector<2x128xf32>
    %14 = arith.addf %8, %13 : vector<2x128xf32>
    %c0_13 = arith.constant 0 : index
    %c0_14 = arith.constant 0 : index
    %c0_15 = arith.constant 0 : index
    %15 = vector.load %arg4[%c0_13, %c0_14, %c0_15] : memref<2x1x128xf32, #tpu.memory_space<vmem>>, vector<1x1x128xf32>
    %16 = vector.shape_cast %15 : vector<1x1x128xf32> to vector<1x128xf32>
    %17 = vector.broadcast %16 : vector<1x128xf32> to vector<2x128xf32>
    %18 = arith.addf %14, %17 : vector<2x128xf32>
    %c0_16 = arith.constant 0 : index
    %c0_17 = arith.constant 0 : index
    %c0_18 = arith.constant 0 : index
    %19 = vector.load %arg7[%c0_16, %c0_17, %c0_18] : memref<2x2x32xf32, #tpu.memory_space<vmem>>, vector<1x2x32xf32>
    %20 = vector.shape_cast %19 : vector<1x2x32xf32> to vector<2x32xf32>
    %21 = vector.extract_strided_slice %18 {offsets = [0, 0], sizes = [2, 32], strides = [1, 1]} : vector<2x128xf32> to vector<2x32xf32>
    %22 = arith.negf %21 : vector<2x32xf32>
    %23 = math.exp %22 : vector<2x32xf32>
    %cst_19 = arith.constant 1.000000e+00 : f32
    %24 = vector.broadcast %cst_19 : f32 to vector<2x32xf32>
    %25 = arith.addf %24, %23 : vector<2x32xf32>
    %26 = arith.divf %24, %25 : vector<2x32xf32>
    %27 = vector.extract_strided_slice %18 {offsets = [0, 32], sizes = [2, 32], strides = [1, 1]} : vector<2x128xf32> to vector<2x32xf32>
    %28 = arith.negf %27 : vector<2x32xf32>
    %29 = math.exp %28 : vector<2x32xf32>
    %cst_20 = arith.constant 1.000000e+00 : f32
    %30 = vector.broadcast %cst_20 : f32 to vector<2x32xf32>
    %31 = arith.addf %30, %29 : vector<2x32xf32>
    %32 = arith.divf %30, %31 : vector<2x32xf32>
    %33 = vector.extract_strided_slice %18 {offsets = [0, 64], sizes = [2, 32], strides = [1, 1]} : vector<2x128xf32> to vector<2x32xf32>
    %34 = math.tanh %33 : vector<2x32xf32>
    %35 = vector.extract_strided_slice %18 {offsets = [0, 96], sizes = [2, 32], strides = [1, 1]} : vector<2x128xf32> to vector<2x32xf32>
    %36 = arith.negf %35 : vector<2x32xf32>
    %37 = math.exp %36 : vector<2x32xf32>
    %cst_21 = arith.constant 1.000000e+00 : f32
    %38 = vector.broadcast %cst_21 : f32 to vector<2x32xf32>
    %39 = arith.addf %38, %37 : vector<2x32xf32>
    %40 = arith.divf %38, %39 : vector<2x32xf32>
    %41 = arith.mulf %32, %20 : vector<2x32xf32>
    %42 = arith.mulf %26, %34 : vector<2x32xf32>
    %43 = arith.addf %41, %42 : vector<2x32xf32>
    %44 = math.tanh %43 : vector<2x32xf32>
    %45 = arith.mulf %40, %44 : vector<2x32xf32>
    %c0_22 = arith.constant 0 : index
    %c0_23 = arith.constant 0 : index
    %c0_24 = arith.constant 0 : index
    %46 = vector.load %arg6[%c0_22, %c0_23, %c0_24] : memref<2x2x32xf32, #tpu.memory_space<vmem>>, vector<1x2x32xf32>
    %47 = vector.shape_cast %46 : vector<1x2x32xf32> to vector<2x32xf32>
    %48 = vector.shape_cast %45 : vector<2x32xf32> to vector<1x2x32xf32>
    tpu.vector_store %arg6[%c0_22, %c0_23, %c0_24], %48 {strides = array<i32>} : memref<2x2x32xf32, #tpu.memory_space<vmem>>, vector<1x2x32xf32>,
    %c0_25 = arith.constant 0 : index
    %c0_26 = arith.constant 0 : index
    %c0_27 = arith.constant 0 : index
    %49 = vector.load %arg7[%c0_25, %c0_26, %c0_27] : memref<2x2x32xf32, #tpu.memory_space<vmem>>, vector<1x2x32xf32>
    %50 = vector.shape_cast %49 : vector<1x2x32xf32> to vector<2x32xf32>
    %51 = vector.shape_cast %43 : vector<2x32xf32> to vector<1x2x32xf32>
    tpu.vector_store %arg7[%c0_25, %c0_26, %c0_27], %51 {strides = array<i32>} : memref<2x2x32xf32, #tpu.memory_space<vmem>>, vector<1x2x32xf32>,
    %c1 = arith.constant 1 : index
    %c0_28 = arith.constant 0 : index
    %c0_29 = arith.constant 0 : index
    %52 = vector.load %arg2[%c1, %c0_28, %c0_29] : memref<2x32x128xf32, #tpu.memory_space<vmem>>, vector<1x32x128xf32>
    %53 = vector.shape_cast %52 : vector<1x32x128xf32> to vector<32x128xf32>
    %cst_30 = arith.constant dense<0.000000e+00> : vector<2x128xf32>
    %54 = tpu.matmul %45, %53, %cst_30 {dimension_numbers = #tpu.dot_dimension_numbers<[1], [0], [0], [1], [0, 0, 1, 1], [], []>} : vector<2x32xf32>, vector<32x128xf32>, vector<2x128xf32> -> vector<2x128xf32>
    %c1_31 = arith.constant 1 : index
    %c0_32 = arith.constant 0 : index
    %c0_33 = arith.constant 0 : index
    %55 = vector.load %arg6[%c1_31, %c0_32, %c0_33] : memref<2x2x32xf32, #tpu.memory_space<vmem>>, vector<1x2x32xf32>
    %56 = vector.shape_cast %55 : vector<1x2x32xf32> to vector<2x32xf32>
    %c1_34 = arith.constant 1 : index
    %c0_35 = arith.constant 0 : index
    %c0_36 = arith.constant 0 : index
    %57 = vector.load %arg3[%c1_34, %c0_35, %c0_36] : memref<2x32x128xf32, #tpu.memory_space<vmem>>, vector<1x32x128xf32>
    %58 = vector.shape_cast %57 : vector<1x32x128xf32> to vector<32x128xf32>
    %cst_37 = arith.constant dense<0.000000e+00> : vector<2x128xf32>
    %59 = tpu.matmul %56, %58, %cst_37 {dimension_numbers = #tpu.dot_dimension_numbers<[1], [0], [0], [1], [0, 0, 1, 1], [], []>} : vector<2x32xf32>, vector<32x128xf32>, vector<2x128xf32> -> vector<2x128xf32>
    %60 = arith.addf %54, %59 : vector<2x128xf32>
    %c1_38 = arith.constant 1 : index
    %c0_39 = arith.constant 0 : index
    %c0_40 = arith.constant 0 : index
    %61 = vector.load %arg4[%c1_38, %c0_39, %c0_40] : memref<2x1x128xf32, #tpu.memory_space<vmem>>, vector<1x1x128xf32>
    %62 = vector.shape_cast %61 : vector<1x1x128xf32> to vector<1x128xf32>
    %63 = vector.broadcast %62 : vector<1x128xf32> to vector<2x128xf32>
    %64 = arith.addf %60, %63 : vector<2x128xf32>
    %c1_41 = arith.constant 1 : index
    %c0_42 = arith.constant 0 : index
    %c0_43 = arith.constant 0 : index
    %65 = vector.load %arg7[%c1_41, %c0_42, %c0_43] : memref<2x2x32xf32, #tpu.memory_space<vmem>>, vector<1x2x32xf32>
    %66 = vector.shape_cast %65 : vector<1x2x32xf32> to vector<2x32xf32>
    %67 = vector.extract_strided_slice %64 {offsets = [0, 0], sizes = [2, 32], strides = [1, 1]} : vector<2x128xf32> to vector<2x32xf32>
    %68 = arith.negf %67 : vector<2x32xf32>
    %69 = math.exp %68 : vector<2x32xf32>
    %cst_44 = arith.constant 1.000000e+00 : f32
    %70 = vector.broadcast %cst_44 : f32 to vector<2x32xf32>
    %71 = arith.addf %70, %69 : vector<2x32xf32>
    %72 = arith.divf %70, %71 : vector<2x32xf32>
    %73 = vector.extract_strided_slice %64 {offsets = [0, 32], sizes = [2, 32], strides = [1, 1]} : vector<2x128xf32> to vector<2x32xf32>
    %74 = arith.negf %73 : vector<2x32xf32>
    %75 = math.exp %74 : vector<2x32xf32>
    %cst_45 = arith.constant 1.000000e+00 : f32
    %76 = vector.broadcast %cst_45 : f32 to vector<2x32xf32>
    %77 = arith.addf %76, %75 : vector<2x32xf32>
    %78 = arith.divf %76, %77 : vector<2x32xf32>
    %79 = vector.extract_strided_slice %64 {offsets = [0, 64], sizes = [2, 32], strides = [1, 1]} : vector<2x128xf32> to vector<2x32xf32>
    %80 = math.tanh %79 : vector<2x32xf32>
    %81 = vector.extract_strided_slice %64 {offsets = [0, 96], sizes = [2, 32], strides = [1, 1]} : vector<2x128xf32> to vector<2x32xf32>
    %82 = arith.negf %81 : vector<2x32xf32>
    %83 = math.exp %82 : vector<2x32xf32>
    %cst_46 = arith.constant 1.000000e+00 : f32
    %84 = vector.broadcast %cst_46 : f32 to vector<2x32xf32>
    %85 = arith.addf %84, %83 : vector<2x32xf32>
    %86 = arith.divf %84, %85 : vector<2x32xf32>
    %87 = arith.mulf %78, %66 : vector<2x32xf32>
    %88 = arith.mulf %72, %80 : vector<2x32xf32>
    %89 = arith.addf %87, %88 : vector<2x32xf32>
    %90 = math.tanh %89 : vector<2x32xf32>
    %91 = arith.mulf %86, %90 : vector<2x32xf32>
    %c1_47 = arith.constant 1 : index
    %c0_48 = arith.constant 0 : index
    %c0_49 = arith.constant 0 : index
    %92 = vector.load %arg6[%c1_47, %c0_48, %c0_49] : memref<2x2x32xf32, #tpu.memory_space<vmem>>, vector<1x2x32xf32>
    %93 = vector.shape_cast %92 : vector<1x2x32xf32> to vector<2x32xf32>
    %94 = vector.shape_cast %91 : vector<2x32xf32> to vector<1x2x32xf32>
    tpu.vector_store %arg6[%c1_47, %c0_48, %c0_49], %94 {strides = array<i32>} : memref<2x2x32xf32, #tpu.memory_space<vmem>>, vector<1x2x32xf32>,
    %c1_50 = arith.constant 1 : index
    %c0_51 = arith.constant 0 : index
    %c0_52 = arith.constant 0 : index
    %95 = vector.load %arg7[%c1_50, %c0_51, %c0_52] : memref<2x2x32xf32, #tpu.memory_space<vmem>>, vector<1x2x32xf32>
    %96 = vector.shape_cast %95 : vector<1x2x32xf32> to vector<2x32xf32>
    %97 = vector.shape_cast %89 : vector<2x32xf32> to vector<1x2x32xf32>
    tpu.vector_store %arg7[%c1_50, %c0_51, %c0_52], %97 {strides = array<i32>} : memref<2x2x32xf32, #tpu.memory_space<vmem>>, vector<1x2x32xf32>,
    %98 = arith.index_cast %c0_i32_1 : i32 to index
    %c0_53 = arith.constant 0 : index
    %c0_54 = arith.constant 0 : index
    %99 = vector.load %arg5[%98, %c0_53, %c0_54] : memref<8x2x32xf32, #tpu.memory_space<vmem>>, vector<1x2x32xf32>
    %100 = vector.shape_cast %99 : vector<1x2x32xf32> to vector<2x32xf32>
    %101 = vector.shape_cast %91 : vector<2x32xf32> to vector<1x2x32xf32>
    tpu.vector_store %arg5[%98, %c0_53, %c0_54], %101 {strides = array<i32>} : memref<8x2x32xf32, #tpu.memory_space<vmem>>, vector<1x2x32xf32>,
    %c1_i32 = arith.constant 1 : i32
    %102 = arith.index_cast %c1_i32 : i32 to index
    %c0_55 = arith.constant 0 : index
    %c0_56 = arith.constant 0 : index
    %103 = vector.load %arg1[%102, %c0_55, %c0_56] : memref<8x2x32xf32, #tpu.memory_space<vmem>>, vector<1x2x32xf32>
    %104 = vector.shape_cast %103 : vector<1x2x32xf32> to vector<2x32xf32>
    %c0_57 = arith.constant 0 : index
    %c0_58 = arith.constant 0 : index
    %c0_59 = arith.constant 0 : index
    %105 = vector.load %arg2[%c0_57, %c0_58, %c0_59] : memref<2x32x128xf32, #tpu.memory_space<vmem>>, vector<1x32x128xf32>
    %106 = vector.shape_cast %105 : vector<1x32x128xf32> to vector<32x128xf32>
    %cst_60 = arith.constant dense<0.000000e+00> : vector<2x128xf32>
    %107 = tpu.matmul %104, %106, %cst_60 {dimension_numbers = #tpu.dot_dimension_numbers<[1], [0], [0], [1], [0, 0, 1, 1], [], []>} : vector<2x32xf32>, vector<32x128xf32>, vector<2x128xf32> -> vector<2x128xf32>
    %c0_61 = arith.constant 0 : index
    %c0_62 = arith.constant 0 : index
    %c0_63 = arith.constant 0 : index
    %108 = vector.load %arg6[%c0_61, %c0_62, %c0_63] : memref<2x2x32xf32, #tpu.memory_space<vmem>>, vector<1x2x32xf32>
    %109 = vector.shape_cast %108 : vector<1x2x32xf32> to vector<2x32xf32>
    %c0_64 = arith.constant 0 : index
    %c0_65 = arith.constant 0 : index
    %c0_66 = arith.constant 0 : index
    %110 = vector.load %arg3[%c0_64, %c0_65, %c0_66] : memref<2x32x128xf32, #tpu.memory_space<vmem>>, vector<1x32x128xf32>
    %111 = vector.shape_cast %110 : vector<1x32x128xf32> to vector<32x128xf32>
    %cst_67 = arith.constant dense<0.000000e+00> : vector<2x128xf32>
    %112 = tpu.matmul %109, %111, %cst_67 {dimension_numbers = #tpu.dot_dimension_numbers<[1], [0], [0], [1], [0, 0, 1, 1], [], []>} : vector<2x32xf32>, vector<32x128xf32>, vector<2x128xf32> -> vector<2x128xf32>
    %113 = arith.addf %107, %112 : vector<2x128xf32>
    %c0_68 = arith.constant 0 : index
    %c0_69 = arith.constant 0 : index
    %c0_70 = arith.constant 0 : index
    %114 = vector.load %arg4[%c0_68, %c0_69, %c0_70] : memref<2x1x128xf32, #tpu.memory_space<vmem>>, vector<1x1x128xf32>
    %115 = vector.shape_cast %114 : vector<1x1x128xf32> to vector<1x128xf32>
    %116 = vector.broadcast %115 : vector<1x128xf32> to vector<2x128xf32>
    %117 = arith.addf %113, %116 : vector<2x128xf32>
    %c0_71 = arith.constant 0 : index
    %c0_72 = arith.constant 0 : index
    %c0_73 = arith.constant 0 : index
    %118 = vector.load %arg7[%c0_71, %c0_72, %c0_73] : memref<2x2x32xf32, #tpu.memory_space<vmem>>, vector<1x2x32xf32>
    %119 = vector.shape_cast %118 : vector<1x2x32xf32> to vector<2x32xf32>
    %120 = vector.extract_strided_slice %117 {offsets = [0, 0], sizes = [2, 32], strides = [1, 1]} : vector<2x128xf32> to vector<2x32xf32>
    %121 = arith.negf %120 : vector<2x32xf32>
    %122 = math.exp %121 : vector<2x32xf32>
    %cst_74 = arith.constant 1.000000e+00 : f32
    %123 = vector.broadcast %cst_74 : f32 to vector<2x32xf32>
    %124 = arith.addf %123, %122 : vector<2x32xf32>
    %125 = arith.divf %123, %124 : vector<2x32xf32>
    %126 = vector.extract_strided_slice %117 {offsets = [0, 32], sizes = [2, 32], strides = [1, 1]} : vector<2x128xf32> to vector<2x32xf32>
    %127 = arith.negf %126 : vector<2x32xf32>
    %128 = math.exp %127 : vector<2x32xf32>
    %cst_75 = arith.constant 1.000000e+00 : f32
    %129 = vector.broadcast %cst_75 : f32 to vector<2x32xf32>
    %130 = arith.addf %129, %128 : vector<2x32xf32>
    %131 = arith.divf %129, %130 : vector<2x32xf32>
    %132 = vector.extract_strided_slice %117 {offsets = [0, 64], sizes = [2, 32], strides = [1, 1]} : vector<2x128xf32> to vector<2x32xf32>
    %133 = math.tanh %132 : vector<2x32xf32>
    %134 = vector.extract_strided_slice %117 {offsets = [0, 96], sizes = [2, 32], strides = [1, 1]} : vector<2x128xf32> to vector<2x32xf32>
    %135 = arith.negf %134 : vector<2x32xf32>
    %136 = math.exp %135 : vector<2x32xf32>
    %cst_76 = arith.constant 1.000000e+00 : f32
    %137 = vector.broadcast %cst_76 : f32 to vector<2x32xf32>
    %138 = arith.addf %137, %136 : vector<2x32xf32>
    %139 = arith.divf %137, %138 : vector<2x32xf32>
    %140 = arith.mulf %131, %119 : vector<2x32xf32>
    %141 = arith.mulf %125, %133 : vector<2x32xf32>
    %142 = arith.addf %140, %141 : vector<2x32xf32>
    %143 = math.tanh %142 : vector<2x32xf32>
    %144 = arith.mulf %139, %143 : vector<2x32xf32>
    %c0_77 = arith.constant 0 : index
    %c0_78 = arith.constant 0 : index
    %c0_79 = arith.constant 0 : index
    %145 = vector.load %arg6[%c0_77, %c0_78, %c0_79] : memref<2x2x32xf32, #tpu.memory_space<vmem>>, vector<1x2x32xf32>
    %146 = vector.shape_cast %145 : vector<1x2x32xf32> to vector<2x32xf32>
    %147 = vector.shape_cast %144 : vector<2x32xf32> to vector<1x2x32xf32>
    tpu.vector_store %arg6[%c0_77, %c0_78, %c0_79], %147 {strides = array<i32>} : memref<2x2x32xf32, #tpu.memory_space<vmem>>, vector<1x2x32xf32>,
    %c0_80 = arith.constant 0 : index
    %c0_81 = arith.constant 0 : index
    %c0_82 = arith.constant 0 : index
    %148 = vector.load %arg7[%c0_80, %c0_81, %c0_82] : memref<2x2x32xf32, #tpu.memory_space<vmem>>, vector<1x2x32xf32>
    %149 = vector.shape_cast %148 : vector<1x2x32xf32> to vector<2x32xf32>
    %150 = vector.shape_cast %142 : vector<2x32xf32> to vector<1x2x32xf32>
    tpu.vector_store %arg7[%c0_80, %c0_81, %c0_82], %150 {strides = array<i32>} : memref<2x2x32xf32, #tpu.memory_space<vmem>>, vector<1x2x32xf32>,
    %c1_83 = arith.constant 1 : index
    %c0_84 = arith.constant 0 : index
    %c0_85 = arith.constant 0 : index
    %151 = vector.load %arg2[%c1_83, %c0_84, %c0_85] : memref<2x32x128xf32, #tpu.memory_space<vmem>>, vector<1x32x128xf32>
    %152 = vector.shape_cast %151 : vector<1x32x128xf32> to vector<32x128xf32>
    %cst_86 = arith.constant dense<0.000000e+00> : vector<2x128xf32>
    %153 = tpu.matmul %144, %152, %cst_86 {dimension_numbers = #tpu.dot_dimension_numbers<[1], [0], [0], [1], [0, 0, 1, 1], [], []>} : vector<2x32xf32>, vector<32x128xf32>, vector<2x128xf32> -> vector<2x128xf32>
    %c1_87 = arith.constant 1 : index
    %c0_88 = arith.constant 0 : index
    %c0_89 = arith.constant 0 : index
    %154 = vector.load %arg6[%c1_87, %c0_88, %c0_89] : memref<2x2x32xf32, #tpu.memory_space<vmem>>, vector<1x2x32xf32>
    %155 = vector.shape_cast %154 : vector<1x2x32xf32> to vector<2x32xf32>
    %c1_90 = arith.constant 1 : index
    %c0_91 = arith.constant 0 : index
    %c0_92 = arith.constant 0 : index
    %156 = vector.load %arg3[%c1_90, %c0_91, %c0_92] : memref<2x32x128xf32, #tpu.memory_space<vmem>>, vector<1x32x128xf32>
    %157 = vector.shape_cast %156 : vector<1x32x128xf32> to vector<32x128xf32>
    %cst_93 = arith.constant dense<0.000000e+00> : vector<2x128xf32>
    %158 = tpu.matmul %155, %157, %cst_93 {dimension_numbers = #tpu.dot_dimension_numbers<[1], [0], [0], [1], [0, 0, 1, 1], [], []>} : vector<2x32xf32>, vector<32x128xf32>, vector<2x128xf32> -> vector<2x128xf32>
    %159 = arith.addf %153, %158 : vector<2x128xf32>
    %c1_94 = arith.constant 1 : index
    %c0_95 = arith.constant 0 : index
    %c0_96 = arith.constant 0 : index
    %160 = vector.load %arg4[%c1_94, %c0_95, %c0_96] : memref<2x1x128xf32, #tpu.memory_space<vmem>>, vector<1x1x128xf32>
    %161 = vector.shape_cast %160 : vector<1x1x128xf32> to vector<1x128xf32>
    %162 = vector.broadcast %161 : vector<1x128xf32> to vector<2x128xf32>
    %163 = arith.addf %159, %162 : vector<2x128xf32>
    %c1_97 = arith.constant 1 : index
    %c0_98 = arith.constant 0 : index
    %c0_99 = arith.constant 0 : index
    %164 = vector.load %arg7[%c1_97, %c0_98, %c0_99] : memref<2x2x32xf32, #tpu.memory_space<vmem>>, vector<1x2x32xf32>
    %165 = vector.shape_cast %164 : vector<1x2x32xf32> to vector<2x32xf32>
    %166 = vector.extract_strided_slice %163 {offsets = [0, 0], sizes = [2, 32], strides = [1, 1]} : vector<2x128xf32> to vector<2x32xf32>
    %167 = arith.negf %166 : vector<2x32xf32>
    %168 = math.exp %167 : vector<2x32xf32>
    %cst_100 = arith.constant 1.000000e+00 : f32
    %169 = vector.broadcast %cst_100 : f32 to vector<2x32xf32>
    %170 = arith.addf %169, %168 : vector<2x32xf32>
    %171 = arith.divf %169, %170 : vector<2x32xf32>
    %172 = vector.extract_strided_slice %163 {offsets = [0, 32], sizes = [2, 32], strides = [1, 1]} : vector<2x128xf32> to vector<2x32xf32>
    %173 = arith.negf %172 : vector<2x32xf32>
    %174 = math.exp %173 : vector<2x32xf32>
    %cst_101 = arith.constant 1.000000e+00 : f32
    %175 = vector.broadcast %cst_101 : f32 to vector<2x32xf32>
    %176 = arith.addf %175, %174 : vector<2x32xf32>
    %177 = arith.divf %175, %176 : vector<2x32xf32>
    %178 = vector.extract_strided_slice %163 {offsets = [0, 64], sizes = [2, 32], strides = [1, 1]} : vector<2x128xf32> to vector<2x32xf32>
    %179 = math.tanh %178 : vector<2x32xf32>
    %180 = vector.extract_strided_slice %163 {offsets = [0, 96], sizes = [2, 32], strides = [1, 1]} : vector<2x128xf32> to vector<2x32xf32>
    %181 = arith.negf %180 : vector<2x32xf32>
    %182 = math.exp %181 : vector<2x32xf32>
    %cst_102 = arith.constant 1.000000e+00 : f32
    %183 = vector.broadcast %cst_102 : f32 to vector<2x32xf32>
    %184 = arith.addf %183, %182 : vector<2x32xf32>
    %185 = arith.divf %183, %184 : vector<2x32xf32>
    %186 = arith.mulf %177, %165 : vector<2x32xf32>
    %187 = arith.mulf %171, %179 : vector<2x32xf32>
    %188 = arith.addf %186, %187 : vector<2x32xf32>
    %189 = math.tanh %188 : vector<2x32xf32>
    %190 = arith.mulf %185, %189 : vector<2x32xf32>
    %c1_103 = arith.constant 1 : index
    %c0_104 = arith.constant 0 : index
    %c0_105 = arith.constant 0 : index
    %191 = vector.load %arg6[%c1_103, %c0_104, %c0_105] : memref<2x2x32xf32, #tpu.memory_space<vmem>>, vector<1x2x32xf32>
    %192 = vector.shape_cast %191 : vector<1x2x32xf32> to vector<2x32xf32>
    %193 = vector.shape_cast %190 : vector<2x32xf32> to vector<1x2x32xf32>
    tpu.vector_store %arg6[%c1_103, %c0_104, %c0_105], %193 {strides = array<i32>} : memref<2x2x32xf32, #tpu.memory_space<vmem>>, vector<1x2x32xf32>,
    %c1_106 = arith.constant 1 : index
    %c0_107 = arith.constant 0 : index
    %c0_108 = arith.constant 0 : index
    %194 = vector.load %arg7[%c1_106, %c0_107, %c0_108] : memref<2x2x32xf32, #tpu.memory_space<vmem>>, vector<1x2x32xf32>
    %195 = vector.shape_cast %194 : vector<1x2x32xf32> to vector<2x32xf32>
    %196 = vector.shape_cast %188 : vector<2x32xf32> to vector<1x2x32xf32>
    tpu.vector_store %arg7[%c1_106, %c0_107, %c0_108], %196 {strides = array<i32>} : memref<2x2x32xf32, #tpu.memory_space<vmem>>, vector<1x2x32xf32>,
    %197 = arith.index_cast %c1_i32 : i32 to index
    %c0_109 = arith.constant 0 : index
    %c0_110 = arith.constant 0 : index
    %198 = vector.load %arg5[%197, %c0_109, %c0_110] : memref<8x2x32xf32, #tpu.memory_space<vmem>>, vector<1x2x32xf32>
    %199 = vector.shape_cast %198 : vector<1x2x32xf32> to vector<2x32xf32>
    %200 = vector.shape_cast %190 : vector<2x32xf32> to vector<1x2x32xf32>
    tpu.vector_store %arg5[%197, %c0_109, %c0_110], %200 {strides = array<i32>} : memref<8x2x32xf32, #tpu.memory_space<vmem>>, vector<1x2x32xf32>,
    %c2_i32 = arith.constant 2 : i32
    %201 = arith.index_cast %c2_i32 : i32 to index
    %c0_111 = arith.constant 0 : index
    %c0_112 = arith.constant 0 : index
    %202 = vector.load %arg1[%201, %c0_111, %c0_112] : memref<8x2x32xf32, #tpu.memory_space<vmem>>, vector<1x2x32xf32>
    %203 = vector.shape_cast %202 : vector<1x2x32xf32> to vector<2x32xf32>
    %c0_113 = arith.constant 0 : index
    %c0_114 = arith.constant 0 : index
    %c0_115 = arith.constant 0 : index
    %204 = vector.load %arg2[%c0_113, %c0_114, %c0_115] : memref<2x32x128xf32, #tpu.memory_space<vmem>>, vector<1x32x128xf32>
    %205 = vector.shape_cast %204 : vector<1x32x128xf32> to vector<32x128xf32>
    %cst_116 = arith.constant dense<0.000000e+00> : vector<2x128xf32>
    %206 = tpu.matmul %203, %205, %cst_116 {dimension_numbers = #tpu.dot_dimension_numbers<[1], [0], [0], [1], [0, 0, 1, 1], [], []>} : vector<2x32xf32>, vector<32x128xf32>, vector<2x128xf32> -> vector<2x128xf32>
    %c0_117 = arith.constant 0 : index
    %c0_118 = arith.constant 0 : index
    %c0_119 = arith.constant 0 : index
    %207 = vector.load %arg6[%c0_117, %c0_118, %c0_119] : memref<2x2x32xf32, #tpu.memory_space<vmem>>, vector<1x2x32xf32>
    %208 = vector.shape_cast %207 : vector<1x2x32xf32> to vector<2x32xf32>
    %c0_120 = arith.constant 0 : index
    %c0_121 = arith.constant 0 : index
    %c0_122 = arith.constant 0 : index
    %209 = vector.load %arg3[%c0_120, %c0_121, %c0_122] : memref<2x32x128xf32, #tpu.memory_space<vmem>>, vector<1x32x128xf32>
    %210 = vector.shape_cast %209 : vector<1x32x128xf32> to vector<32x128xf32>
    %cst_123 = arith.constant dense<0.000000e+00> : vector<2x128xf32>
    %211 = tpu.matmul %208, %210, %cst_123 {dimension_numbers = #tpu.dot_dimension_numbers<[1], [0], [0], [1], [0, 0, 1, 1], [], []>} : vector<2x32xf32>, vector<32x128xf32>, vector<2x128xf32> -> vector<2x128xf32>
    %212 = arith.addf %206, %211 : vector<2x128xf32>
    %c0_124 = arith.constant 0 : index
    %c0_125 = arith.constant 0 : index
    %c0_126 = arith.constant 0 : index
    %213 = vector.load %arg4[%c0_124, %c0_125, %c0_126] : memref<2x1x128xf32, #tpu.memory_space<vmem>>, vector<1x1x128xf32>
    %214 = vector.shape_cast %213 : vector<1x1x128xf32> to vector<1x128xf32>
    %215 = vector.broadcast %214 : vector<1x128xf32> to vector<2x128xf32>
    %216 = arith.addf %212, %215 : vector<2x128xf32>
    %c0_127 = arith.constant 0 : index
    %c0_128 = arith.constant 0 : index
    %c0_129 = arith.constant 0 : index
    %217 = vector.load %arg7[%c0_127, %c0_128, %c0_129] : memref<2x2x32xf32, #tpu.memory_space<vmem>>, vector<1x2x32xf32>
    %218 = vector.shape_cast %217 : vector<1x2x32xf32> to vector<2x32xf32>
    %219 = vector.extract_strided_slice %216 {offsets = [0, 0], sizes = [2, 32], strides = [1, 1]} : vector<2x128xf32> to vector<2x32xf32>
    %220 = arith.negf %219 : vector<2x32xf32>
    %221 = math.exp %220 : vector<2x32xf32>
    %cst_130 = arith.constant 1.000000e+00 : f32
    %222 = vector.broadcast %cst_130 : f32 to vector<2x32xf32>
    %223 = arith.addf %222, %221 : vector<2x32xf32>
    %224 = arith.divf %222, %223 : vector<2x32xf32>
    %225 = vector.extract_strided_slice %216 {offsets = [0, 32], sizes = [2, 32], strides = [1, 1]} : vector<2x128xf32> to vector<2x32xf32>
    %226 = arith.negf %225 : vector<2x32xf32>
    %227 = math.exp %226 : vector<2x32xf32>
    %cst_131 = arith.constant 1.000000e+00 : f32
    %228 = vector.broadcast %cst_131 : f32 to vector<2x32xf32>
    %229 = arith.addf %228, %227 : vector<2x32xf32>
    %230 = arith.divf %228, %229 : vector<2x32xf32>
    %231 = vector.extract_strided_slice %216 {offsets = [0, 64], sizes = [2, 32], strides = [1, 1]} : vector<2x128xf32> to vector<2x32xf32>
    %232 = math.tanh %231 : vector<2x32xf32>
    %233 = vector.extract_strided_slice %216 {offsets = [0, 96], sizes = [2, 32], strides = [1, 1]} : vector<2x128xf32> to vector<2x32xf32>
    %234 = arith.negf %233 : vector<2x32xf32>
    %235 = math.exp %234 : vector<2x32xf32>
    %cst_132 = arith.constant 1.000000e+00 : f32
    %236 = vector.broadcast %cst_132 : f32 to vector<2x32xf32>
    %237 = arith.addf %236, %235 : vector<2x32xf32>
    %238 = arith.divf %236, %237 : vector<2x32xf32>
    %239 = arith.mulf %230, %218 : vector<2x32xf32>
    %240 = arith.mulf %224, %232 : vector<2x32xf32>
    %241 = arith.addf %239, %240 : vector<2x32xf32>
    %242 = math.tanh %241 : vector<2x32xf32>
    %243 = arith.mulf %238, %242 : vector<2x32xf32>
    %c0_133 = arith.constant 0 : index
    %c0_134 = arith.constant 0 : index
    %c0_135 = arith.constant 0 : index
    %244 = vector.load %arg6[%c0_133, %c0_134, %c0_135] : memref<2x2x32xf32, #tpu.memory_space<vmem>>, vector<1x2x32xf32>
    %245 = vector.shape_cast %244 : vector<1x2x32xf32> to vector<2x32xf32>
    %246 = vector.shape_cast %243 : vector<2x32xf32> to vector<1x2x32xf32>
    tpu.vector_store %arg6[%c0_133, %c0_134, %c0_135], %246 {strides = array<i32>} : memref<2x2x32xf32, #tpu.memory_space<vmem>>, vector<1x2x32xf32>,
    %c0_136 = arith.constant 0 : index
    %c0_137 = arith.constant 0 : index
    %c0_138 = arith.constant 0 : index
    %247 = vector.load %arg7[%c0_136, %c0_137, %c0_138] : memref<2x2x32xf32, #tpu.memory_space<vmem>>, vector<1x2x32xf32>
    %248 = vector.shape_cast %247 : vector<1x2x32xf32> to vector<2x32xf32>
    %249 = vector.shape_cast %241 : vector<2x32xf32> to vector<1x2x32xf32>
    tpu.vector_store %arg7[%c0_136, %c0_137, %c0_138], %249 {strides = array<i32>} : memref<2x2x32xf32, #tpu.memory_space<vmem>>, vector<1x2x32xf32>,
    %c1_139 = arith.constant 1 : index
    %c0_140 = arith.constant 0 : index
    %c0_141 = arith.constant 0 : index
    %250 = vector.load %arg2[%c1_139, %c0_140, %c0_141] : memref<2x32x128xf32, #tpu.memory_space<vmem>>, vector<1x32x128xf32>
    %251 = vector.shape_cast %250 : vector<1x32x128xf32> to vector<32x128xf32>
    %cst_142 = arith.constant dense<0.000000e+00> : vector<2x128xf32>
    %252 = tpu.matmul %243, %251, %cst_142 {dimension_numbers = #tpu.dot_dimension_numbers<[1], [0], [0], [1], [0, 0, 1, 1], [], []>} : vector<2x32xf32>, vector<32x128xf32>, vector<2x128xf32> -> vector<2x128xf32>
    %c1_143 = arith.constant 1 : index
    %c0_144 = arith.constant 0 : index
    %c0_145 = arith.constant 0 : index
    %253 = vector.load %arg6[%c1_143, %c0_144, %c0_145] : memref<2x2x32xf32, #tpu.memory_space<vmem>>, vector<1x2x32xf32>
    %254 = vector.shape_cast %253 : vector<1x2x32xf32> to vector<2x32xf32>
    %c1_146 = arith.constant 1 : index
    %c0_147 = arith.constant 0 : index
    %c0_148 = arith.constant 0 : index
    %255 = vector.load %arg3[%c1_146, %c0_147, %c0_148] : memref<2x32x128xf32, #tpu.memory_space<vmem>>, vector<1x32x128xf32>
    %256 = vector.shape_cast %255 : vector<1x32x128xf32> to vector<32x128xf32>
    %cst_149 = arith.constant dense<0.000000e+00> : vector<2x128xf32>
    %257 = tpu.matmul %254, %256, %cst_149 {dimension_numbers = #tpu.dot_dimension_numbers<[1], [0], [0], [1], [0, 0, 1, 1], [], []>} : vector<2x32xf32>, vector<32x128xf32>, vector<2x128xf32> -> vector<2x128xf32>
    %258 = arith.addf %252, %257 : vector<2x128xf32>
    %c1_150 = arith.constant 1 : index
    %c0_151 = arith.constant 0 : index
    %c0_152 = arith.constant 0 : index
    %259 = vector.load %arg4[%c1_150, %c0_151, %c0_152] : memref<2x1x128xf32, #tpu.memory_space<vmem>>, vector<1x1x128xf32>
    %260 = vector.shape_cast %259 : vector<1x1x128xf32> to vector<1x128xf32>
    %261 = vector.broadcast %260 : vector<1x128xf32> to vector<2x128xf32>
    %262 = arith.addf %258, %261 : vector<2x128xf32>
    %c1_153 = arith.constant 1 : index
    %c0_154 = arith.constant 0 : index
    %c0_155 = arith.constant 0 : index
    %263 = vector.load %arg7[%c1_153, %c0_154, %c0_155] : memref<2x2x32xf32, #tpu.memory_space<vmem>>, vector<1x2x32xf32>
    %264 = vector.shape_cast %263 : vector<1x2x32xf32> to vector<2x32xf32>
    %265 = vector.extract_strided_slice %262 {offsets = [0, 0], sizes = [2, 32], strides = [1, 1]} : vector<2x128xf32> to vector<2x32xf32>
    %266 = arith.negf %265 : vector<2x32xf32>
    %267 = math.exp %266 : vector<2x32xf32>
    %cst_156 = arith.constant 1.000000e+00 : f32
    %268 = vector.broadcast %cst_156 : f32 to vector<2x32xf32>
    %269 = arith.addf %268, %267 : vector<2x32xf32>
    %270 = arith.divf %268, %269 : vector<2x32xf32>
    %271 = vector.extract_strided_slice %262 {offsets = [0, 32], sizes = [2, 32], strides = [1, 1]} : vector<2x128xf32> to vector<2x32xf32>
    %272 = arith.negf %271 : vector<2x32xf32>
    %273 = math.exp %272 : vector<2x32xf32>
    %cst_157 = arith.constant 1.000000e+00 : f32
    %274 = vector.broadcast %cst_157 : f32 to vector<2x32xf32>
    %275 = arith.addf %274, %273 : vector<2x32xf32>
    %276 = arith.divf %274, %275 : vector<2x32xf32>
    %277 = vector.extract_strided_slice %262 {offsets = [0, 64], sizes = [2, 32], strides = [1, 1]} : vector<2x128xf32> to vector<2x32xf32>
    %278 = math.tanh %277 : vector<2x32xf32>
    %279 = vector.extract_strided_slice %262 {offsets = [0, 96], sizes = [2, 32], strides = [1, 1]} : vector<2x128xf32> to vector<2x32xf32>
    %280 = arith.negf %279 : vector<2x32xf32>
    %281 = math.exp %280 : vector<2x32xf32>
    %cst_158 = arith.constant 1.000000e+00 : f32
    %282 = vector.broadcast %cst_158 : f32 to vector<2x32xf32>
    %283 = arith.addf %282, %281 : vector<2x32xf32>
    %284 = arith.divf %282, %283 : vector<2x32xf32>
    %285 = arith.mulf %276, %264 : vector<2x32xf32>
    %286 = arith.mulf %270, %278 : vector<2x32xf32>
    %287 = arith.addf %285, %286 : vector<2x32xf32>
    %288 = math.tanh %287 : vector<2x32xf32>
    %289 = arith.mulf %284, %288 : vector<2x32xf32>
    %c1_159 = arith.constant 1 : index
    %c0_160 = arith.constant 0 : index
    %c0_161 = arith.constant 0 : index
    %290 = vector.load %arg6[%c1_159, %c0_160, %c0_161] : memref<2x2x32xf32, #tpu.memory_space<vmem>>, vector<1x2x32xf32>
    %291 = vector.shape_cast %290 : vector<1x2x32xf32> to vector<2x32xf32>
    %292 = vector.shape_cast %289 : vector<2x32xf32> to vector<1x2x32xf32>
    tpu.vector_store %arg6[%c1_159, %c0_160, %c0_161], %292 {strides = array<i32>} : memref<2x2x32xf32, #tpu.memory_space<vmem>>, vector<1x2x32xf32>,
    %c1_162 = arith.constant 1 : index
    %c0_163 = arith.constant 0 : index
    %c0_164 = arith.constant 0 : index
    %293 = vector.load %arg7[%c1_162, %c0_163, %c0_164] : memref<2x2x32xf32, #tpu.memory_space<vmem>>, vector<1x2x32xf32>
    %294 = vector.shape_cast %293 : vector<1x2x32xf32> to vector<2x32xf32>
    %295 = vector.shape_cast %287 : vector<2x32xf32> to vector<1x2x32xf32>
    tpu.vector_store %arg7[%c1_162, %c0_163, %c0_164], %295 {strides = array<i32>} : memref<2x2x32xf32, #tpu.memory_space<vmem>>, vector<1x2x32xf32>,
    %296 = arith.index_cast %c2_i32 : i32 to index
    %c0_165 = arith.constant 0 : index
    %c0_166 = arith.constant 0 : index
    %297 = vector.load %arg5[%296, %c0_165, %c0_166] : memref<8x2x32xf32, #tpu.memory_space<vmem>>, vector<1x2x32xf32>
    %298 = vector.shape_cast %297 : vector<1x2x32xf32> to vector<2x32xf32>
    %299 = vector.shape_cast %289 : vector<2x32xf32> to vector<1x2x32xf32>
    tpu.vector_store %arg5[%296, %c0_165, %c0_166], %299 {strides = array<i32>} : memref<8x2x32xf32, #tpu.memory_space<vmem>>, vector<1x2x32xf32>,
    %c3_i32 = arith.constant 3 : i32
    %300 = arith.index_cast %c3_i32 : i32 to index
    %c0_167 = arith.constant 0 : index
    %c0_168 = arith.constant 0 : index
    %301 = vector.load %arg1[%300, %c0_167, %c0_168] : memref<8x2x32xf32, #tpu.memory_space<vmem>>, vector<1x2x32xf32>
    %302 = vector.shape_cast %301 : vector<1x2x32xf32> to vector<2x32xf32>
    %c0_169 = arith.constant 0 : index
    %c0_170 = arith.constant 0 : index
    %c0_171 = arith.constant 0 : index
    %303 = vector.load %arg2[%c0_169, %c0_170, %c0_171] : memref<2x32x128xf32, #tpu.memory_space<vmem>>, vector<1x32x128xf32>
    %304 = vector.shape_cast %303 : vector<1x32x128xf32> to vector<32x128xf32>
    %cst_172 = arith.constant dense<0.000000e+00> : vector<2x128xf32>
    %305 = tpu.matmul %302, %304, %cst_172 {dimension_numbers = #tpu.dot_dimension_numbers<[1], [0], [0], [1], [0, 0, 1, 1], [], []>} : vector<2x32xf32>, vector<32x128xf32>, vector<2x128xf32> -> vector<2x128xf32>
    %c0_173 = arith.constant 0 : index
    %c0_174 = arith.constant 0 : index
    %c0_175 = arith.constant 0 : index
    %306 = vector.load %arg6[%c0_173, %c0_174, %c0_175] : memref<2x2x32xf32, #tpu.memory_space<vmem>>, vector<1x2x32xf32>
    %307 = vector.shape_cast %306 : vector<1x2x32xf32> to vector<2x32xf32>
    %c0_176 = arith.constant 0 : index
    %c0_177 = arith.constant 0 : index
    %c0_178 = arith.constant 0 : index
    %308 = vector.load %arg3[%c0_176, %c0_177, %c0_178] : memref<2x32x128xf32, #tpu.memory_space<vmem>>, vector<1x32x128xf32>
    %309 = vector.shape_cast %308 : vector<1x32x128xf32> to vector<32x128xf32>
    %cst_179 = arith.constant dense<0.000000e+00> : vector<2x128xf32>
    %310 = tpu.matmul %307, %309, %cst_179 {dimension_numbers = #tpu.dot_dimension_numbers<[1], [0], [0], [1], [0, 0, 1, 1], [], []>} : vector<2x32xf32>, vector<32x128xf32>, vector<2x128xf32> -> vector<2x128xf32>
    %311 = arith.addf %305, %310 : vector<2x128xf32>
    %c0_180 = arith.constant 0 : index
    %c0_181 = arith.constant 0 : index
    %c0_182 = arith.constant 0 : index
    %312 = vector.load %arg4[%c0_180, %c0_181, %c0_182] : memref<2x1x128xf32, #tpu.memory_space<vmem>>, vector<1x1x128xf32>
    %313 = vector.shape_cast %312 : vector<1x1x128xf32> to vector<1x128xf32>
    %314 = vector.broadcast %313 : vector<1x128xf32> to vector<2x128xf32>
    %315 = arith.addf %311, %314 : vector<2x128xf32>
    %c0_183 = arith.constant 0 : index
    %c0_184 = arith.constant 0 : index
    %c0_185 = arith.constant 0 : index
    %316 = vector.load %arg7[%c0_183, %c0_184, %c0_185] : memref<2x2x32xf32, #tpu.memory_space<vmem>>, vector<1x2x32xf32>
    %317 = vector.shape_cast %316 : vector<1x2x32xf32> to vector<2x32xf32>
    %318 = vector.extract_strided_slice %315 {offsets = [0, 0], sizes = [2, 32], strides = [1, 1]} : vector<2x128xf32> to vector<2x32xf32>
    %319 = arith.negf %318 : vector<2x32xf32>
    %320 = math.exp %319 : vector<2x32xf32>
    %cst_186 = arith.constant 1.000000e+00 : f32
    %321 = vector.broadcast %cst_186 : f32 to vector<2x32xf32>
    %322 = arith.addf %321, %320 : vector<2x32xf32>
    %323 = arith.divf %321, %322 : vector<2x32xf32>
    %324 = vector.extract_strided_slice %315 {offsets = [0, 32], sizes = [2, 32], strides = [1, 1]} : vector<2x128xf32> to vector<2x32xf32>
    %325 = arith.negf %324 : vector<2x32xf32>
    %326 = math.exp %325 : vector<2x32xf32>
    %cst_187 = arith.constant 1.000000e+00 : f32
    %327 = vector.broadcast %cst_187 : f32 to vector<2x32xf32>
    %328 = arith.addf %327, %326 : vector<2x32xf32>
    %329 = arith.divf %327, %328 : vector<2x32xf32>
    %330 = vector.extract_strided_slice %315 {offsets = [0, 64], sizes = [2, 32], strides = [1, 1]} : vector<2x128xf32> to vector<2x32xf32>
    %331 = math.tanh %330 : vector<2x32xf32>
    %332 = vector.extract_strided_slice %315 {offsets = [0, 96], sizes = [2, 32], strides = [1, 1]} : vector<2x128xf32> to vector<2x32xf32>
    %333 = arith.negf %332 : vector<2x32xf32>
    %334 = math.exp %333 : vector<2x32xf32>
    %cst_188 = arith.constant 1.000000e+00 : f32
    %335 = vector.broadcast %cst_188 : f32 to vector<2x32xf32>
    %336 = arith.addf %335, %334 : vector<2x32xf32>
    %337 = arith.divf %335, %336 : vector<2x32xf32>
    %338 = arith.mulf %329, %317 : vector<2x32xf32>
    %339 = arith.mulf %323, %331 : vector<2x32xf32>
    %340 = arith.addf %338, %339 : vector<2x32xf32>
    %341 = math.tanh %340 : vector<2x32xf32>
    %342 = arith.mulf %337, %341 : vector<2x32xf32>
    %c0_189 = arith.constant 0 : index
    %c0_190 = arith.constant 0 : index
    %c0_191 = arith.constant 0 : index
    %343 = vector.load %arg6[%c0_189, %c0_190, %c0_191] : memref<2x2x32xf32, #tpu.memory_space<vmem>>, vector<1x2x32xf32>
    %344 = vector.shape_cast %343 : vector<1x2x32xf32> to vector<2x32xf32>
    %345 = vector.shape_cast %342 : vector<2x32xf32> to vector<1x2x32xf32>
    tpu.vector_store %arg6[%c0_189, %c0_190, %c0_191], %345 {strides = array<i32>} : memref<2x2x32xf32, #tpu.memory_space<vmem>>, vector<1x2x32xf32>,
    %c0_192 = arith.constant 0 : index
    %c0_193 = arith.constant 0 : index
    %c0_194 = arith.constant 0 : index
    %346 = vector.load %arg7[%c0_192, %c0_193, %c0_194] : memref<2x2x32xf32, #tpu.memory_space<vmem>>, vector<1x2x32xf32>
    %347 = vector.shape_cast %346 : vector<1x2x32xf32> to vector<2x32xf32>
    %348 = vector.shape_cast %340 : vector<2x32xf32> to vector<1x2x32xf32>
    tpu.vector_store %arg7[%c0_192, %c0_193, %c0_194], %348 {strides = array<i32>} : memref<2x2x32xf32, #tpu.memory_space<vmem>>, vector<1x2x32xf32>,
    %c1_195 = arith.constant 1 : index
    %c0_196 = arith.constant 0 : index
    %c0_197 = arith.constant 0 : index
    %349 = vector.load %arg2[%c1_195, %c0_196, %c0_197] : memref<2x32x128xf32, #tpu.memory_space<vmem>>, vector<1x32x128xf32>
    %350 = vector.shape_cast %349 : vector<1x32x128xf32> to vector<32x128xf32>
    %cst_198 = arith.constant dense<0.000000e+00> : vector<2x128xf32>
    %351 = tpu.matmul %342, %350, %cst_198 {dimension_numbers = #tpu.dot_dimension_numbers<[1], [0], [0], [1], [0, 0, 1, 1], [], []>} : vector<2x32xf32>, vector<32x128xf32>, vector<2x128xf32> -> vector<2x128xf32>
    %c1_199 = arith.constant 1 : index
    %c0_200 = arith.constant 0 : index
    %c0_201 = arith.constant 0 : index
    %352 = vector.load %arg6[%c1_199, %c0_200, %c0_201] : memref<2x2x32xf32, #tpu.memory_space<vmem>>, vector<1x2x32xf32>
    %353 = vector.shape_cast %352 : vector<1x2x32xf32> to vector<2x32xf32>
    %c1_202 = arith.constant 1 : index
    %c0_203 = arith.constant 0 : index
    %c0_204 = arith.constant 0 : index
    %354 = vector.load %arg3[%c1_202, %c0_203, %c0_204] : memref<2x32x128xf32, #tpu.memory_space<vmem>>, vector<1x32x128xf32>
    %355 = vector.shape_cast %354 : vector<1x32x128xf32> to vector<32x128xf32>
    %cst_205 = arith.constant dense<0.000000e+00> : vector<2x128xf32>
    %356 = tpu.matmul %353, %355, %cst_205 {dimension_numbers = #tpu.dot_dimension_numbers<[1], [0], [0], [1], [0, 0, 1, 1], [], []>} : vector<2x32xf32>, vector<32x128xf32>, vector<2x128xf32> -> vector<2x128xf32>
    %357 = arith.addf %351, %356 : vector<2x128xf32>
    %c1_206 = arith.constant 1 : index
    %c0_207 = arith.constant 0 : index
    %c0_208 = arith.constant 0 : index
    %358 = vector.load %arg4[%c1_206, %c0_207, %c0_208] : memref<2x1x128xf32, #tpu.memory_space<vmem>>, vector<1x1x128xf32>
    %359 = vector.shape_cast %358 : vector<1x1x128xf32> to vector<1x128xf32>
    %360 = vector.broadcast %359 : vector<1x128xf32> to vector<2x128xf32>
    %361 = arith.addf %357, %360 : vector<2x128xf32>
    %c1_209 = arith.constant 1 : index
    %c0_210 = arith.constant 0 : index
    %c0_211 = arith.constant 0 : index
    %362 = vector.load %arg7[%c1_209, %c0_210, %c0_211] : memref<2x2x32xf32, #tpu.memory_space<vmem>>, vector<1x2x32xf32>
    %363 = vector.shape_cast %362 : vector<1x2x32xf32> to vector<2x32xf32>
    %364 = vector.extract_strided_slice %361 {offsets = [0, 0], sizes = [2, 32], strides = [1, 1]} : vector<2x128xf32> to vector<2x32xf32>
    %365 = arith.negf %364 : vector<2x32xf32>
    %366 = math.exp %365 : vector<2x32xf32>
    %cst_212 = arith.constant 1.000000e+00 : f32
    %367 = vector.broadcast %cst_212 : f32 to vector<2x32xf32>
    %368 = arith.addf %367, %366 : vector<2x32xf32>
    %369 = arith.divf %367, %368 : vector<2x32xf32>
    %370 = vector.extract_strided_slice %361 {offsets = [0, 32], sizes = [2, 32], strides = [1, 1]} : vector<2x128xf32> to vector<2x32xf32>
    %371 = arith.negf %370 : vector<2x32xf32>
    %372 = math.exp %371 : vector<2x32xf32>
    %cst_213 = arith.constant 1.000000e+00 : f32
    %373 = vector.broadcast %cst_213 : f32 to vector<2x32xf32>
    %374 = arith.addf %373, %372 : vector<2x32xf32>
    %375 = arith.divf %373, %374 : vector<2x32xf32>
    %376 = vector.extract_strided_slice %361 {offsets = [0, 64], sizes = [2, 32], strides = [1, 1]} : vector<2x128xf32> to vector<2x32xf32>
    %377 = math.tanh %376 : vector<2x32xf32>
    %378 = vector.extract_strided_slice %361 {offsets = [0, 96], sizes = [2, 32], strides = [1, 1]} : vector<2x128xf32> to vector<2x32xf32>
    %379 = arith.negf %378 : vector<2x32xf32>
    %380 = math.exp %379 : vector<2x32xf32>
    %cst_214 = arith.constant 1.000000e+00 : f32
    %381 = vector.broadcast %cst_214 : f32 to vector<2x32xf32>
    %382 = arith.addf %381, %380 : vector<2x32xf32>
    %383 = arith.divf %381, %382 : vector<2x32xf32>
    %384 = arith.mulf %375, %363 : vector<2x32xf32>
    %385 = arith.mulf %369, %377 : vector<2x32xf32>
    %386 = arith.addf %384, %385 : vector<2x32xf32>
    %387 = math.tanh %386 : vector<2x32xf32>
    %388 = arith.mulf %383, %387 : vector<2x32xf32>
    %c1_215 = arith.constant 1 : index
    %c0_216 = arith.constant 0 : index
    %c0_217 = arith.constant 0 : index
    %389 = vector.load %arg6[%c1_215, %c0_216, %c0_217] : memref<2x2x32xf32, #tpu.memory_space<vmem>>, vector<1x2x32xf32>
    %390 = vector.shape_cast %389 : vector<1x2x32xf32> to vector<2x32xf32>
    %391 = vector.shape_cast %388 : vector<2x32xf32> to vector<1x2x32xf32>
    tpu.vector_store %arg6[%c1_215, %c0_216, %c0_217], %391 {strides = array<i32>} : memref<2x2x32xf32, #tpu.memory_space<vmem>>, vector<1x2x32xf32>,
    %c1_218 = arith.constant 1 : index
    %c0_219 = arith.constant 0 : index
    %c0_220 = arith.constant 0 : index
    %392 = vector.load %arg7[%c1_218, %c0_219, %c0_220] : memref<2x2x32xf32, #tpu.memory_space<vmem>>, vector<1x2x32xf32>
    %393 = vector.shape_cast %392 : vector<1x2x32xf32> to vector<2x32xf32>
    %394 = vector.shape_cast %386 : vector<2x32xf32> to vector<1x2x32xf32>
    tpu.vector_store %arg7[%c1_218, %c0_219, %c0_220], %394 {strides = array<i32>} : memref<2x2x32xf32, #tpu.memory_space<vmem>>, vector<1x2x32xf32>,
    %395 = arith.index_cast %c3_i32 : i32 to index
    %c0_221 = arith.constant 0 : index
    %c0_222 = arith.constant 0 : index
    %396 = vector.load %arg5[%395, %c0_221, %c0_222] : memref<8x2x32xf32, #tpu.memory_space<vmem>>, vector<1x2x32xf32>
    %397 = vector.shape_cast %396 : vector<1x2x32xf32> to vector<2x32xf32>
    %398 = vector.shape_cast %388 : vector<2x32xf32> to vector<1x2x32xf32>
    tpu.vector_store %arg5[%395, %c0_221, %c0_222], %398 {strides = array<i32>} : memref<8x2x32xf32, #tpu.memory_space<vmem>>, vector<1x2x32xf32>,
    %c4_i32 = arith.constant 4 : i32
    %399 = arith.index_cast %c4_i32 : i32 to index
    %c0_223 = arith.constant 0 : index
    %c0_224 = arith.constant 0 : index
    %400 = vector.load %arg1[%399, %c0_223, %c0_224] : memref<8x2x32xf32, #tpu.memory_space<vmem>>, vector<1x2x32xf32>
    %401 = vector.shape_cast %400 : vector<1x2x32xf32> to vector<2x32xf32>
    %c0_225 = arith.constant 0 : index
    %c0_226 = arith.constant 0 : index
    %c0_227 = arith.constant 0 : index
    %402 = vector.load %arg2[%c0_225, %c0_226, %c0_227] : memref<2x32x128xf32, #tpu.memory_space<vmem>>, vector<1x32x128xf32>
    %403 = vector.shape_cast %402 : vector<1x32x128xf32> to vector<32x128xf32>
    %cst_228 = arith.constant dense<0.000000e+00> : vector<2x128xf32>
    %404 = tpu.matmul %401, %403, %cst_228 {dimension_numbers = #tpu.dot_dimension_numbers<[1], [0], [0], [1], [0, 0, 1, 1], [], []>} : vector<2x32xf32>, vector<32x128xf32>, vector<2x128xf32> -> vector<2x128xf32>
    %c0_229 = arith.constant 0 : index
    %c0_230 = arith.constant 0 : index
    %c0_231 = arith.constant 0 : index
    %405 = vector.load %arg6[%c0_229, %c0_230, %c0_231] : memref<2x2x32xf32, #tpu.memory_space<vmem>>, vector<1x2x32xf32>
    %406 = vector.shape_cast %405 : vector<1x2x32xf32> to vector<2x32xf32>
    %c0_232 = arith.constant 0 : index
    %c0_233 = arith.constant 0 : index
    %c0_234 = arith.constant 0 : index
    %407 = vector.load %arg3[%c0_232, %c0_233, %c0_234] : memref<2x32x128xf32, #tpu.memory_space<vmem>>, vector<1x32x128xf32>
    %408 = vector.shape_cast %407 : vector<1x32x128xf32> to vector<32x128xf32>
    %cst_235 = arith.constant dense<0.000000e+00> : vector<2x128xf32>
    %409 = tpu.matmul %406, %408, %cst_235 {dimension_numbers = #tpu.dot_dimension_numbers<[1], [0], [0], [1], [0, 0, 1, 1], [], []>} : vector<2x32xf32>, vector<32x128xf32>, vector<2x128xf32> -> vector<2x128xf32>
    %410 = arith.addf %404, %409 : vector<2x128xf32>
    %c0_236 = arith.constant 0 : index
    %c0_237 = arith.constant 0 : index
    %c0_238 = arith.constant 0 : index
    %411 = vector.load %arg4[%c0_236, %c0_237, %c0_238] : memref<2x1x128xf32, #tpu.memory_space<vmem>>, vector<1x1x128xf32>
    %412 = vector.shape_cast %411 : vector<1x1x128xf32> to vector<1x128xf32>
    %413 = vector.broadcast %412 : vector<1x128xf32> to vector<2x128xf32>
    %414 = arith.addf %410, %413 : vector<2x128xf32>
    %c0_239 = arith.constant 0 : index
    %c0_240 = arith.constant 0 : index
    %c0_241 = arith.constant 0 : index
    %415 = vector.load %arg7[%c0_239, %c0_240, %c0_241] : memref<2x2x32xf32, #tpu.memory_space<vmem>>, vector<1x2x32xf32>
    %416 = vector.shape_cast %415 : vector<1x2x32xf32> to vector<2x32xf32>
    %417 = vector.extract_strided_slice %414 {offsets = [0, 0], sizes = [2, 32], strides = [1, 1]} : vector<2x128xf32> to vector<2x32xf32>
    %418 = arith.negf %417 : vector<2x32xf32>
    %419 = math.exp %418 : vector<2x32xf32>
    %cst_242 = arith.constant 1.000000e+00 : f32
    %420 = vector.broadcast %cst_242 : f32 to vector<2x32xf32>
    %421 = arith.addf %420, %419 : vector<2x32xf32>
    %422 = arith.divf %420, %421 : vector<2x32xf32>
    %423 = vector.extract_strided_slice %414 {offsets = [0, 32], sizes = [2, 32], strides = [1, 1]} : vector<2x128xf32> to vector<2x32xf32>
    %424 = arith.negf %423 : vector<2x32xf32>
    %425 = math.exp %424 : vector<2x32xf32>
    %cst_243 = arith.constant 1.000000e+00 : f32
    %426 = vector.broadcast %cst_243 : f32 to vector<2x32xf32>
    %427 = arith.addf %426, %425 : vector<2x32xf32>
    %428 = arith.divf %426, %427 : vector<2x32xf32>
    %429 = vector.extract_strided_slice %414 {offsets = [0, 64], sizes = [2, 32], strides = [1, 1]} : vector<2x128xf32> to vector<2x32xf32>
    %430 = math.tanh %429 : vector<2x32xf32>
    %431 = vector.extract_strided_slice %414 {offsets = [0, 96], sizes = [2, 32], strides = [1, 1]} : vector<2x128xf32> to vector<2x32xf32>
    %432 = arith.negf %431 : vector<2x32xf32>
    %433 = math.exp %432 : vector<2x32xf32>
    %cst_244 = arith.constant 1.000000e+00 : f32
    %434 = vector.broadcast %cst_244 : f32 to vector<2x32xf32>
    %435 = arith.addf %434, %433 : vector<2x32xf32>
    %436 = arith.divf %434, %435 : vector<2x32xf32>
    %437 = arith.mulf %428, %416 : vector<2x32xf32>
    %438 = arith.mulf %422, %430 : vector<2x32xf32>
    %439 = arith.addf %437, %438 : vector<2x32xf32>
    %440 = math.tanh %439 : vector<2x32xf32>
    %441 = arith.mulf %436, %440 : vector<2x32xf32>
    %c0_245 = arith.constant 0 : index
    %c0_246 = arith.constant 0 : index
    %c0_247 = arith.constant 0 : index
    %442 = vector.load %arg6[%c0_245, %c0_246, %c0_247] : memref<2x2x32xf32, #tpu.memory_space<vmem>>, vector<1x2x32xf32>
    %443 = vector.shape_cast %442 : vector<1x2x32xf32> to vector<2x32xf32>
    %444 = vector.shape_cast %441 : vector<2x32xf32> to vector<1x2x32xf32>
    tpu.vector_store %arg6[%c0_245, %c0_246, %c0_247], %444 {strides = array<i32>} : memref<2x2x32xf32, #tpu.memory_space<vmem>>, vector<1x2x32xf32>,
    %c0_248 = arith.constant 0 : index
    %c0_249 = arith.constant 0 : index
    %c0_250 = arith.constant 0 : index
    %445 = vector.load %arg7[%c0_248, %c0_249, %c0_250] : memref<2x2x32xf32, #tpu.memory_space<vmem>>, vector<1x2x32xf32>
    %446 = vector.shape_cast %445 : vector<1x2x32xf32> to vector<2x32xf32>
    %447 = vector.shape_cast %439 : vector<2x32xf32> to vector<1x2x32xf32>
    tpu.vector_store %arg7[%c0_248, %c0_249, %c0_250], %447 {strides = array<i32>} : memref<2x2x32xf32, #tpu.memory_space<vmem>>, vector<1x2x32xf32>,
    %c1_251 = arith.constant 1 : index
    %c0_252 = arith.constant 0 : index
    %c0_253 = arith.constant 0 : index
    %448 = vector.load %arg2[%c1_251, %c0_252, %c0_253] : memref<2x32x128xf32, #tpu.memory_space<vmem>>, vector<1x32x128xf32>
    %449 = vector.shape_cast %448 : vector<1x32x128xf32> to vector<32x128xf32>
    %cst_254 = arith.constant dense<0.000000e+00> : vector<2x128xf32>
    %450 = tpu.matmul %441, %449, %cst_254 {dimension_numbers = #tpu.dot_dimension_numbers<[1], [0], [0], [1], [0, 0, 1, 1], [], []>} : vector<2x32xf32>, vector<32x128xf32>, vector<2x128xf32> -> vector<2x128xf32>
    %c1_255 = arith.constant 1 : index
    %c0_256 = arith.constant 0 : index
    %c0_257 = arith.constant 0 : index
    %451 = vector.load %arg6[%c1_255, %c0_256, %c0_257] : memref<2x2x32xf32, #tpu.memory_space<vmem>>, vector<1x2x32xf32>
    %452 = vector.shape_cast %451 : vector<1x2x32xf32> to vector<2x32xf32>
    %c1_258 = arith.constant 1 : index
    %c0_259 = arith.constant 0 : index
    %c0_260 = arith.constant 0 : index
    %453 = vector.load %arg3[%c1_258, %c0_259, %c0_260] : memref<2x32x128xf32, #tpu.memory_space<vmem>>, vector<1x32x128xf32>
    %454 = vector.shape_cast %453 : vector<1x32x128xf32> to vector<32x128xf32>
    %cst_261 = arith.constant dense<0.000000e+00> : vector<2x128xf32>
    %455 = tpu.matmul %452, %454, %cst_261 {dimension_numbers = #tpu.dot_dimension_numbers<[1], [0], [0], [1], [0, 0, 1, 1], [], []>} : vector<2x32xf32>, vector<32x128xf32>, vector<2x128xf32> -> vector<2x128xf32>
    %456 = arith.addf %450, %455 : vector<2x128xf32>
    %c1_262 = arith.constant 1 : index
    %c0_263 = arith.constant 0 : index
    %c0_264 = arith.constant 0 : index
    %457 = vector.load %arg4[%c1_262, %c0_263, %c0_264] : memref<2x1x128xf32, #tpu.memory_space<vmem>>, vector<1x1x128xf32>
    %458 = vector.shape_cast %457 : vector<1x1x128xf32> to vector<1x128xf32>
    %459 = vector.broadcast %458 : vector<1x128xf32> to vector<2x128xf32>
    %460 = arith.addf %456, %459 : vector<2x128xf32>
    %c1_265 = arith.constant 1 : index
    %c0_266 = arith.constant 0 : index
    %c0_267 = arith.constant 0 : index
    %461 = vector.load %arg7[%c1_265, %c0_266, %c0_267] : memref<2x2x32xf32, #tpu.memory_space<vmem>>, vector<1x2x32xf32>
    %462 = vector.shape_cast %461 : vector<1x2x32xf32> to vector<2x32xf32>
    %463 = vector.extract_strided_slice %460 {offsets = [0, 0], sizes = [2, 32], strides = [1, 1]} : vector<2x128xf32> to vector<2x32xf32>
    %464 = arith.negf %463 : vector<2x32xf32>
    %465 = math.exp %464 : vector<2x32xf32>
    %cst_268 = arith.constant 1.000000e+00 : f32
    %466 = vector.broadcast %cst_268 : f32 to vector<2x32xf32>
    %467 = arith.addf %466, %465 : vector<2x32xf32>
    %468 = arith.divf %466, %467 : vector<2x32xf32>
    %469 = vector.extract_strided_slice %460 {offsets = [0, 32], sizes = [2, 32], strides = [1, 1]} : vector<2x128xf32> to vector<2x32xf32>
    %470 = arith.negf %469 : vector<2x32xf32>
    %471 = math.exp %470 : vector<2x32xf32>
    %cst_269 = arith.constant 1.000000e+00 : f32
    %472 = vector.broadcast %cst_269 : f32 to vector<2x32xf32>
    %473 = arith.addf %472, %471 : vector<2x32xf32>
    %474 = arith.divf %472, %473 : vector<2x32xf32>
    %475 = vector.extract_strided_slice %460 {offsets = [0, 64], sizes = [2, 32], strides = [1, 1]} : vector<2x128xf32> to vector<2x32xf32>
    %476 = math.tanh %475 : vector<2x32xf32>
    %477 = vector.extract_strided_slice %460 {offsets = [0, 96], sizes = [2, 32], strides = [1, 1]} : vector<2x128xf32> to vector<2x32xf32>
    %478 = arith.negf %477 : vector<2x32xf32>
    %479 = math.exp %478 : vector<2x32xf32>
    %cst_270 = arith.constant 1.000000e+00 : f32
    %480 = vector.broadcast %cst_270 : f32 to vector<2x32xf32>
    %481 = arith.addf %480, %479 : vector<2x32xf32>
    %482 = arith.divf %480, %481 : vector<2x32xf32>
    %483 = arith.mulf %474, %462 : vector<2x32xf32>
    %484 = arith.mulf %468, %476 : vector<2x32xf32>
    %485 = arith.addf %483, %484 : vector<2x32xf32>
    %486 = math.tanh %485 : vector<2x32xf32>
    %487 = arith.mulf %482, %486 : vector<2x32xf32>
    %c1_271 = arith.constant 1 : index
    %c0_272 = arith.constant 0 : index
    %c0_273 = arith.constant 0 : index
    %488 = vector.load %arg6[%c1_271, %c0_272, %c0_273] : memref<2x2x32xf32, #tpu.memory_space<vmem>>, vector<1x2x32xf32>
    %489 = vector.shape_cast %488 : vector<1x2x32xf32> to vector<2x32xf32>
    %490 = vector.shape_cast %487 : vector<2x32xf32> to vector<1x2x32xf32>
    tpu.vector_store %arg6[%c1_271, %c0_272, %c0_273], %490 {strides = array<i32>} : memref<2x2x32xf32, #tpu.memory_space<vmem>>, vector<1x2x32xf32>,
    %c1_274 = arith.constant 1 : index
    %c0_275 = arith.constant 0 : index
    %c0_276 = arith.constant 0 : index
    %491 = vector.load %arg7[%c1_274, %c0_275, %c0_276] : memref<2x2x32xf32, #tpu.memory_space<vmem>>, vector<1x2x32xf32>
    %492 = vector.shape_cast %491 : vector<1x2x32xf32> to vector<2x32xf32>
    %493 = vector.shape_cast %485 : vector<2x32xf32> to vector<1x2x32xf32>
    tpu.vector_store %arg7[%c1_274, %c0_275, %c0_276], %493 {strides = array<i32>} : memref<2x2x32xf32, #tpu.memory_space<vmem>>, vector<1x2x32xf32>,
    %494 = arith.index_cast %c4_i32 : i32 to index
    %c0_277 = arith.constant 0 : index
    %c0_278 = arith.constant 0 : index
    %495 = vector.load %arg5[%494, %c0_277, %c0_278] : memref<8x2x32xf32, #tpu.memory_space<vmem>>, vector<1x2x32xf32>
    %496 = vector.shape_cast %495 : vector<1x2x32xf32> to vector<2x32xf32>
    %497 = vector.shape_cast %487 : vector<2x32xf32> to vector<1x2x32xf32>
    tpu.vector_store %arg5[%494, %c0_277, %c0_278], %497 {strides = array<i32>} : memref<8x2x32xf32, #tpu.memory_space<vmem>>, vector<1x2x32xf32>,
    %c5_i32 = arith.constant 5 : i32
    %498 = arith.index_cast %c5_i32 : i32 to index
    %c0_279 = arith.constant 0 : index
    %c0_280 = arith.constant 0 : index
    %499 = vector.load %arg1[%498, %c0_279, %c0_280] : memref<8x2x32xf32, #tpu.memory_space<vmem>>, vector<1x2x32xf32>
    %500 = vector.shape_cast %499 : vector<1x2x32xf32> to vector<2x32xf32>
    %c0_281 = arith.constant 0 : index
    %c0_282 = arith.constant 0 : index
    %c0_283 = arith.constant 0 : index
    %501 = vector.load %arg2[%c0_281, %c0_282, %c0_283] : memref<2x32x128xf32, #tpu.memory_space<vmem>>, vector<1x32x128xf32>
    %502 = vector.shape_cast %501 : vector<1x32x128xf32> to vector<32x128xf32>
    %cst_284 = arith.constant dense<0.000000e+00> : vector<2x128xf32>
    %503 = tpu.matmul %500, %502, %cst_284 {dimension_numbers = #tpu.dot_dimension_numbers<[1], [0], [0], [1], [0, 0, 1, 1], [], []>} : vector<2x32xf32>, vector<32x128xf32>, vector<2x128xf32> -> vector<2x128xf32>
    %c0_285 = arith.constant 0 : index
    %c0_286 = arith.constant 0 : index
    %c0_287 = arith.constant 0 : index
    %504 = vector.load %arg6[%c0_285, %c0_286, %c0_287] : memref<2x2x32xf32, #tpu.memory_space<vmem>>, vector<1x2x32xf32>
    %505 = vector.shape_cast %504 : vector<1x2x32xf32> to vector<2x32xf32>
    %c0_288 = arith.constant 0 : index
    %c0_289 = arith.constant 0 : index
    %c0_290 = arith.constant 0 : index
    %506 = vector.load %arg3[%c0_288, %c0_289, %c0_290] : memref<2x32x128xf32, #tpu.memory_space<vmem>>, vector<1x32x128xf32>
    %507 = vector.shape_cast %506 : vector<1x32x128xf32> to vector<32x128xf32>
    %cst_291 = arith.constant dense<0.000000e+00> : vector<2x128xf32>
    %508 = tpu.matmul %505, %507, %cst_291 {dimension_numbers = #tpu.dot_dimension_numbers<[1], [0], [0], [1], [0, 0, 1, 1], [], []>} : vector<2x32xf32>, vector<32x128xf32>, vector<2x128xf32> -> vector<2x128xf32>
    %509 = arith.addf %503, %508 : vector<2x128xf32>
    %c0_292 = arith.constant 0 : index
    %c0_293 = arith.constant 0 : index
    %c0_294 = arith.constant 0 : index
    %510 = vector.load %arg4[%c0_292, %c0_293, %c0_294] : memref<2x1x128xf32, #tpu.memory_space<vmem>>, vector<1x1x128xf32>
    %511 = vector.shape_cast %510 : vector<1x1x128xf32> to vector<1x128xf32>
    %512 = vector.broadcast %511 : vector<1x128xf32> to vector<2x128xf32>
    %513 = arith.addf %509, %512 : vector<2x128xf32>
    %c0_295 = arith.constant 0 : index
    %c0_296 = arith.constant 0 : index
    %c0_297 = arith.constant 0 : index
    %514 = vector.load %arg7[%c0_295, %c0_296, %c0_297] : memref<2x2x32xf32, #tpu.memory_space<vmem>>, vector<1x2x32xf32>
    %515 = vector.shape_cast %514 : vector<1x2x32xf32> to vector<2x32xf32>
    %516 = vector.extract_strided_slice %513 {offsets = [0, 0], sizes = [2, 32], strides = [1, 1]} : vector<2x128xf32> to vector<2x32xf32>
    %517 = arith.negf %516 : vector<2x32xf32>
    %518 = math.exp %517 : vector<2x32xf32>
    %cst_298 = arith.constant 1.000000e+00 : f32
    %519 = vector.broadcast %cst_298 : f32 to vector<2x32xf32>
    %520 = arith.addf %519, %518 : vector<2x32xf32>
    %521 = arith.divf %519, %520 : vector<2x32xf32>
    %522 = vector.extract_strided_slice %513 {offsets = [0, 32], sizes = [2, 32], strides = [1, 1]} : vector<2x128xf32> to vector<2x32xf32>
    %523 = arith.negf %522 : vector<2x32xf32>
    %524 = math.exp %523 : vector<2x32xf32>
    %cst_299 = arith.constant 1.000000e+00 : f32
    %525 = vector.broadcast %cst_299 : f32 to vector<2x32xf32>
    %526 = arith.addf %525, %524 : vector<2x32xf32>
    %527 = arith.divf %525, %526 : vector<2x32xf32>
    %528 = vector.extract_strided_slice %513 {offsets = [0, 64], sizes = [2, 32], strides = [1, 1]} : vector<2x128xf32> to vector<2x32xf32>
    %529 = math.tanh %528 : vector<2x32xf32>
    %530 = vector.extract_strided_slice %513 {offsets = [0, 96], sizes = [2, 32], strides = [1, 1]} : vector<2x128xf32> to vector<2x32xf32>
    %531 = arith.negf %530 : vector<2x32xf32>
    %532 = math.exp %531 : vector<2x32xf32>
    %cst_300 = arith.constant 1.000000e+00 : f32
    %533 = vector.broadcast %cst_300 : f32 to vector<2x32xf32>
    %534 = arith.addf %533, %532 : vector<2x32xf32>
    %535 = arith.divf %533, %534 : vector<2x32xf32>
    %536 = arith.mulf %527, %515 : vector<2x32xf32>
    %537 = arith.mulf %521, %529 : vector<2x32xf32>
    %538 = arith.addf %536, %537 : vector<2x32xf32>
    %539 = math.tanh %538 : vector<2x32xf32>
    %540 = arith.mulf %535, %539 : vector<2x32xf32>
    %c0_301 = arith.constant 0 : index
    %c0_302 = arith.constant 0 : index
    %c0_303 = arith.constant 0 : index
    %541 = vector.load %arg6[%c0_301, %c0_302, %c0_303] : memref<2x2x32xf32, #tpu.memory_space<vmem>>, vector<1x2x32xf32>
    %542 = vector.shape_cast %541 : vector<1x2x32xf32> to vector<2x32xf32>
    %543 = vector.shape_cast %540 : vector<2x32xf32> to vector<1x2x32xf32>
    tpu.vector_store %arg6[%c0_301, %c0_302, %c0_303], %543 {strides = array<i32>} : memref<2x2x32xf32, #tpu.memory_space<vmem>>, vector<1x2x32xf32>,
    %c0_304 = arith.constant 0 : index
    %c0_305 = arith.constant 0 : index
    %c0_306 = arith.constant 0 : index
    %544 = vector.load %arg7[%c0_304, %c0_305, %c0_306] : memref<2x2x32xf32, #tpu.memory_space<vmem>>, vector<1x2x32xf32>
    %545 = vector.shape_cast %544 : vector<1x2x32xf32> to vector<2x32xf32>
    %546 = vector.shape_cast %538 : vector<2x32xf32> to vector<1x2x32xf32>
    tpu.vector_store %arg7[%c0_304, %c0_305, %c0_306], %546 {strides = array<i32>} : memref<2x2x32xf32, #tpu.memory_space<vmem>>, vector<1x2x32xf32>,
    %c1_307 = arith.constant 1 : index
    %c0_308 = arith.constant 0 : index
    %c0_309 = arith.constant 0 : index
    %547 = vector.load %arg2[%c1_307, %c0_308, %c0_309] : memref<2x32x128xf32, #tpu.memory_space<vmem>>, vector<1x32x128xf32>
    %548 = vector.shape_cast %547 : vector<1x32x128xf32> to vector<32x128xf32>
    %cst_310 = arith.constant dense<0.000000e+00> : vector<2x128xf32>
    %549 = tpu.matmul %540, %548, %cst_310 {dimension_numbers = #tpu.dot_dimension_numbers<[1], [0], [0], [1], [0, 0, 1, 1], [], []>} : vector<2x32xf32>, vector<32x128xf32>, vector<2x128xf32> -> vector<2x128xf32>
    %c1_311 = arith.constant 1 : index
    %c0_312 = arith.constant 0 : index
    %c0_313 = arith.constant 0 : index
    %550 = vector.load %arg6[%c1_311, %c0_312, %c0_313] : memref<2x2x32xf32, #tpu.memory_space<vmem>>, vector<1x2x32xf32>
    %551 = vector.shape_cast %550 : vector<1x2x32xf32> to vector<2x32xf32>
    %c1_314 = arith.constant 1 : index
    %c0_315 = arith.constant 0 : index
    %c0_316 = arith.constant 0 : index
    %552 = vector.load %arg3[%c1_314, %c0_315, %c0_316] : memref<2x32x128xf32, #tpu.memory_space<vmem>>, vector<1x32x128xf32>
    %553 = vector.shape_cast %552 : vector<1x32x128xf32> to vector<32x128xf32>
    %cst_317 = arith.constant dense<0.000000e+00> : vector<2x128xf32>
    %554 = tpu.matmul %551, %553, %cst_317 {dimension_numbers = #tpu.dot_dimension_numbers<[1], [0], [0], [1], [0, 0, 1, 1], [], []>} : vector<2x32xf32>, vector<32x128xf32>, vector<2x128xf32> -> vector<2x128xf32>
    %555 = arith.addf %549, %554 : vector<2x128xf32>
    %c1_318 = arith.constant 1 : index
    %c0_319 = arith.constant 0 : index
    %c0_320 = arith.constant 0 : index
    %556 = vector.load %arg4[%c1_318, %c0_319, %c0_320] : memref<2x1x128xf32, #tpu.memory_space<vmem>>, vector<1x1x128xf32>
    %557 = vector.shape_cast %556 : vector<1x1x128xf32> to vector<1x128xf32>
    %558 = vector.broadcast %557 : vector<1x128xf32> to vector<2x128xf32>
    %559 = arith.addf %555, %558 : vector<2x128xf32>
    %c1_321 = arith.constant 1 : index
    %c0_322 = arith.constant 0 : index
    %c0_323 = arith.constant 0 : index
    %560 = vector.load %arg7[%c1_321, %c0_322, %c0_323] : memref<2x2x32xf32, #tpu.memory_space<vmem>>, vector<1x2x32xf32>
    %561 = vector.shape_cast %560 : vector<1x2x32xf32> to vector<2x32xf32>
    %562 = vector.extract_strided_slice %559 {offsets = [0, 0], sizes = [2, 32], strides = [1, 1]} : vector<2x128xf32> to vector<2x32xf32>
    %563 = arith.negf %562 : vector<2x32xf32>
    %564 = math.exp %563 : vector<2x32xf32>
    %cst_324 = arith.constant 1.000000e+00 : f32
    %565 = vector.broadcast %cst_324 : f32 to vector<2x32xf32>
    %566 = arith.addf %565, %564 : vector<2x32xf32>
    %567 = arith.divf %565, %566 : vector<2x32xf32>
    %568 = vector.extract_strided_slice %559 {offsets = [0, 32], sizes = [2, 32], strides = [1, 1]} : vector<2x128xf32> to vector<2x32xf32>
    %569 = arith.negf %568 : vector<2x32xf32>
    %570 = math.exp %569 : vector<2x32xf32>
    %cst_325 = arith.constant 1.000000e+00 : f32
    %571 = vector.broadcast %cst_325 : f32 to vector<2x32xf32>
    %572 = arith.addf %571, %570 : vector<2x32xf32>
    %573 = arith.divf %571, %572 : vector<2x32xf32>
    %574 = vector.extract_strided_slice %559 {offsets = [0, 64], sizes = [2, 32], strides = [1, 1]} : vector<2x128xf32> to vector<2x32xf32>
    %575 = math.tanh %574 : vector<2x32xf32>
    %576 = vector.extract_strided_slice %559 {offsets = [0, 96], sizes = [2, 32], strides = [1, 1]} : vector<2x128xf32> to vector<2x32xf32>
    %577 = arith.negf %576 : vector<2x32xf32>
    %578 = math.exp %577 : vector<2x32xf32>
    %cst_326 = arith.constant 1.000000e+00 : f32
    %579 = vector.broadcast %cst_326 : f32 to vector<2x32xf32>
    %580 = arith.addf %579, %578 : vector<2x32xf32>
    %581 = arith.divf %579, %580 : vector<2x32xf32>
    %582 = arith.mulf %573, %561 : vector<2x32xf32>
    %583 = arith.mulf %567, %575 : vector<2x32xf32>
    %584 = arith.addf %582, %583 : vector<2x32xf32>
    %585 = math.tanh %584 : vector<2x32xf32>
    %586 = arith.mulf %581, %585 : vector<2x32xf32>
    %c1_327 = arith.constant 1 : index
    %c0_328 = arith.constant 0 : index
    %c0_329 = arith.constant 0 : index
    %587 = vector.load %arg6[%c1_327, %c0_328, %c0_329] : memref<2x2x32xf32, #tpu.memory_space<vmem>>, vector<1x2x32xf32>
    %588 = vector.shape_cast %587 : vector<1x2x32xf32> to vector<2x32xf32>
    %589 = vector.shape_cast %586 : vector<2x32xf32> to vector<1x2x32xf32>
    tpu.vector_store %arg6[%c1_327, %c0_328, %c0_329], %589 {strides = array<i32>} : memref<2x2x32xf32, #tpu.memory_space<vmem>>, vector<1x2x32xf32>,
    %c1_330 = arith.constant 1 : index
    %c0_331 = arith.constant 0 : index
    %c0_332 = arith.constant 0 : index
    %590 = vector.load %arg7[%c1_330, %c0_331, %c0_332] : memref<2x2x32xf32, #tpu.memory_space<vmem>>, vector<1x2x32xf32>
    %591 = vector.shape_cast %590 : vector<1x2x32xf32> to vector<2x32xf32>
    %592 = vector.shape_cast %584 : vector<2x32xf32> to vector<1x2x32xf32>
    tpu.vector_store %arg7[%c1_330, %c0_331, %c0_332], %592 {strides = array<i32>} : memref<2x2x32xf32, #tpu.memory_space<vmem>>, vector<1x2x32xf32>,
    %593 = arith.index_cast %c5_i32 : i32 to index
    %c0_333 = arith.constant 0 : index
    %c0_334 = arith.constant 0 : index
    %594 = vector.load %arg5[%593, %c0_333, %c0_334] : memref<8x2x32xf32, #tpu.memory_space<vmem>>, vector<1x2x32xf32>
    %595 = vector.shape_cast %594 : vector<1x2x32xf32> to vector<2x32xf32>
    %596 = vector.shape_cast %586 : vector<2x32xf32> to vector<1x2x32xf32>
    tpu.vector_store %arg5[%593, %c0_333, %c0_334], %596 {strides = array<i32>} : memref<8x2x32xf32, #tpu.memory_space<vmem>>, vector<1x2x32xf32>,
    %c6_i32 = arith.constant 6 : i32
    %597 = arith.index_cast %c6_i32 : i32 to index
    %c0_335 = arith.constant 0 : index
    %c0_336 = arith.constant 0 : index
    %598 = vector.load %arg1[%597, %c0_335, %c0_336] : memref<8x2x32xf32, #tpu.memory_space<vmem>>, vector<1x2x32xf32>
    %599 = vector.shape_cast %598 : vector<1x2x32xf32> to vector<2x32xf32>
    %c0_337 = arith.constant 0 : index
    %c0_338 = arith.constant 0 : index
    %c0_339 = arith.constant 0 : index
    %600 = vector.load %arg2[%c0_337, %c0_338, %c0_339] : memref<2x32x128xf32, #tpu.memory_space<vmem>>, vector<1x32x128xf32>
    %601 = vector.shape_cast %600 : vector<1x32x128xf32> to vector<32x128xf32>
    %cst_340 = arith.constant dense<0.000000e+00> : vector<2x128xf32>
    %602 = tpu.matmul %599, %601, %cst_340 {dimension_numbers = #tpu.dot_dimension_numbers<[1], [0], [0], [1], [0, 0, 1, 1], [], []>} : vector<2x32xf32>, vector<32x128xf32>, vector<2x128xf32> -> vector<2x128xf32>
    %c0_341 = arith.constant 0 : index
    %c0_342 = arith.constant 0 : index
    %c0_343 = arith.constant 0 : index
    %603 = vector.load %arg6[%c0_341, %c0_342, %c0_343] : memref<2x2x32xf32, #tpu.memory_space<vmem>>, vector<1x2x32xf32>
    %604 = vector.shape_cast %603 : vector<1x2x32xf32> to vector<2x32xf32>
    %c0_344 = arith.constant 0 : index
    %c0_345 = arith.constant 0 : index
    %c0_346 = arith.constant 0 : index
    %605 = vector.load %arg3[%c0_344, %c0_345, %c0_346] : memref<2x32x128xf32, #tpu.memory_space<vmem>>, vector<1x32x128xf32>
    %606 = vector.shape_cast %605 : vector<1x32x128xf32> to vector<32x128xf32>
    %cst_347 = arith.constant dense<0.000000e+00> : vector<2x128xf32>
    %607 = tpu.matmul %604, %606, %cst_347 {dimension_numbers = #tpu.dot_dimension_numbers<[1], [0], [0], [1], [0, 0, 1, 1], [], []>} : vector<2x32xf32>, vector<32x128xf32>, vector<2x128xf32> -> vector<2x128xf32>
    %608 = arith.addf %602, %607 : vector<2x128xf32>
    %c0_348 = arith.constant 0 : index
    %c0_349 = arith.constant 0 : index
    %c0_350 = arith.constant 0 : index
    %609 = vector.load %arg4[%c0_348, %c0_349, %c0_350] : memref<2x1x128xf32, #tpu.memory_space<vmem>>, vector<1x1x128xf32>
    %610 = vector.shape_cast %609 : vector<1x1x128xf32> to vector<1x128xf32>
    %611 = vector.broadcast %610 : vector<1x128xf32> to vector<2x128xf32>
    %612 = arith.addf %608, %611 : vector<2x128xf32>
    %c0_351 = arith.constant 0 : index
    %c0_352 = arith.constant 0 : index
    %c0_353 = arith.constant 0 : index
    %613 = vector.load %arg7[%c0_351, %c0_352, %c0_353] : memref<2x2x32xf32, #tpu.memory_space<vmem>>, vector<1x2x32xf32>
    %614 = vector.shape_cast %613 : vector<1x2x32xf32> to vector<2x32xf32>
    %615 = vector.extract_strided_slice %612 {offsets = [0, 0], sizes = [2, 32], strides = [1, 1]} : vector<2x128xf32> to vector<2x32xf32>
    %616 = arith.negf %615 : vector<2x32xf32>
    %617 = math.exp %616 : vector<2x32xf32>
    %cst_354 = arith.constant 1.000000e+00 : f32
    %618 = vector.broadcast %cst_354 : f32 to vector<2x32xf32>
    %619 = arith.addf %618, %617 : vector<2x32xf32>
    %620 = arith.divf %618, %619 : vector<2x32xf32>
    %621 = vector.extract_strided_slice %612 {offsets = [0, 32], sizes = [2, 32], strides = [1, 1]} : vector<2x128xf32> to vector<2x32xf32>
    %622 = arith.negf %621 : vector<2x32xf32>
    %623 = math.exp %622 : vector<2x32xf32>
    %cst_355 = arith.constant 1.000000e+00 : f32
    %624 = vector.broadcast %cst_355 : f32 to vector<2x32xf32>
    %625 = arith.addf %624, %623 : vector<2x32xf32>
    %626 = arith.divf %624, %625 : vector<2x32xf32>
    %627 = vector.extract_strided_slice %612 {offsets = [0, 64], sizes = [2, 32], strides = [1, 1]} : vector<2x128xf32> to vector<2x32xf32>
    %628 = math.tanh %627 : vector<2x32xf32>
    %629 = vector.extract_strided_slice %612 {offsets = [0, 96], sizes = [2, 32], strides = [1, 1]} : vector<2x128xf32> to vector<2x32xf32>
    %630 = arith.negf %629 : vector<2x32xf32>
    %631 = math.exp %630 : vector<2x32xf32>
    %cst_356 = arith.constant 1.000000e+00 : f32
    %632 = vector.broadcast %cst_356 : f32 to vector<2x32xf32>
    %633 = arith.addf %632, %631 : vector<2x32xf32>
    %634 = arith.divf %632, %633 : vector<2x32xf32>
    %635 = arith.mulf %626, %614 : vector<2x32xf32>
    %636 = arith.mulf %620, %628 : vector<2x32xf32>
    %637 = arith.addf %635, %636 : vector<2x32xf32>
    %638 = math.tanh %637 : vector<2x32xf32>
    %639 = arith.mulf %634, %638 : vector<2x32xf32>
    %c0_357 = arith.constant 0 : index
    %c0_358 = arith.constant 0 : index
    %c0_359 = arith.constant 0 : index
    %640 = vector.load %arg6[%c0_357, %c0_358, %c0_359] : memref<2x2x32xf32, #tpu.memory_space<vmem>>, vector<1x2x32xf32>
    %641 = vector.shape_cast %640 : vector<1x2x32xf32> to vector<2x32xf32>
    %642 = vector.shape_cast %639 : vector<2x32xf32> to vector<1x2x32xf32>
    tpu.vector_store %arg6[%c0_357, %c0_358, %c0_359], %642 {strides = array<i32>} : memref<2x2x32xf32, #tpu.memory_space<vmem>>, vector<1x2x32xf32>,
    %c0_360 = arith.constant 0 : index
    %c0_361 = arith.constant 0 : index
    %c0_362 = arith.constant 0 : index
    %643 = vector.load %arg7[%c0_360, %c0_361, %c0_362] : memref<2x2x32xf32, #tpu.memory_space<vmem>>, vector<1x2x32xf32>
    %644 = vector.shape_cast %643 : vector<1x2x32xf32> to vector<2x32xf32>
    %645 = vector.shape_cast %637 : vector<2x32xf32> to vector<1x2x32xf32>
    tpu.vector_store %arg7[%c0_360, %c0_361, %c0_362], %645 {strides = array<i32>} : memref<2x2x32xf32, #tpu.memory_space<vmem>>, vector<1x2x32xf32>,
    %c1_363 = arith.constant 1 : index
    %c0_364 = arith.constant 0 : index
    %c0_365 = arith.constant 0 : index
    %646 = vector.load %arg2[%c1_363, %c0_364, %c0_365] : memref<2x32x128xf32, #tpu.memory_space<vmem>>, vector<1x32x128xf32>
    %647 = vector.shape_cast %646 : vector<1x32x128xf32> to vector<32x128xf32>
    %cst_366 = arith.constant dense<0.000000e+00> : vector<2x128xf32>
    %648 = tpu.matmul %639, %647, %cst_366 {dimension_numbers = #tpu.dot_dimension_numbers<[1], [0], [0], [1], [0, 0, 1, 1], [], []>} : vector<2x32xf32>, vector<32x128xf32>, vector<2x128xf32> -> vector<2x128xf32>
    %c1_367 = arith.constant 1 : index
    %c0_368 = arith.constant 0 : index
    %c0_369 = arith.constant 0 : index
    %649 = vector.load %arg6[%c1_367, %c0_368, %c0_369] : memref<2x2x32xf32, #tpu.memory_space<vmem>>, vector<1x2x32xf32>
    %650 = vector.shape_cast %649 : vector<1x2x32xf32> to vector<2x32xf32>
    %c1_370 = arith.constant 1 : index
    %c0_371 = arith.constant 0 : index
    %c0_372 = arith.constant 0 : index
    %651 = vector.load %arg3[%c1_370, %c0_371, %c0_372] : memref<2x32x128xf32, #tpu.memory_space<vmem>>, vector<1x32x128xf32>
    %652 = vector.shape_cast %651 : vector<1x32x128xf32> to vector<32x128xf32>
    %cst_373 = arith.constant dense<0.000000e+00> : vector<2x128xf32>
    %653 = tpu.matmul %650, %652, %cst_373 {dimension_numbers = #tpu.dot_dimension_numbers<[1], [0], [0], [1], [0, 0, 1, 1], [], []>} : vector<2x32xf32>, vector<32x128xf32>, vector<2x128xf32> -> vector<2x128xf32>
    %654 = arith.addf %648, %653 : vector<2x128xf32>
    %c1_374 = arith.constant 1 : index
    %c0_375 = arith.constant 0 : index
    %c0_376 = arith.constant 0 : index
    %655 = vector.load %arg4[%c1_374, %c0_375, %c0_376] : memref<2x1x128xf32, #tpu.memory_space<vmem>>, vector<1x1x128xf32>
    %656 = vector.shape_cast %655 : vector<1x1x128xf32> to vector<1x128xf32>
    %657 = vector.broadcast %656 : vector<1x128xf32> to vector<2x128xf32>
    %658 = arith.addf %654, %657 : vector<2x128xf32>
    %c1_377 = arith.constant 1 : index
    %c0_378 = arith.constant 0 : index
    %c0_379 = arith.constant 0 : index
    %659 = vector.load %arg7[%c1_377, %c0_378, %c0_379] : memref<2x2x32xf32, #tpu.memory_space<vmem>>, vector<1x2x32xf32>
    %660 = vector.shape_cast %659 : vector<1x2x32xf32> to vector<2x32xf32>
    %661 = vector.extract_strided_slice %658 {offsets = [0, 0], sizes = [2, 32], strides = [1, 1]} : vector<2x128xf32> to vector<2x32xf32>
    %662 = arith.negf %661 : vector<2x32xf32>
    %663 = math.exp %662 : vector<2x32xf32>
    %cst_380 = arith.constant 1.000000e+00 : f32
    %664 = vector.broadcast %cst_380 : f32 to vector<2x32xf32>
    %665 = arith.addf %664, %663 : vector<2x32xf32>
    %666 = arith.divf %664, %665 : vector<2x32xf32>
    %667 = vector.extract_strided_slice %658 {offsets = [0, 32], sizes = [2, 32], strides = [1, 1]} : vector<2x128xf32> to vector<2x32xf32>
    %668 = arith.negf %667 : vector<2x32xf32>
    %669 = math.exp %668 : vector<2x32xf32>
    %cst_381 = arith.constant 1.000000e+00 : f32
    %670 = vector.broadcast %cst_381 : f32 to vector<2x32xf32>
    %671 = arith.addf %670, %669 : vector<2x32xf32>
    %672 = arith.divf %670, %671 : vector<2x32xf32>
    %673 = vector.extract_strided_slice %658 {offsets = [0, 64], sizes = [2, 32], strides = [1, 1]} : vector<2x128xf32> to vector<2x32xf32>
    %674 = math.tanh %673 : vector<2x32xf32>
    %675 = vector.extract_strided_slice %658 {offsets = [0, 96], sizes = [2, 32], strides = [1, 1]} : vector<2x128xf32> to vector<2x32xf32>
    %676 = arith.negf %675 : vector<2x32xf32>
    %677 = math.exp %676 : vector<2x32xf32>
    %cst_382 = arith.constant 1.000000e+00 : f32
    %678 = vector.broadcast %cst_382 : f32 to vector<2x32xf32>
    %679 = arith.addf %678, %677 : vector<2x32xf32>
    %680 = arith.divf %678, %679 : vector<2x32xf32>
    %681 = arith.mulf %672, %660 : vector<2x32xf32>
    %682 = arith.mulf %666, %674 : vector<2x32xf32>
    %683 = arith.addf %681, %682 : vector<2x32xf32>
    %684 = math.tanh %683 : vector<2x32xf32>
    %685 = arith.mulf %680, %684 : vector<2x32xf32>
    %c1_383 = arith.constant 1 : index
    %c0_384 = arith.constant 0 : index
    %c0_385 = arith.constant 0 : index
    %686 = vector.load %arg6[%c1_383, %c0_384, %c0_385] : memref<2x2x32xf32, #tpu.memory_space<vmem>>, vector<1x2x32xf32>
    %687 = vector.shape_cast %686 : vector<1x2x32xf32> to vector<2x32xf32>
    %688 = vector.shape_cast %685 : vector<2x32xf32> to vector<1x2x32xf32>
    tpu.vector_store %arg6[%c1_383, %c0_384, %c0_385], %688 {strides = array<i32>} : memref<2x2x32xf32, #tpu.memory_space<vmem>>, vector<1x2x32xf32>,
    %c1_386 = arith.constant 1 : index
    %c0_387 = arith.constant 0 : index
    %c0_388 = arith.constant 0 : index
    %689 = vector.load %arg7[%c1_386, %c0_387, %c0_388] : memref<2x2x32xf32, #tpu.memory_space<vmem>>, vector<1x2x32xf32>
    %690 = vector.shape_cast %689 : vector<1x2x32xf32> to vector<2x32xf32>
    %691 = vector.shape_cast %683 : vector<2x32xf32> to vector<1x2x32xf32>
    tpu.vector_store %arg7[%c1_386, %c0_387, %c0_388], %691 {strides = array<i32>} : memref<2x2x32xf32, #tpu.memory_space<vmem>>, vector<1x2x32xf32>,
    %692 = arith.index_cast %c6_i32 : i32 to index
    %c0_389 = arith.constant 0 : index
    %c0_390 = arith.constant 0 : index
    %693 = vector.load %arg5[%692, %c0_389, %c0_390] : memref<8x2x32xf32, #tpu.memory_space<vmem>>, vector<1x2x32xf32>
    %694 = vector.shape_cast %693 : vector<1x2x32xf32> to vector<2x32xf32>
    %695 = vector.shape_cast %685 : vector<2x32xf32> to vector<1x2x32xf32>
    tpu.vector_store %arg5[%692, %c0_389, %c0_390], %695 {strides = array<i32>} : memref<8x2x32xf32, #tpu.memory_space<vmem>>, vector<1x2x32xf32>,
    %c7_i32 = arith.constant 7 : i32
    %696 = arith.index_cast %c7_i32 : i32 to index
    %c0_391 = arith.constant 0 : index
    %c0_392 = arith.constant 0 : index
    %697 = vector.load %arg1[%696, %c0_391, %c0_392] : memref<8x2x32xf32, #tpu.memory_space<vmem>>, vector<1x2x32xf32>
    %698 = vector.shape_cast %697 : vector<1x2x32xf32> to vector<2x32xf32>
    %c0_393 = arith.constant 0 : index
    %c0_394 = arith.constant 0 : index
    %c0_395 = arith.constant 0 : index
    %699 = vector.load %arg2[%c0_393, %c0_394, %c0_395] : memref<2x32x128xf32, #tpu.memory_space<vmem>>, vector<1x32x128xf32>
    %700 = vector.shape_cast %699 : vector<1x32x128xf32> to vector<32x128xf32>
    %cst_396 = arith.constant dense<0.000000e+00> : vector<2x128xf32>
    %701 = tpu.matmul %698, %700, %cst_396 {dimension_numbers = #tpu.dot_dimension_numbers<[1], [0], [0], [1], [0, 0, 1, 1], [], []>} : vector<2x32xf32>, vector<32x128xf32>, vector<2x128xf32> -> vector<2x128xf32>
    %c0_397 = arith.constant 0 : index
    %c0_398 = arith.constant 0 : index
    %c0_399 = arith.constant 0 : index
    %702 = vector.load %arg6[%c0_397, %c0_398, %c0_399] : memref<2x2x32xf32, #tpu.memory_space<vmem>>, vector<1x2x32xf32>
    %703 = vector.shape_cast %702 : vector<1x2x32xf32> to vector<2x32xf32>
    %c0_400 = arith.constant 0 : index
    %c0_401 = arith.constant 0 : index
    %c0_402 = arith.constant 0 : index
    %704 = vector.load %arg3[%c0_400, %c0_401, %c0_402] : memref<2x32x128xf32, #tpu.memory_space<vmem>>, vector<1x32x128xf32>
    %705 = vector.shape_cast %704 : vector<1x32x128xf32> to vector<32x128xf32>
    %cst_403 = arith.constant dense<0.000000e+00> : vector<2x128xf32>
    %706 = tpu.matmul %703, %705, %cst_403 {dimension_numbers = #tpu.dot_dimension_numbers<[1], [0], [0], [1], [0, 0, 1, 1], [], []>} : vector<2x32xf32>, vector<32x128xf32>, vector<2x128xf32> -> vector<2x128xf32>
    %707 = arith.addf %701, %706 : vector<2x128xf32>
    %c0_404 = arith.constant 0 : index
    %c0_405 = arith.constant 0 : index
    %c0_406 = arith.constant 0 : index
    %708 = vector.load %arg4[%c0_404, %c0_405, %c0_406] : memref<2x1x128xf32, #tpu.memory_space<vmem>>, vector<1x1x128xf32>
    %709 = vector.shape_cast %708 : vector<1x1x128xf32> to vector<1x128xf32>
    %710 = vector.broadcast %709 : vector<1x128xf32> to vector<2x128xf32>
    %711 = arith.addf %707, %710 : vector<2x128xf32>
    %c0_407 = arith.constant 0 : index
    %c0_408 = arith.constant 0 : index
    %c0_409 = arith.constant 0 : index
    %712 = vector.load %arg7[%c0_407, %c0_408, %c0_409] : memref<2x2x32xf32, #tpu.memory_space<vmem>>, vector<1x2x32xf32>
    %713 = vector.shape_cast %712 : vector<1x2x32xf32> to vector<2x32xf32>
    %714 = vector.extract_strided_slice %711 {offsets = [0, 0], sizes = [2, 32], strides = [1, 1]} : vector<2x128xf32> to vector<2x32xf32>
    %715 = arith.negf %714 : vector<2x32xf32>
    %716 = math.exp %715 : vector<2x32xf32>
    %cst_410 = arith.constant 1.000000e+00 : f32
    %717 = vector.broadcast %cst_410 : f32 to vector<2x32xf32>
    %718 = arith.addf %717, %716 : vector<2x32xf32>
    %719 = arith.divf %717, %718 : vector<2x32xf32>
    %720 = vector.extract_strided_slice %711 {offsets = [0, 32], sizes = [2, 32], strides = [1, 1]} : vector<2x128xf32> to vector<2x32xf32>
    %721 = arith.negf %720 : vector<2x32xf32>
    %722 = math.exp %721 : vector<2x32xf32>
    %cst_411 = arith.constant 1.000000e+00 : f32
    %723 = vector.broadcast %cst_411 : f32 to vector<2x32xf32>
    %724 = arith.addf %723, %722 : vector<2x32xf32>
    %725 = arith.divf %723, %724 : vector<2x32xf32>
    %726 = vector.extract_strided_slice %711 {offsets = [0, 64], sizes = [2, 32], strides = [1, 1]} : vector<2x128xf32> to vector<2x32xf32>
    %727 = math.tanh %726 : vector<2x32xf32>
    %728 = vector.extract_strided_slice %711 {offsets = [0, 96], sizes = [2, 32], strides = [1, 1]} : vector<2x128xf32> to vector<2x32xf32>
    %729 = arith.negf %728 : vector<2x32xf32>
    %730 = math.exp %729 : vector<2x32xf32>
    %cst_412 = arith.constant 1.000000e+00 : f32
    %731 = vector.broadcast %cst_412 : f32 to vector<2x32xf32>
    %732 = arith.addf %731, %730 : vector<2x32xf32>
    %733 = arith.divf %731, %732 : vector<2x32xf32>
    %734 = arith.mulf %725, %713 : vector<2x32xf32>
    %735 = arith.mulf %719, %727 : vector<2x32xf32>
    %736 = arith.addf %734, %735 : vector<2x32xf32>
    %737 = math.tanh %736 : vector<2x32xf32>
    %738 = arith.mulf %733, %737 : vector<2x32xf32>
    %c0_413 = arith.constant 0 : index
    %c0_414 = arith.constant 0 : index
    %c0_415 = arith.constant 0 : index
    %739 = vector.load %arg6[%c0_413, %c0_414, %c0_415] : memref<2x2x32xf32, #tpu.memory_space<vmem>>, vector<1x2x32xf32>
    %740 = vector.shape_cast %739 : vector<1x2x32xf32> to vector<2x32xf32>
    %741 = vector.shape_cast %738 : vector<2x32xf32> to vector<1x2x32xf32>
    tpu.vector_store %arg6[%c0_413, %c0_414, %c0_415], %741 {strides = array<i32>} : memref<2x2x32xf32, #tpu.memory_space<vmem>>, vector<1x2x32xf32>,
    %c0_416 = arith.constant 0 : index
    %c0_417 = arith.constant 0 : index
    %c0_418 = arith.constant 0 : index
    %742 = vector.load %arg7[%c0_416, %c0_417, %c0_418] : memref<2x2x32xf32, #tpu.memory_space<vmem>>, vector<1x2x32xf32>
    %743 = vector.shape_cast %742 : vector<1x2x32xf32> to vector<2x32xf32>
    %744 = vector.shape_cast %736 : vector<2x32xf32> to vector<1x2x32xf32>
    tpu.vector_store %arg7[%c0_416, %c0_417, %c0_418], %744 {strides = array<i32>} : memref<2x2x32xf32, #tpu.memory_space<vmem>>, vector<1x2x32xf32>,
    %c1_419 = arith.constant 1 : index
    %c0_420 = arith.constant 0 : index
    %c0_421 = arith.constant 0 : index
    %745 = vector.load %arg2[%c1_419, %c0_420, %c0_421] : memref<2x32x128xf32, #tpu.memory_space<vmem>>, vector<1x32x128xf32>
    %746 = vector.shape_cast %745 : vector<1x32x128xf32> to vector<32x128xf32>
    %cst_422 = arith.constant dense<0.000000e+00> : vector<2x128xf32>
    %747 = tpu.matmul %738, %746, %cst_422 {dimension_numbers = #tpu.dot_dimension_numbers<[1], [0], [0], [1], [0, 0, 1, 1], [], []>} : vector<2x32xf32>, vector<32x128xf32>, vector<2x128xf32> -> vector<2x128xf32>
    %c1_423 = arith.constant 1 : index
    %c0_424 = arith.constant 0 : index
    %c0_425 = arith.constant 0 : index
    %748 = vector.load %arg6[%c1_423, %c0_424, %c0_425] : memref<2x2x32xf32, #tpu.memory_space<vmem>>, vector<1x2x32xf32>
    %749 = vector.shape_cast %748 : vector<1x2x32xf32> to vector<2x32xf32>
    %c1_426 = arith.constant 1 : index
    %c0_427 = arith.constant 0 : index
    %c0_428 = arith.constant 0 : index
    %750 = vector.load %arg3[%c1_426, %c0_427, %c0_428] : memref<2x32x128xf32, #tpu.memory_space<vmem>>, vector<1x32x128xf32>
    %751 = vector.shape_cast %750 : vector<1x32x128xf32> to vector<32x128xf32>
    %cst_429 = arith.constant dense<0.000000e+00> : vector<2x128xf32>
    %752 = tpu.matmul %749, %751, %cst_429 {dimension_numbers = #tpu.dot_dimension_numbers<[1], [0], [0], [1], [0, 0, 1, 1], [], []>} : vector<2x32xf32>, vector<32x128xf32>, vector<2x128xf32> -> vector<2x128xf32>
    %753 = arith.addf %747, %752 : vector<2x128xf32>
    %c1_430 = arith.constant 1 : index
    %c0_431 = arith.constant 0 : index
    %c0_432 = arith.constant 0 : index
    %754 = vector.load %arg4[%c1_430, %c0_431, %c0_432] : memref<2x1x128xf32, #tpu.memory_space<vmem>>, vector<1x1x128xf32>
    %755 = vector.shape_cast %754 : vector<1x1x128xf32> to vector<1x128xf32>
    %756 = vector.broadcast %755 : vector<1x128xf32> to vector<2x128xf32>
    %757 = arith.addf %753, %756 : vector<2x128xf32>
    %c1_433 = arith.constant 1 : index
    %c0_434 = arith.constant 0 : index
    %c0_435 = arith.constant 0 : index
    %758 = vector.load %arg7[%c1_433, %c0_434, %c0_435] : memref<2x2x32xf32, #tpu.memory_space<vmem>>, vector<1x2x32xf32>
    %759 = vector.shape_cast %758 : vector<1x2x32xf32> to vector<2x32xf32>
    %760 = vector.extract_strided_slice %757 {offsets = [0, 0], sizes = [2, 32], strides = [1, 1]} : vector<2x128xf32> to vector<2x32xf32>
    %761 = arith.negf %760 : vector<2x32xf32>
    %762 = math.exp %761 : vector<2x32xf32>
    %cst_436 = arith.constant 1.000000e+00 : f32
    %763 = vector.broadcast %cst_436 : f32 to vector<2x32xf32>
    %764 = arith.addf %763, %762 : vector<2x32xf32>
    %765 = arith.divf %763, %764 : vector<2x32xf32>
    %766 = vector.extract_strided_slice %757 {offsets = [0, 32], sizes = [2, 32], strides = [1, 1]} : vector<2x128xf32> to vector<2x32xf32>
    %767 = arith.negf %766 : vector<2x32xf32>
    %768 = math.exp %767 : vector<2x32xf32>
    %cst_437 = arith.constant 1.000000e+00 : f32
    %769 = vector.broadcast %cst_437 : f32 to vector<2x32xf32>
    %770 = arith.addf %769, %768 : vector<2x32xf32>
    %771 = arith.divf %769, %770 : vector<2x32xf32>
    %772 = vector.extract_strided_slice %757 {offsets = [0, 64], sizes = [2, 32], strides = [1, 1]} : vector<2x128xf32> to vector<2x32xf32>
    %773 = math.tanh %772 : vector<2x32xf32>
    %774 = vector.extract_strided_slice %757 {offsets = [0, 96], sizes = [2, 32], strides = [1, 1]} : vector<2x128xf32> to vector<2x32xf32>
    %775 = arith.negf %774 : vector<2x32xf32>
    %776 = math.exp %775 : vector<2x32xf32>
    %cst_438 = arith.constant 1.000000e+00 : f32
    %777 = vector.broadcast %cst_438 : f32 to vector<2x32xf32>
    %778 = arith.addf %777, %776 : vector<2x32xf32>
    %779 = arith.divf %777, %778 : vector<2x32xf32>
    %780 = arith.mulf %771, %759 : vector<2x32xf32>
    %781 = arith.mulf %765, %773 : vector<2x32xf32>
    %782 = arith.addf %780, %781 : vector<2x32xf32>
    %783 = math.tanh %782 : vector<2x32xf32>
    %784 = arith.mulf %779, %783 : vector<2x32xf32>
    %c1_439 = arith.constant 1 : index
    %c0_440 = arith.constant 0 : index
    %c0_441 = arith.constant 0 : index
    %785 = vector.load %arg6[%c1_439, %c0_440, %c0_441] : memref<2x2x32xf32, #tpu.memory_space<vmem>>, vector<1x2x32xf32>
    %786 = vector.shape_cast %785 : vector<1x2x32xf32> to vector<2x32xf32>
    %787 = vector.shape_cast %784 : vector<2x32xf32> to vector<1x2x32xf32>
    tpu.vector_store %arg6[%c1_439, %c0_440, %c0_441], %787 {strides = array<i32>} : memref<2x2x32xf32, #tpu.memory_space<vmem>>, vector<1x2x32xf32>,
    %c1_442 = arith.constant 1 : index
    %c0_443 = arith.constant 0 : index
    %c0_444 = arith.constant 0 : index
    %788 = vector.load %arg7[%c1_442, %c0_443, %c0_444] : memref<2x2x32xf32, #tpu.memory_space<vmem>>, vector<1x2x32xf32>
    %789 = vector.shape_cast %788 : vector<1x2x32xf32> to vector<2x32xf32>
    %790 = vector.shape_cast %782 : vector<2x32xf32> to vector<1x2x32xf32>
    tpu.vector_store %arg7[%c1_442, %c0_443, %c0_444], %790 {strides = array<i32>} : memref<2x2x32xf32, #tpu.memory_space<vmem>>, vector<1x2x32xf32>,
    %791 = arith.index_cast %c7_i32 : i32 to index
    %c0_445 = arith.constant 0 : index
    %c0_446 = arith.constant 0 : index
    %792 = vector.load %arg5[%791, %c0_445, %c0_446] : memref<8x2x32xf32, #tpu.memory_space<vmem>>, vector<1x2x32xf32>
    %793 = vector.shape_cast %792 : vector<1x2x32xf32> to vector<2x32xf32>
    %794 = vector.shape_cast %784 : vector<2x32xf32> to vector<1x2x32xf32>
    tpu.vector_store %arg5[%791, %c0_445, %c0_446], %794 {strides = array<i32>} : memref<8x2x32xf32, #tpu.memory_space<vmem>>, vector<1x2x32xf32>,
    %c8_i32 = arith.constant 8 : i32
    return
  }
  func.func @transform_0(%arg0: i32) -> (i32, i32, i32) {
    %c0_i32 = arith.constant 0 : i32
    %c0_i32_0 = arith.constant 0 : i32
    %c0_i32_1 = arith.constant 0 : i32
    return %arg0, %c0_i32, %c0_i32_0 : i32, i32, i32
  }
  func.func @transform_1(%arg0: i32) -> (i32, i32, i32) {
    %c0_i32 = arith.constant 0 : i32
    %c0_i32_0 = arith.constant 0 : i32
    %c0_i32_1 = arith.constant 0 : i32
    %c0_i32_2 = arith.constant 0 : i32
    return %c0_i32, %c0_i32_0, %c0_i32_1 : i32, i32, i32
  }
  func.func @transform_2(%arg0: i32) -> (i32, i32, i32) {
    %c0_i32 = arith.constant 0 : i32
    %c0_i32_0 = arith.constant 0 : i32
    %c0_i32_1 = arith.constant 0 : i32
    %c0_i32_2 = arith.constant 0 : i32
    return %c0_i32, %c0_i32_0, %c0_i32_1 : i32, i32, i32
  }
  func.func @transform_3(%arg0: i32) -> (i32, i32, i32) {
    %c0_i32 = arith.constant 0 : i32
    %c0_i32_0 = arith.constant 0 : i32
    %c0_i32_1 = arith.constant 0 : i32
    %c0_i32_2 = arith.constant 0 : i32
    return %c0_i32, %c0_i32_0, %c0_i32_1 : i32, i32, i32
  }
  func.func @transform_4(%arg0: i32) -> (i32, i32, i32) {
    %c0_i32 = arith.constant 0 : i32
    %c0_i32_0 = arith.constant 0 : i32
    %c0_i32_1 = arith.constant 0 : i32
    return %arg0, %c0_i32, %c0_i32_0 : i32, i32, i32
  }
}

</mosaic_0001>

<llo_original>
// kernel: seq_model_loss_pallas.3
$region0: #{seq_model_loss_pallas.3}
  #allocation0 [shape = 'u32[]', space=smem, size = 0x4, offset = 0x4, fixed_abs, tag = 'smem constant byte address 0x4 - core index']
  #allocation1 [shape = 'u32[144,128]{1,0:T(1,128)}', space=vmem, size = 0x12000, scoped, tag = 'internal scratch']
  #allocation2 [shape = 'f32[16,1]{1,0:T(8,128)}', space=vmem, size = 0x2000, scoped, tag = 'scratch operand']
  #allocation3 [shape = 'f32[16,1]{1,0:T(8,128)}', space=vmem, size = 0x2000, scoped, tag = 'scratch operand']
  #allocation4 [shape = 'f32[16,1]{1,0:T(8,128)}', space=vmem, size = 0x2000, scoped, tag = 'scratch operand']
  %s0 = inlined_call_operand.vmem [shape: f32[16,32], index: 0, kind: input, shape index: {}]
  %s1 = inlined_call_operand.vmem [shape: s32[16,1], index: 1, kind: input, shape index: {}]
  %s2 = inlined_call_operand.vmem [shape: f32[16,1], index: 2, kind: input, shape index: {}]
  %s3 = inlined_call_operand.vmem [shape: f32[32,20], index: 3, kind: input, shape index: {}]
  %s4 = inlined_call_operand.vmem [shape: f32[1,20], index: 4, kind: input, shape index: {}]
  %s5 = inlined_call_operand.vmem [shape: f32[16,1], index: 5, kind: output, shape index: {}]
  %s6 = sld [smem:[#allocation0]]
  $region38: #{seq_model_loss_pallas.3} parent=0
    _
  %s8 = ssub.s32 1, %s6
  %s9 = scalar_select 0, %s8, %s6
  // Predicated region
  $region2: #{seq_model_loss_pallas.3} parent=0 // pred_check
    _
  $region3: #{seq_model_loss_pallas.3} parent=0 // pred_check_branch
    %11 = sbr.rel (0) target = $region5
  $region4: #{seq_model_loss_pallas.3} parent=0 // pred_region
    _
  $region5: #{seq_model_loss_pallas.3} parent=0 // pred_fallthru
    _
  // Predicated region
  $region6: #{seq_model_loss_pallas.3} parent=0 // pred_check
    _
  $region7: #{seq_model_loss_pallas.3} parent=0 // pred_check_branch
    %13 = sbr.rel (0) target = $region9
  $region8: #{seq_model_loss_pallas.3} parent=0 // pred_region
    _
  $region9: #{seq_model_loss_pallas.3} parent=0 // pred_fallthru
    _
  // Predicated region
  $region10: #{seq_model_loss_pallas.3} parent=0 // pred_check
    _
  $region11: #{seq_model_loss_pallas.3} parent=0 // pred_check_branch
    %15 = sbr.rel (0) target = $region13
  $region12: #{seq_model_loss_pallas.3} parent=0 // pred_region
    _
  $region13: #{seq_model_loss_pallas.3} parent=0 // pred_fallthru
    _
  // Predicated region
  $region14: #{seq_model_loss_pallas.3} parent=0 // pred_check
    _
  $region15: #{seq_model_loss_pallas.3} parent=0 // pred_check_branch
    %17 = sbr.rel (0) target = $region17
  $region16: #{seq_model_loss_pallas.3} parent=0 // pred_region
    _
  $region17: #{seq_model_loss_pallas.3} parent=0 // pred_fallthru
    _
  // Predicated region
  $region18: #{seq_model_loss_pallas.3} parent=0 // pred_check
    _
  $region19: #{seq_model_loss_pallas.3} parent=0 // pred_check_branch
    %19 = sbr.rel (0) target = $region21
  $region20: #{seq_model_loss_pallas.3} parent=0 // pred_region
    _
  $region21: #{seq_model_loss_pallas.3} parent=0 // pred_fallthru
    _
  %p20 = scmp.eq.s32.totalorder 0, 0
  // Predicated region
  $region22: #{seq_model_loss_pallas.3} parent=0 // pred_check
    %p21 = pneg %p20
  $region23: #{seq_model_loss_pallas.3} parent=0 // pred_check_branch
    %23 = sbr.rel (%p21) target = $region25
  $region24: #{seq_model_loss_pallas.3} parent=0 // pred_region
    %vm24 = vcmask 7168
    %25 = vst.msk [vmem:[#allocation2] sm:$0xff] %vm24, -inf
    %26 = vst.msk [vmem:[#allocation2 + $0x8] sm:$0xff] %vm24, -inf
    %27 = vst.msk [vmem:[#allocation3] sm:$0xff] %vm24, 0.0
    %28 = vst.msk [vmem:[#allocation3 + $0x8] sm:$0xff] %vm24, 0.0
    %29 = vst.msk [vmem:[#allocation4] sm:$0xff] %vm24, 0.0
    %30 = vst.msk [vmem:[#allocation4 + $0x8] sm:$0xff] %vm24, 0.0
  $region25: #{seq_model_loss_pallas.3} parent=0 // pred_fallthru
    _
  %v31 = vld [vmem:[%s0] sm:$0xff]
  %v32 = vld [vmem:[%s0 + $0x8] sm:$0xff]
  %v33 = vld [vmem:[%s3] sm:$0xff]
  %v34 = vld [vmem:[%s3 + $0x8] sm:$0xff]
  %v35 = vld [vmem:[%s3 + $0x10] sm:$0xff]
  %v36 = vld [vmem:[%s3 + $0x18] sm:$0xff]
  %v37 = vld [vmem:[%s4] sm:$0x1]
  %v39 = vlaneseq
  %v40 = vshrl.u32 %v39, 7
  %v41 = vsub.s32 0, %v40
  %v42 = vrot.slane %v37, %v41
  %vm44 = vcmask 261120
  %v46 = vsel %vm44, %v31, 0
  %v49 = vsel %vm44, %v32, 0
  %51 = vmatprep.subr.mxu0 0.0
  %52 = vmatpush1.msra.mxu0 0.0
  %53 = vmatprep.subr.mxu0 0.0
  %54 = vmatpush1.msra.mxu0 0.0
  %55 = vmatprep.subr.mxu0 0.0
  %56 = vmatpush1.msra.mxu0 0.0
  %57 = vmatprep.subr.mxu0 0.0
  %58 = vmatpush1.msra.mxu0 0.0
  %59 = vmatprep.subr.mxu0 0.0
  %60 = vmatpush1.msra.mxu0 0.0
  %61 = vmatprep.subr.mxu0 0.0
  %62 = vmatpush1.msra.mxu0 0.0
  %63 = vmatprep.subr.mxu0 0.0
  %64 = vmatpush1.msra.mxu0 0.0
  %65 = vmatprep.subr.mxu0 0.0
  %66 = vmatpush1.msra.mxu0 0.0
  %67 = vmatprep.subr.mxu0 0.0
  %68 = vmatpush1.msra.mxu0 0.0
  %69 = vmatprep.subr.mxu0 0.0
  %70 = vmatpush1.msra.mxu0 0.0
  %71 = vmatprep.subr.mxu0 0.0
  %72 = vmatpush1.msra.mxu0 0.0
  %73 = vmatprep.subr.mxu0 0.0
  %74 = vmatpush1.msra.mxu0 0.0
  %75 = vmatprep.subr.mxu0 0.0
  %76 = vmatpush1.msra.mxu0 %v36
  %77 = vmatprep.subr.mxu0 0.0
  %78 = vmatpush1.msra.mxu0 %v35
  %79 = vmatprep.subr.mxu0 0.0
  %80 = vmatpush1.msra.mxu0 %v34
  %81 = vmatprep.subr.mxu0 0.0
  %82 = vmatpush1.msra.mxu0 %v33
  %83 = vmatprep.subr.mxu0 0.0
  %84 = vmatpush2.msra.mxu0 0.0
  %85 = vmatprep.subr.mxu0 0.0
  %86 = vmatpush2.msra.mxu0 0.0
  %87 = vmatprep.subr.mxu0 0.0
  %88 = vmatpush2.msra.mxu0 0.0
  %89 = vmatprep.subr.mxu0 0.0
  %90 = vmatpush2.msra.mxu0 0.0
  %91 = vmatprep.subr.mxu0 0.0
  %92 = vmatpush2.msra.mxu0 0.0
  %93 = vmatprep.subr.mxu0 0.0
  %94 = vmatpush2.msra.mxu0 0.0
  %95 = vmatprep.subr.mxu0 0.0
  %96 = vmatpush2.msra.mxu0 0.0
  %97 = vmatprep.subr.mxu0 0.0
  %98 = vmatpush2.msra.mxu0 0.0
  %99 = vmatprep.subr.mxu0 0.0
  %100 = vmatpush2.msra.mxu0 0.0
  %101 = vmatprep.subr.mxu0 0.0
  %102 = vmatpush2.msra.mxu0 0.0
  %103 = vmatprep.subr.mxu0 0.0
  %104 = vmatpush2.msra.mxu0 0.0
  %105 = vmatprep.subr.mxu0 0.0
  %106 = vmatpush2.msra.mxu0 0.0
  %107 = vmatprep.subr.mxu0 0.0
  %108 = vmatpush2.msra.mxu0 0.0
  %109 = vmatprep.subr.mxu0 0.0
  %110 = vmatpush2.msra.mxu0 0.0
  %111 = vmatprep.subr.mxu0 0.0
  %112 = vmatpush2.msra.mxu0 0.0
  %113 = vmatprep.subr.mxu0 0.0
  %114 = vmatpush2.msra.mxu0 0.0
  %115 = vmatprep.mubr.f32.mxu0 0.0
  %116 = vmatmul.mubr.f32.gmra.mxu0 %v46
  %v117 = vpop.f32.mrf.mxu0
  %v118 = vadd.f32 %v42, %v117
  %v119 = vpop.f32.mrf.mxu0
  %120 = vmatprep.mubr.f32.mxu0 0.0
  %121 = vmatmul.mubr.f32.gmra.mxu0 %v49
  %v122 = vpop.f32.mrf.mxu0
  %v123 = vadd.f32 %v42, %v122
  %v124 = vpop.f32.mrf.mxu0
  %125 = vdwg.mxu0
  %v126 = vld [vmem:[#allocation2] sm:$0xff]
  %v127 = vld [vmem:[#allocation2 + $0x8] sm:$0xff]
  %vm128 = vcmask 162816
  %v129 = vsel %vm128, %v118, -inf
  %130 = vmax.xlane.f32.xlu0 %v129
  %v131 = vpop.xlane.xlu0 %130
  %v132 = vsel %vm128, %v123, -inf
  %133 = vmax.xlane.f32.xlu0 %v132
  %v134 = vpop.xlane.xlu0 %133
  %v135 = vmax.f32 %v126, %v131
  %v136 = vmax.f32 %v127, %v134
  %v137 = vld [vmem:[#allocation3] sm:$0xff]
  %v138 = vld [vmem:[#allocation3 + $0x8] sm:$0xff]
  %v139 = vsub.f32 %v126, %v135
  %v140 = vsub.f32 %v127, %v136
  %v141 = vmul.f32 %v139, 1.442695
  %v142 = vpow.pop %v141
  %v143 = vmul.f32 %v140, 1.442695
  %v144 = vpow.pop %v143
  %v145 = vmul.f32 %v137, %v142
  %v146 = vmul.f32 %v138, %v144
  %148 = vset.pattern.permute.xlu0 0
  %149 = vperm.xlu0 %148, %v135
  %v150 = vpop.permute.xlu0 %149
  %153 = vset.pattern.permute.xlu0 0
  %154 = vperm.xlu0 %153, %v136
  %v155 = vpop.permute.xlu0 %154
  %v157 = vsub.f32 %v118, %v150
  %v158 = vsub.f32 %v123, %v155
  %v159 = vmul.f32 %v157, 1.442695
  %v160 = vpow.pop %v159
  %v161 = vmul.f32 %v158, 1.442695
  %v162 = vpow.pop %v161
  %v163 = vsel %vm128, %v160, 0.0
  %164 = vadd.xlane.f32.xlu0 %v163
  %v165 = vpop.xlane.xlu0 %164
  %v166 = vsel %vm128, %v162, 0.0
  %167 = vadd.xlane.f32.xlu0 %v166
  %v168 = vpop.xlane.xlu0 %167
  %v169 = vadd.f32 %v145, %v165
  %v170 = vadd.f32 %v146, %v168
  %vm171 = vcmask 7168
  %172 = vst.msk [vmem:[#allocation3] sm:$0xff] %vm171, %v169
  %173 = vst.msk [vmem:[#allocation3 + $0x8] sm:$0xff] %vm171, %v170
  %174 = vst.msk [vmem:[#allocation2] sm:$0xff] %vm171, %v135
  %175 = vst.msk [vmem:[#allocation2 + $0x8] sm:$0xff] %vm171, %v136
  %v176 = vld [vmem:[%s1] sm:$0xff]
  %v177 = vld [vmem:[%s1 + $0x8] sm:$0xff]
  %v178 = vlaneseq
  %v179 = vand.u32 %v178, 127
  %s180 = smul.u32 0, 20
  %v181 = vstv %s180
  %v182 = vadd.s32 %v179, %v181
  %v183 = vld [vmem:[#allocation4] sm:$0xff]
  %v184 = vld [vmem:[#allocation4 + $0x8] sm:$0xff]
  %185 = vset.pattern.permute.xlu0 0
  %186 = vperm.xlu0 %185, %v176
  %v187 = vpop.permute.xlu0 %186
  %188 = vset.pattern.permute.xlu0 0
  %189 = vperm.xlu0 %188, %v177
  %v190 = vpop.permute.xlu0 %189
  %vm191 = vcmp.eq.s32.totalorder %v182, %v187
  %vm192 = vcmp.eq.s32.totalorder %v182, %v190
  %v193 = vsel %vm191, %v118, 0.0
  %v194 = vsel %vm192, %v123, 0.0
  %v195 = vsel %vm128, %v193, 0.0
  %196 = vadd.xlane.f32.xlu0 %v195
  %v197 = vpop.xlane.xlu0 %196
  %v198 = vsel %vm128, %v194, 0.0
  %199 = vadd.xlane.f32.xlu0 %v198
  %v200 = vpop.xlane.xlu0 %199
  %v201 = vadd.f32 %v183, %v197
  %v202 = vadd.f32 %v184, %v200
  %203 = vst.msk [vmem:[#allocation4] sm:$0xff] %vm171, %v201
  %204 = vst.msk [vmem:[#allocation4 + $0x8] sm:$0xff] %vm171, %v202
  // Predicated region
  $region26: #{seq_model_loss_pallas.3} parent=0 // pred_check
    %p205 = pneg %p20
  $region27: #{seq_model_loss_pallas.3} parent=0 // pred_check_branch
    %207 = sbr.rel (%p205) target = $region29
  $region28: #{seq_model_loss_pallas.3} parent=0 // pred_region
    %v208 = vld [vmem:[#allocation2] sm:$0xff]
    %v209 = vld [vmem:[#allocation2 + $0x8] sm:$0xff]
    %v210 = vld [vmem:[#allocation3] sm:$0xff]
    %v211 = vld [vmem:[#allocation3 + $0x8] sm:$0xff]
    %v212 = vlog2.pop %v210
    %v213 = vmul.f32 %v212, 0.6931472
    %v214 = vlog2.pop %v211
    %v215 = vmul.f32 %v214, 0.6931472
    %v216 = vadd.f32 %v208, %v213
    %v217 = vadd.f32 %v209, %v215
    %v218 = vld [vmem:[#allocation4] sm:$0xff]
    %v219 = vld [vmem:[#allocation4 + $0x8] sm:$0xff]
    %v220 = vsub.f32 %v216, %v218
    %v221 = vsub.f32 %v217, %v219
    %v222 = vld [vmem:[%s2] sm:$0xff]
    %v223 = vld [vmem:[%s2 + $0x8] sm:$0xff]
    %v224 = vmul.f32 %v220, %v222
    %v225 = vmul.f32 %v221, %v223
    %226 = vst.msk [vmem:[%s5] sm:$0xff] %vm171, %v224
    %227 = vst.msk [vmem:[%s5 + $0x8] sm:$0xff] %vm171, %v225
  $region29: #{seq_model_loss_pallas.3} parent=0 // pred_fallthru
    _
  // Predicated region
  $region30: #{seq_model_loss_pallas.3} parent=0 // pred_check
    _
  $region31: #{seq_model_loss_pallas.3} parent=0 // pred_check_branch
    %229 = sbr.rel (0) target = $region33
  $region32: #{seq_model_loss_pallas.3} parent=0 // pred_region
    _
  $region33: #{seq_model_loss_pallas.3} parent=0 // pred_fallthru
    _
  // Predicated region
  $region34: #{seq_model_loss_pallas.3} parent=0 // pred_check
    _
  $region35: #{seq_model_loss_pallas.3} parent=0 // pred_check_branch
    %231 = sbr.rel (0) target = $region37
  $region36: #{seq_model_loss_pallas.3} parent=0 // pred_region
    _
  $region37: #{seq_model_loss_pallas.3} parent=0 // pred_fallthru
    _

// kernel: seq_model_loss_pallas.2
$region0: #{seq_model_loss_pallas.2}
  #allocation0 [shape = 'u32[]', space=smem, size = 0x4, offset = 0x4, fixed_abs, tag = 'smem constant byte address 0x4 - core index']
  #allocation1 [shape = 'u32[144,128]{1,0:T(1,128)}', space=vmem, size = 0x12000, scoped, tag = 'internal scratch']
  #allocation2 [shape = 'f32[2,2,32]{2,1,0:T(2,128)}', space=vmem, size = 0x800, scoped, tag = 'scratch operand']
  #allocation3 [shape = 'f32[2,2,32]{2,1,0:T(2,128)}', space=vmem, size = 0x800, scoped, tag = 'scratch operand']
  %s0 = inlined_call_operand.vmem [shape: f32[8,2,32], index: 0, kind: input, shape index: {}]
  %s1 = inlined_call_operand.vmem [shape: f32[2,32,128], index: 1, kind: input, shape index: {}]
  %s2 = inlined_call_operand.vmem [shape: f32[2,32,128], index: 2, kind: input, shape index: {}]
  %s3 = inlined_call_operand.vmem [shape: f32[2,1,128], index: 3, kind: input, shape index: {}]
  %s4 = inlined_call_operand.vmem [shape: f32[8,2,32], index: 4, kind: output, shape index: {}]
  %s5 = sld [smem:[#allocation0]]
  $region30: #{seq_model_loss_pallas.2} parent=0
    _
  %s7 = ssub.s32 1, %s5
  %s8 = scalar_select 0, %s7, %s5
  // Predicated region
  $region2: #{seq_model_loss_pallas.2} parent=0 // pred_check
    _
  $region3: #{seq_model_loss_pallas.2} parent=0 // pred_check_branch
    %10 = sbr.rel (0) target = $region5
  $region4: #{seq_model_loss_pallas.2} parent=0 // pred_region
    _
  $region5: #{seq_model_loss_pallas.2} parent=0 // pred_fallthru
    _
  // Predicated region
  $region6: #{seq_model_loss_pallas.2} parent=0 // pred_check
    _
  $region7: #{seq_model_loss_pallas.2} parent=0 // pred_check_branch
    %12 = sbr.rel (0) target = $region9
  $region8: #{seq_model_loss_pallas.2} parent=0 // pred_region
    _
  $region9: #{seq_model_loss_pallas.2} parent=0 // pred_fallthru
    _
  // Predicated region
  $region10: #{seq_model_loss_pallas.2} parent=0 // pred_check
    _
  $region11: #{seq_model_loss_pallas.2} parent=0 // pred_check_branch
    %14 = sbr.rel (0) target = $region13
  $region12: #{seq_model_loss_pallas.2} parent=0 // pred_region
    _
  $region13: #{seq_model_loss_pallas.2} parent=0 // pred_fallthru
    _
  // Predicated region
  $region14: #{seq_model_loss_pallas.2} parent=0 // pred_check
    _
  $region15: #{seq_model_loss_pallas.2} parent=0 // pred_check_branch
    %16 = sbr.rel (0) target = $region17
  $region16: #{seq_model_loss_pallas.2} parent=0 // pred_region
    _
  $region17: #{seq_model_loss_pallas.2} parent=0 // pred_fallthru
    _
  %p17 = scmp.eq.s32.totalorder 0, 0
  // Predicated region
  $region18: #{seq_model_loss_pallas.2} parent=0 // pred_check
    %p18 = pneg %p17
  $region19: #{seq_model_loss_pallas.2} parent=0 // pred_check_branch
    %20 = sbr.rel (%p18) target = $region21
  $region20: #{seq_model_loss_pallas.2} parent=0 // pred_region
    %vm21 = vcmask 254976
    %22 = vst.msk [vmem:[#allocation2] sm:$0x3] %vm21, 0.0
    %23 = vst.msk [vmem:[#allocation2 + $0x2] sm:$0x3] %vm21, 0.0
    %24 = vst.msk [vmem:[#allocation3] sm:$0x3] %vm21, 0.0
    %25 = vst.msk [vmem:[#allocation3 + $0x2] sm:$0x3] %vm21, 0.0
  $region21: #{seq_model_loss_pallas.2} parent=0 // pred_fallthru
    _
  %v26 = vld [vmem:[%s0] sm:$0x3]
  %v27 = vld [vmem:[%s1] sm:$0xff]
  %v28 = vld [vmem:[%s1 + $0x8] sm:$0xff]
  %v29 = vld [vmem:[%s1 + $0x10] sm:$0xff]
  %v30 = vld [vmem:[%s1 + $0x18] sm:$0xff]
  %v31 = vld [vmem:[#allocation2] sm:$0x3]
  %v32 = vld [vmem:[%s2] sm:$0xff]
  %v33 = vld [vmem:[%s2 + $0x8] sm:$0xff]
  %v34 = vld [vmem:[%s2 + $0x10] sm:$0xff]
  %v35 = vld [vmem:[%s2 + $0x18] sm:$0xff]
  %vm36 = vcmask 261120
  %v38 = vsel %vm36, %v31, 0
  %40 = vmatprep.subr.mxu0 0.0
  %41 = vmatpush1.msra.mxu0 0.0
  %42 = vmatprep.subr.mxu0 0.0
  %43 = vmatpush1.msra.mxu0 0.0
  %44 = vmatprep.subr.mxu0 0.0
  %45 = vmatpush1.msra.mxu0 0.0
  %46 = vmatprep.subr.mxu0 0.0
  %47 = vmatpush1.msra.mxu0 0.0
  %48 = vmatprep.subr.mxu0 0.0
  %49 = vmatpush1.msra.mxu0 0.0
  %50 = vmatprep.subr.mxu0 0.0
  %51 = vmatpush1.msra.mxu0 0.0
  %52 = vmatprep.subr.mxu0 0.0
  %53 = vmatpush1.msra.mxu0 0.0
  %54 = vmatprep.subr.mxu0 0.0
  %55 = vmatpush1.msra.mxu0 0.0
  %56 = vmatprep.subr.mxu0 0.0
  %57 = vmatpush1.msra.mxu0 0.0
  %58 = vmatprep.subr.mxu0 0.0
  %59 = vmatpush1.msra.mxu0 0.0
  %60 = vmatprep.subr.mxu0 0.0
  %61 = vmatpush1.msra.mxu0 0.0
  %62 = vmatprep.subr.mxu0 0.0
  %63 = vmatpush1.msra.mxu0 0.0
  %64 = vmatprep.subr.mxu0 0.0
  %65 = vmatpush1.msra.mxu0 %v35
  %66 = vmatprep.subr.mxu0 0.0
  %67 = vmatpush1.msra.mxu0 %v34
  %68 = vmatprep.subr.mxu0 0.0
  %69 = vmatpush1.msra.mxu0 %v33
  %70 = vmatprep.subr.mxu0 0.0
  %71 = vmatpush1.msra.mxu0 %v32
  %72 = vmatprep.subr.mxu0 0.0
  %73 = vmatpush2.msra.mxu0 0.0
  %74 = vmatprep.subr.mxu0 0.0
  %75 = vmatpush2.msra.mxu0 0.0
  %76 = vmatprep.subr.mxu0 0.0
  %77 = vmatpush2.msra.mxu0 0.0
  %78 = vmatprep.subr.mxu0 0.0
  %79 = vmatpush2.msra.mxu0 0.0
  %80 = vmatprep.subr.mxu0 0.0
  %81 = vmatpush2.msra.mxu0 0.0
  %82 = vmatprep.subr.mxu0 0.0
  %83 = vmatpush2.msra.mxu0 0.0
  %84 = vmatprep.subr.mxu0 0.0
  %85 = vmatpush2.msra.mxu0 0.0
  %86 = vmatprep.subr.mxu0 0.0
  %87 = vmatpush2.msra.mxu0 0.0
  %88 = vmatprep.subr.mxu0 0.0
  %89 = vmatpush2.msra.mxu0 0.0
  %90 = vmatprep.subr.mxu0 0.0
  %91 = vmatpush2.msra.mxu0 0.0
  %92 = vmatprep.subr.mxu0 0.0
  %93 = vmatpush2.msra.mxu0 0.0
  %94 = vmatprep.subr.mxu0 0.0
  %95 = vmatpush2.msra.mxu0 0.0
  %96 = vmatprep.subr.mxu0 0.0
  %97 = vmatpush2.msra.mxu0 0.0
  %98 = vmatprep.subr.mxu0 0.0
  %99 = vmatpush2.msra.mxu0 0.0
  %100 = vmatprep.subr.mxu0 0.0
  %101 = vmatpush2.msra.mxu0 0.0
  %102 = vmatprep.subr.mxu0 0.0
  %103 = vmatpush2.msra.mxu0 0.0
  %104 = vmatprep.mubr.f32.mxu0 0.0
  %105 = vmatmul.mubr.f32.gmra.mxu0 %v38
  %v106 = vpop.f32.mrf.mxu0
  %v107 = vadd.f32 0.0, %v106
  %v108 = vpop.f32.mrf.mxu0
  %109 = vdwg.mxu0
  %v111 = vsel %vm36, %v26, 0
  %113 = vmatprep.subr.mxu0 0.0
  %114 = vmatpush1.msra.mxu0 0.0
  %115 = vmatprep.subr.mxu0 0.0
  %116 = vmatpush1.msra.mxu0 0.0
  %117 = vmatprep.subr.mxu0 0.0
  %118 = vmatpush1.msra.mxu0 0.0
  %119 = vmatprep.subr.mxu0 0.0
  %120 = vmatpush1.msra.mxu0 0.0
  %121 = vmatprep.subr.mxu0 0.0
  %122 = vmatpush1.msra.mxu0 0.0
  %123 = vmatprep.subr.mxu0 0.0
  %124 = vmatpush1.msra.mxu0 0.0
  %125 = vmatprep.subr.mxu0 0.0
  %126 = vmatpush1.msra.mxu0 0.0
  %127 = vmatprep.subr.mxu0 0.0
  %128 = vmatpush1.msra.mxu0 0.0
  %129 = vmatprep.subr.mxu0 0.0
  %130 = vmatpush1.msra.mxu0 0.0
  %131 = vmatprep.subr.mxu0 0.0
  %132 = vmatpush1.msra.mxu0 0.0
  %133 = vmatprep.subr.mxu0 0.0
  %134 = vmatpush1.msra.mxu0 0.0
  %135 = vmatprep.subr.mxu0 0.0
  %136 = vmatpush1.msra.mxu0 0.0
  %137 = vmatprep.subr.mxu0 0.0
  %138 = vmatpush1.msra.mxu0 %v30
  %139 = vmatprep.subr.mxu0 0.0
  %140 = vmatpush1.msra.mxu0 %v29
  %141 = vmatprep.subr.mxu0 0.0
  %142 = vmatpush1.msra.mxu0 %v28
  %143 = vmatprep.subr.mxu0 0.0
  %144 = vmatpush1.msra.mxu0 %v27
  %145 = vmatprep.subr.mxu0 0.0
  %146 = vmatpush2.msra.mxu0 0.0
  %147 = vmatprep.subr.mxu0 0.0
  %148 = vmatpush2.msra.mxu0 0.0
  %149 = vmatprep.subr.mxu0 0.0
  %150 = vmatpush2.msra.mxu0 0.0
  %151 = vmatprep.subr.mxu0 0.0
  %152 = vmatpush2.msra.mxu0 0.0
  %153 = vmatprep.subr.mxu0 0.0
  %154 = vmatpush2.msra.mxu0 0.0
  %155 = vmatprep.subr.mxu0 0.0
  %156 = vmatpush2.msra.mxu0 0.0
  %157 = vmatprep.subr.mxu0 0.0
  %158 = vmatpush2.msra.mxu0 0.0
  %159 = vmatprep.subr.mxu0 0.0
  %160 = vmatpush2.msra.mxu0 0.0
  %161 = vmatprep.subr.mxu0 0.0
  %162 = vmatpush2.msra.mxu0 0.0
  %163 = vmatprep.subr.mxu0 0.0
  %164 = vmatpush2.msra.mxu0 0.0
  %165 = vmatprep.subr.mxu0 0.0
  %166 = vmatpush2.msra.mxu0 0.0
  %167 = vmatprep.subr.mxu0 0.0
  %168 = vmatpush2.msra.mxu0 0.0
  %169 = vmatprep.subr.mxu0 0.0
  %170 = vmatpush2.msra.mxu0 0.0
  %171 = vmatprep.subr.mxu0 0.0
  %172 = vmatpush2.msra.mxu0 0.0
  %173 = vmatprep.subr.mxu0 0.0
  %174 = vmatpush2.msra.mxu0 0.0
  %175 = vmatprep.subr.mxu0 0.0
  %176 = vmatpush2.msra.mxu0 0.0
  %177 = vmatprep.mubr.f32.mxu0 0.0
  %178 = vmatmul.mubr.f32.gmra.mxu0 %v111
  %v179 = vpop.f32.mrf.mxu0
  %v180 = vadd.f32 %v107, %v179
  %v181 = vpop.f32.mrf.mxu0
  %182 = vdwg.mxu0
  %v183 = vld [vmem:[%s3] sm:$0x1]
  %v185 = vlaneseq
  %v186 = vshrl.u32 %v185, 7
  %v187 = vsub.s32 0, %v186
  %v188 = vrot.slane %v183, %v187
  %v190 = vadd.f32 %v180, %v188
  %v191 = vld [vmem:[#allocation3] sm:$0x3]
  %v192 = vxor.u32 %v190, 2147483648
  %v193 = vmul.f32 %v192, 1.442695
  %v194 = vpow.pop %v193
  %v195 = vadd.f32 %v194, 1.0
  %v196 = vrcp.pop %v195
  %v197 = vmul.f32 1.0, %v196
  %v198 = vtanh.pop %v190
  %200 = vrot.lane.b32.xlu0 %v191, 32
  %v201 = vpop.permute.xlu0 %200
  %v203 = vmul.f32 %v197, %v201
  %205 = vrot.lane.b32.xlu0 %v198, 64
  %v206 = vpop.permute.xlu0 %205
  %v208 = vmul.f32 %v197, %v206
  %210 = vrot.lane.b32.xlu0 %v208, 32
  %v211 = vpop.permute.xlu0 %210
  %v213 = vadd.f32 %v203, %v211
  %v214 = vtanh.pop %v213
  %216 = vrot.lane.b32.xlu0 %v214, 64
  %v217 = vpop.permute.xlu0 %216
  %v219 = vmul.f32 %v197, %v217
  %221 = vrot.lane.b32.xlu0 %v219, 32
  %v222 = vpop.permute.xlu0 %221
  %vm224 = vcmask 254976
  %225 = vst.msk [vmem:[#allocation2] sm:$0x3] %vm224, %v222
  %227 = vrot.lane.b32.xlu0 %v213, 96
  %v228 = vpop.permute.xlu0 %227
  %230 = vst.msk [vmem:[#allocation3] sm:$0x3] %vm224, %v228
  %s231 = scalar_lea.vmem %s1, 32
  %v232 = vld [vmem:[%s231] sm:$0xff]
  %v233 = vld [vmem:[%s231 + $0x8] sm:$0xff]
  %v234 = vld [vmem:[%s231 + $0x10] sm:$0xff]
  %v235 = vld [vmem:[%s231 + $0x18] sm:$0xff]
  %s236 = scalar_lea.vmem [#allocation2], 2
  %v237 = vld [vmem:[%s236] sm:$0x3]
  %s238 = scalar_lea.vmem %s2, 32
  %v239 = vld [vmem:[%s238] sm:$0xff]
  %v240 = vld [vmem:[%s238 + $0x8] sm:$0xff]
  %v241 = vld [vmem:[%s238 + $0x10] sm:$0xff]
  %v242 = vld [vmem:[%s238 + $0x18] sm:$0xff]
  %v244 = vsel %vm36, %v237, 0
  %246 = vmatprep.subr.mxu0 0.0
  %247 = vmatpush1.msra.mxu0 0.0
  %248 = vmatprep.subr.mxu0 0.0
  %249 = vmatpush1.msra.mxu0 0.0
  %250 = vmatprep.subr.mxu0 0.0
  %251 = vmatpush1.msra.mxu0 0.0
  %252 = vmatprep.subr.mxu0 0.0
  %253 = vmatpush1.msra.mxu0 0.0
  %254 = vmatprep.subr.mxu0 0.0
  %255 = vmatpush1.msra.mxu0 0.0
  %256 = vmatprep.subr.mxu0 0.0
  %257 = vmatpush1.msra.mxu0 0.0
  %258 = vmatprep.subr.mxu0 0.0
  %259 = vmatpush1.msra.mxu0 0.0
  %260 = vmatprep.subr.mxu0 0.0
  %261 = vmatpush1.msra.mxu0 0.0
  %262 = vmatprep.subr.mxu0 0.0
  %263 = vmatpush1.msra.mxu0 0.0
  %264 = vmatprep.subr.mxu0 0.0
  %265 = vmatpush1.msra.mxu0 0.0
  %266 = vmatprep.subr.mxu0 0.0
  %267 = vmatpush1.msra.mxu0 0.0
  %268 = vmatprep.subr.mxu0 0.0
  %269 = vmatpush1.msra.mxu0 0.0
  %270 = vmatprep.subr.mxu0 0.0
  %271 = vmatpush1.msra.mxu0 %v242
  %272 = vmatprep.subr.mxu0 0.0
  %273 = vmatpush1.msra.mxu0 %v241
  %274 = vmatprep.subr.mxu0 0.0
  %275 = vmatpush1.msra.mxu0 %v240
  %276 = vmatprep.subr.mxu0 0.0
  %277 = vmatpush1.msra.mxu0 %v239
  %278 = vmatprep.subr.mxu0 0.0
  %279 = vmatpush2.msra.mxu0 0.0
  %280 = vmatprep.subr.mxu0 0.0
  %281 = vmatpush2.msra.mxu0 0.0
  %282 = vmatprep.subr.mxu0 0.0
  %283 = vmatpush2.msra.mxu0 0.0
  %284 = vmatprep.subr.mxu0 0.0
  %285 = vmatpush2.msra.mxu0 0.0
  %286 = vmatprep.subr.mxu0 0.0
  %287 = vmatpush2.msra.mxu0 0.0
  %288 = vmatprep.subr.mxu0 0.0
  %289 = vmatpush2.msra.mxu0 0.0
  %290 = vmatprep.subr.mxu0 0.0
  %291 = vmatpush2.msra.mxu0 0.0
  %292 = vmatprep.subr.mxu0 0.0
  %293 = vmatpush2.msra.mxu0 0.0
  %294 = vmatprep.subr.mxu0 0.0
  %295 = vmatpush2.msra.mxu0 0.0
  %296 = vmatprep.subr.mxu0 0.0
  %297 = vmatpush2.msra.mxu0 0.0
  %298 = vmatprep.subr.mxu0 0.0
  %299 = vmatpush2.msra.mxu0 0.0
  %300 = vmatprep.subr.mxu0 0.0
  %301 = vmatpush2.msra.mxu0 0.0
  %302 = vmatprep.subr.mxu0 0.0
  %303 = vmatpush2.msra.mxu0 0.0
  %304 = vmatprep.subr.mxu0 0.0
  %305 = vmatpush2.msra.mxu0 0.0
  %306 = vmatprep.subr.mxu0 0.0
  %307 = vmatpush2.msra.mxu0 0.0
  %308 = vmatprep.subr.mxu0 0.0
  %309 = vmatpush2.msra.mxu0 0.0
  %310 = vmatprep.mubr.f32.mxu0 0.0
  %311 = vmatmul.mubr.f32.gmra.mxu0 %v244
  %v312 = vpop.f32.mrf.mxu0
  %v313 = vadd.f32 0.0, %v312
  %v314 = vpop.f32.mrf.mxu0
  %315 = vdwg.mxu0
  %v316 = vsel %vm36, %v222, 0
  %318 = vmatprep.subr.mxu0 0.0
  %319 = vmatpush1.msra.mxu0 0.0
  %320 = vmatprep.subr.mxu0 0.0
  %321 = vmatpush1.msra.mxu0 0.0
  %322 = vmatprep.subr.mxu0 0.0
  %323 = vmatpush1.msra.mxu0 0.0
  %324 = vmatprep.subr.mxu0 0.0
  %325 = vmatpush1.msra.mxu0 0.0
  %326 = vmatprep.subr.mxu0 0.0
  %327 = vmatpush1.msra.mxu0 0.0
  %328 = vmatprep.subr.mxu0 0.0
  %329 = vmatpush1.msra.mxu0 0.0
  %330 = vmatprep.subr.mxu0 0.0
  %331 = vmatpush1.msra.mxu0 0.0
  %332 = vmatprep.subr.mxu0 0.0
  %333 = vmatpush1.msra.mxu0 0.0
  %334 = vmatprep.subr.mxu0 0.0
  %335 = vmatpush1.msra.mxu0 0.0
  %336 = vmatprep.subr.mxu0 0.0
  %337 = vmatpush1.msra.mxu0 0.0
  %338 = vmatprep.subr.mxu0 0.0
  %339 = vmatpush1.msra.mxu0 0.0
  %340 = vmatprep.subr.mxu0 0.0
  %341 = vmatpush1.msra.mxu0 0.0
  %342 = vmatprep.subr.mxu0 0.0
  %343 = vmatpush1.msra.mxu0 %v235
  %344 = vmatprep.subr.mxu0 0.0
  %345 = vmatpush1.msra.mxu0 %v234
  %346 = vmatprep.subr.mxu0 0.0
  %347 = vmatpush1.msra.mxu0 %v233
  %348 = vmatprep.subr.mxu0 0.0
  %349 = vmatpush1.msra.mxu0 %v232
  %350 = vmatprep.subr.mxu0 0.0
  %351 = vmatpush2.msra.mxu0 0.0
  %352 = vmatprep.subr.mxu0 0.0
  %353 = vmatpush2.msra.mxu0 0.0
  %354 = vmatprep.subr.mxu0 0.0
  %355 = vmatpush2.msra.mxu0 0.0
  %356 = vmatprep.subr.mxu0 0.0
  %357 = vmatpush2.msra.mxu0 0.0
  %358 = vmatprep.subr.mxu0 0.0
  %359 = vmatpush2.msra.mxu0 0.0
  %360 = vmatprep.subr.mxu0 0.0
  %361 = vmatpush2.msra.mxu0 0.0
  %362 = vmatprep.subr.mxu0 0.0
  %363 = vmatpush2.msra.mxu0 0.0
  %364 = vmatprep.subr.mxu0 0.0
  %365 = vmatpush2.msra.mxu0 0.0
  %366 = vmatprep.subr.mxu0 0.0
  %367 = vmatpush2.msra.mxu0 0.0
  %368 = vmatprep.subr.mxu0 0.0
  %369 = vmatpush2.msra.mxu0 0.0
  %370 = vmatprep.subr.mxu0 0.0
  %371 = vmatpush2.msra.mxu0 0.0
  %372 = vmatprep.subr.mxu0 0.0
  %373 = vmatpush2.msra.mxu0 0.0
  %374 = vmatprep.subr.mxu0 0.0
  %375 = vmatpush2.msra.mxu0 0.0
  %376 = vmatprep.subr.mxu0 0.0
  %377 = vmatpush2.msra.mxu0 0.0
  %378 = vmatprep.subr.mxu0 0.0
  %379 = vmatpush2.msra.mxu0 0.0
  %380 = vmatprep.subr.mxu0 0.0
  %381 = vmatpush2.msra.mxu0 0.0
  %382 = vmatprep.mubr.f32.mxu0 0.0
  %383 = vmatmul.mubr.f32.gmra.mxu0 %v316
  %v384 = vpop.f32.mrf.mxu0
  %v385 = vadd.f32 %v313, %v384
  %v386 = vpop.f32.mrf.mxu0
  %387 = vdwg.mxu0
  %s388 = scalar_lea.vmem %s3, 1
  %v389 = vld [vmem:[%s388] sm:$0x1]
  %v391 = vlaneseq
  %v392 = vshrl.u32 %v391, 7
  %v393 = vsub.s32 0, %v392
  %v394 = vrot.slane %v389, %v393
  %v396 = vadd.f32 %v385, %v394
  %s397 = scalar_lea.vmem [#allocation3], 2
  %v398 = vld [vmem:[%s397] sm:$0x3]
  %v399 = vxor.u32 %v396, 2147483648
  %v400 = vmul.f32 %v399, 1.442695
  %v401 = vpow.pop %v400
  %v402 = vadd.f32 %v401, 1.0
  %v403 = vrcp.pop %v402
  %v404 = vmul.f32 1.0, %v403
  %v405 = vtanh.pop %v396
  %407 = vrot.lane.b32.xlu0 %v398, 32
  %v408 = vpop.permute.xlu0 %407
  %v410 = vmul.f32 %v404, %v408
  %412 = vrot.lane.b32.xlu0 %v405, 64
  %v413 = vpop.permute.xlu0 %412
  %v415 = vmul.f32 %v404, %v413
  %417 = vrot.lane.b32.xlu0 %v415, 32
  %v418 = vpop.permute.xlu0 %417
  %v420 = vadd.f32 %v410, %v418
  %v421 = vtanh.pop %v420
  %423 = vrot.lane.b32.xlu0 %v421, 64
  %v424 = vpop.permute.xlu0 %423
  %v426 = vmul.f32 %v404, %v424
  %428 = vrot.lane.b32.xlu0 %v426, 32
  %v429 = vpop.permute.xlu0 %428
  %431 = vst.msk [vmem:[%s236] sm:$0x3] %vm224, %v429
  %433 = vrot.lane.b32.xlu0 %v420, 96
  %v434 = vpop.permute.xlu0 %433
  %436 = vst.msk [vmem:[%s397] sm:$0x3] %vm224, %v434
  %437 = vst.msk [vmem:[%s4] sm:$0x3] %vm224, %v429
  %s438 = scalar_lea.vmem %s0, 2
  %v439 = vld [vmem:[%s438] sm:$0x3]
  %v440 = vld [vmem:[%s1] sm:$0xff]
  %v441 = vld [vmem:[%s1 + $0x8] sm:$0xff]
  %v442 = vld [vmem:[%s1 + $0x10] sm:$0xff]
  %v443 = vld [vmem:[%s1 + $0x18] sm:$0xff]
  %v444 = vld [vmem:[#allocation2] sm:$0x3]
  %v445 = vld [vmem:[%s2] sm:$0xff]
  %v446 = vld [vmem:[%s2 + $0x8] sm:$0xff]
  %v447 = vld [vmem:[%s2 + $0x10] sm:$0xff]
  %v448 = vld [vmem:[%s2 + $0x18] sm:$0xff]
  %v450 = vsel %vm36, %v444, 0
  %452 = vmatprep.subr.mxu0 0.0
  %453 = vmatpush1.msra.mxu0 0.0
  %454 = vmatprep.subr.mxu0 0.0
  %455 = vmatpush1.msra.mxu0 0.0
  %456 = vmatprep.subr.mxu0 0.0
  %457 = vmatpush1.msra.mxu0 0.0
  %458 = vmatprep.subr.mxu0 0.0
  %459 = vmatpush1.msra.mxu0 0.0
  %460 = vmatprep.subr.mxu0 0.0
  %461 = vmatpush1.msra.mxu0 0.0
  %462 = vmatprep.subr.mxu0 0.0
  %463 = vmatpush1.msra.mxu0 0.0
  %464 = vmatprep.subr.mxu0 0.0
  %465 = vmatpush1.msra.mxu0 0.0
  %466 = vmatprep.subr.mxu0 0.0
  %467 = vmatpush1.msra.mxu0 0.0
  %468 = vmatprep.subr.mxu0 0.0
  %469 = vmatpush1.msra.mxu0 0.0
  %470 = vmatprep.subr.mxu0 0.0
  %471 = vmatpush1.msra.mxu0 0.0
  %472 = vmatprep.subr.mxu0 0.0
  %473 = vmatpush1.msra.mxu0 0.0
  %474 = vmatprep.subr.mxu0 0.0
  %475 = vmatpush1.msra.mxu0 0.0
  %476 = vmatprep.subr.mxu0 0.0
  %477 = vmatpush1.msra.mxu0 %v448
  %478 = vmatprep.subr.mxu0 0.0
  %479 = vmatpush1.msra.mxu0 %v447
  %480 = vmatprep.subr.mxu0 0.0
  %481 = vmatpush1.msra.mxu0 %v446
  %482 = vmatprep.subr.mxu0 0.0
  %483 = vmatpush1.msra.mxu0 %v445
  %484 = vmatprep.subr.mxu0 0.0
  %485 = vmatpush2.msra.mxu0 0.0
  %486 = vmatprep.subr.mxu0 0.0
  %487 = vmatpush2.msra.mxu0 0.0
  %488 = vmatprep.subr.mxu0 0.0
  %489 = vmatpush2.msra.mxu0 0.0
  %490 = vmatprep.subr.mxu0 0.0
  %491 = vmatpush2.msra.mxu0 0.0
  %492 = vmatprep.subr.mxu0 0.0
  %493 = vmatpush2.msra.mxu0 0.0
  %494 = vmatprep.subr.mxu0 0.0
  %495 = vmatpush2.msra.mxu0 0.0
  %496 = vmatprep.subr.mxu0 0.0
  %497 = vmatpush2.msra.mxu0 0.0
  %498 = vmatprep.subr.mxu0 0.0
  %499 = vmatpush2.msra.mxu0 0.0
  %500 = vmatprep.subr.mxu0 0.0
  %501 = vmatpush2.msra.mxu0 0.0
  %502 = vmatprep.subr.mxu0 0.0
  %503 = vmatpush2.msra.mxu0 0.0
  %504 = vmatprep.subr.mxu0 0.0
  %505 = vmatpush2.msra.mxu0 0.0
  %506 = vmatprep.subr.mxu0 0.0
  %507 = vmatpush2.msra.mxu0 0.0
  %508 = vmatprep.subr.mxu0 0.0
  %509 = vmatpush2.msra.mxu0 0.0
  %510 = vmatprep.subr.mxu0 0.0
  %511 = vmatpush2.msra.mxu0 0.0
  %512 = vmatprep.subr.mxu0 0.0
  %513 = vmatpush2.msra.mxu0 0.0
  %514 = vmatprep.subr.mxu0 0.0
  %515 = vmatpush2.msra.mxu0 0.0
  %516 = vmatprep.mubr.f32.mxu0 0.0
  %517 = vmatmul.mubr.f32.gmra.mxu0 %v450
  %v518 = vpop.f32.mrf.mxu0
  %v519 = vadd.f32 0.0, %v518
  %v520 = vpop.f32.mrf.mxu0
  %521 = vdwg.mxu0
  %v523 = vsel %vm36, %v439, 0
  %525 = vmatprep.subr.mxu0 0.0
  %526 = vmatpush1.msra.mxu0 0.0
  %527 = vmatprep.subr.mxu0 0.0
  %528 = vmatpush1.msra.mxu0 0.0
  %529 = vmatprep.subr.mxu0 0.0
  %530 = vmatpush1.msra.mxu0 0.0
  %531 = vmatprep.subr.mxu0 0.0
  %532 = vmatpush1.msra.mxu0 0.0
  %533 = vmatprep.subr.mxu0 0.0
  %534 = vmatpush1.msra.mxu0 0.0
  %535 = vmatprep.subr.mxu0 0.0
  %536 = vmatpush1.msra.mxu0 0.0
  %537 = vmatprep.subr.mxu0 0.0
  %538 = vmatpush1.msra.mxu0 0.0
  %539 = vmatprep.subr.mxu0 0.0
  %540 = vmatpush1.msra.mxu0 0.0
  %541 = vmatprep.subr.mxu0 0.0
  %542 = vmatpush1.msra.mxu0 0.0
  %543 = vmatprep.subr.mxu0 0.0
  %544 = vmatpush1.msra.mxu0 0.0
  %545 = vmatprep.subr.mxu0 0.0
  %546 = vmatpush1.msra.mxu0 0.0
  %547 = vmatprep.subr.mxu0 0.0
  %548 = vmatpush1.msra.mxu0 0.0
  %549 = vmatprep.subr.mxu0 0.0
  %550 = vmatpush1.msra.mxu0 %v443
  %551 = vmatprep.subr.mxu0 0.0
  %552 = vmatpush1.msra.mxu0 %v442
  %553 = vmatprep.subr.mxu0 0.0
  %554 = vmatpush1.msra.mxu0 %v441
  %555 = vmatprep.subr.mxu0 0.0
  %556 = vmatpush1.msra.mxu0 %v440
  %557 = vmatprep.subr.mxu0 0.0
  %558 = vmatpush2.msra.mxu0 0.0
  %559 = vmatprep.subr.mxu0 0.0
  %560 = vmatpush2.msra.mxu0 0.0
  %561 = vmatprep.subr.mxu0 0.0
  %562 = vmatpush2.msra.mxu0 0.0
  %563 = vmatprep.subr.mxu0 0.0
  %564 = vmatpush2.msra.mxu0 0.0
  %565 = vmatprep.subr.mxu0 0.0
  %566 = vmatpush2.msra.mxu0 0.0
  %567 = vmatprep.subr.mxu0 0.0
  %568 = vmatpush2.msra.mxu0 0.0
  %569 = vmatprep.subr.mxu0 0.0
  %570 = vmatpush2.msra.mxu0 0.0
  %571 = vmatprep.subr.mxu0 0.0
  %572 = vmatpush2.msra.mxu0 0.0
  %573 = vmatprep.subr.mxu0 0.0
  %574 = vmatpush2.msra.mxu0 0.0
  %575 = vmatprep.subr.mxu0 0.0
  %576 = vmatpush2.msra.mxu0 0.0
  %577 = vmatprep.subr.mxu0 0.0
  %578 = vmatpush2.msra.mxu0 0.0
  %579 = vmatprep.subr.mxu0 0.0
  %580 = vmatpush2.msra.mxu0 0.0
  %581 = vmatprep.subr.mxu0 0.0
  %582 = vmatpush2.msra.mxu0 0.0
  %583 = vmatprep.subr.mxu0 0.0
  %584 = vmatpush2.msra.mxu0 0.0
  %585 = vmatprep.subr.mxu0 0.0
  %586 = vmatpush2.msra.mxu0 0.0
  %587 = vmatprep.subr.mxu0 0.0
  %588 = vmatpush2.msra.mxu0 0.0
  %589 = vmatprep.mubr.f32.mxu0 0.0
  %590 = vmatmul.mubr.f32.gmra.mxu0 %v523
  %v591 = vpop.f32.mrf.mxu0
  %v592 = vadd.f32 %v519, %v591
  %v593 = vpop.f32.mrf.mxu0
  %594 = vdwg.mxu0
  %v595 = vld [vmem:[%s3] sm:$0x1]
  %v597 = vlaneseq
  %v598 = vshrl.u32 %v597, 7
  %v599 = vsub.s32 0, %v598
  %v600 = vrot.slane %v595, %v599
  %v602 = vadd.f32 %v592, %v600
  %v603 = vld [vmem:[#allocation3] sm:$0x3]
  %v604 = vxor.u32 %v602, 2147483648
  %v605 = vmul.f32 %v604, 1.442695
  %v606 = vpow.pop %v605
  %v607 = vadd.f32 %v606, 1.0
  %v608 = vrcp.pop %v607
  %v609 = vmul.f32 1.0, %v608
  %v610 = vtanh.pop %v602
  %612 = vrot.lane.b32.xlu0 %v603, 32
  %v613 = vpop.permute.xlu0 %612
  %v615 = vmul.f32 %v609, %v613
  %617 = vrot.lane.b32.xlu0 %v610, 64
  %v618 = vpop.permute.xlu0 %617
  %v620 = vmul.f32 %v609, %v618
  %622 = vrot.lane.b32.xlu0 %v620, 32
  %v623 = vpop.permute.xlu0 %622
  %v625 = vadd.f32 %v615, %v623
  %v626 = vtanh.pop %v625
  %628 = vrot.lane.b32.xlu0 %v626, 64
  %v629 = vpop.permute.xlu0 %628
  %v631 = vmul.f32 %v609, %v629
  %633 = vrot.lane.b32.xlu0 %v631, 32
  %v634 = vpop.permute.xlu0 %633
  %636 = vst.msk [vmem:[#allocation2] sm:$0x3] %vm224, %v634
  %638 = vrot.lane.b32.xlu0 %v625, 96
  %v639 = vpop.permute.xlu0 %638
  %641 = vst.msk [vmem:[#allocation3] sm:$0x3] %vm224, %v639
  %v642 = vld [vmem:[%s231] sm:$0xff]
  %v643 = vld [vmem:[%s231 + $0x8] sm:$0xff]
  %v644 = vld [vmem:[%s231 + $0x10] sm:$0xff]
  %v645 = vld [vmem:[%s231 + $0x18] sm:$0xff]
  %v646 = vld [vmem:[%s236] sm:$0x3]
  %v647 = vld [vmem:[%s238] sm:$0xff]
  %v648 = vld [vmem:[%s238 + $0x8] sm:$0xff]
  %v649 = vld [vmem:[%s238 + $0x10] sm:$0xff]
  %v650 = vld [vmem:[%s238 + $0x18] sm:$0xff]
  %v652 = vsel %vm36, %v646, 0
  %654 = vmatprep.subr.mxu0 0.0
  %655 = vmatpush1.msra.mxu0 0.0
  %656 = vmatprep.subr.mxu0 0.0
  %657 = vmatpush1.msra.mxu0 0.0
  %658 = vmatprep.subr.mxu0 0.0
  %659 = vmatpush1.msra.mxu0 0.0
  %660 = vmatprep.subr.mxu0 0.0
  %661 = vmatpush1.msra.mxu0 0.0
  %662 = vmatprep.subr.mxu0 0.0
  %663 = vmatpush1.msra.mxu0 0.0
  %664 = vmatprep.subr.mxu0 0.0
  %665 = vmatpush1.msra.mxu0 0.0
  %666 = vmatprep.subr.mxu0 0.0
  %667 = vmatpush1.msra.mxu0 0.0
  %668 = vmatprep.subr.mxu0 0.0
  %669 = vmatpush1.msra.mxu0 0.0
  %670 = vmatprep.subr.mxu0 0.0
  %671 = vmatpush1.msra.mxu0 0.0
  %672 = vmatprep.subr.mxu0 0.0
  %673 = vmatpush1.msra.mxu0 0.0
  %674 = vmatprep.subr.mxu0 0.0
  %675 = vmatpush1.msra.mxu0 0.0
  %676 = vmatprep.subr.mxu0 0.0
  %677 = vmatpush1.msra.mxu0 0.0
  %678 = vmatprep.subr.mxu0 0.0
  %679 = vmatpush1.msra.mxu0 %v650
  %680 = vmatprep.subr.mxu0 0.0
  %681 = vmatpush1.msra.mxu0 %v649
  %682 = vmatprep.subr.mxu0 0.0
  %683 = vmatpush1.msra.mxu0 %v648
  %684 = vmatprep.subr.mxu0 0.0
  %685 = vmatpush1.msra.mxu0 %v647
  %686 = vmatprep.subr.mxu0 0.0
  %687 = vmatpush2.msra.mxu0 0.0
  %688 = vmatprep.subr.mxu0 0.0
  %689 = vmatpush2.msra.mxu0 0.0
  %690 = vmatprep.subr.mxu0 0.0
  %691 = vmatpush2.msra.mxu0 0.0
  %692 = vmatprep.subr.mxu0 0.0
  %693 = vmatpush2.msra.mxu0 0.0
  %694 = vmatprep.subr.mxu0 0.0
  %695 = vmatpush2.msra.mxu0 0.0
  %696 = vmatprep.subr.mxu0 0.0
  %697 = vmatpush2.msra.mxu0 0.0
  %698 = vmatprep.subr.mxu0 0.0
  %699 = vmatpush2.msra.mxu0 0.0
  %700 = vmatprep.subr.mxu0 0.0
  %701 = vmatpush2.msra.mxu0 0.0
  %702 = vmatprep.subr.mxu0 0.0
  %703 = vmatpush2.msra.mxu0 0.0
  %704 = vmatprep.subr.mxu0 0.0
  %705 = vmatpush2.msra.mxu0 0.0
  %706 = vmatprep.subr.mxu0 0.0
  %707 = vmatpush2.msra.mxu0 0.0
  %708 = vmatprep.subr.mxu0 0.0
  %709 = vmatpush2.msra.mxu0 0.0
  %710 = vmatprep.subr.mxu0 0.0
  %711 = vmatpush2.msra.mxu0 0.0
  %712 = vmatprep.subr.mxu0 0.0
  %713 = vmatpush2.msra.mxu0 0.0
  %714 = vmatprep.subr.mxu0 0.0
  %715 = vmatpush2.msra.mxu0 0.0
  %716 = vmatprep.subr.mxu0 0.0
  %717 = vmatpush2.msra.mxu0 0.0
  %718 = vmatprep.mubr.f32.mxu0 0.0
  %719 = vmatmul.mubr.f32.gmra.mxu0 %v652
  %v720 = vpop.f32.mrf.mxu0
  %v721 = vadd.f32 0.0, %v720
  %v722 = vpop.f32.mrf.mxu0
  %723 = vdwg.mxu0
  %v724 = vsel %vm36, %v634, 0
  %726 = vmatprep.subr.mxu0 0.0
  %727 = vmatpush1.msra.mxu0 0.0
  %728 = vmatprep.subr.mxu0 0.0
  %729 = vmatpush1.msra.mxu0 0.0
  %730 = vmatprep.subr.mxu0 0.0
  %731 = vmatpush1.msra.mxu0 0.0
  %732 = vmatprep.subr.mxu0 0.0
  %733 = vmatpush1.msra.mxu0 0.0
  %734 = vmatprep.subr.mxu0 0.0
  %735 = vmatpush1.msra.mxu0 0.0
  %736 = vmatprep.subr.mxu0 0.0
  %737 = vmatpush1.msra.mxu0 0.0
  %738 = vmatprep.subr.mxu0 0.0
  %739 = vmatpush1.msra.mxu0 0.0
  %740 = vmatprep.subr.mxu0 0.0
  %741 = vmatpush1.msra.mxu0 0.0
  %742 = vmatprep.subr.mxu0 0.0
  %743 = vmatpush1.msra.mxu0 0.0
  %744 = vmatprep.subr.mxu0 0.0
  %745 = vmatpush1.msra.mxu0 0.0
  %746 = vmatprep.subr.mxu0 0.0
  %747 = vmatpush1.msra.mxu0 0.0
  %748 = vmatprep.subr.mxu0 0.0
  %749 = vmatpush1.msra.mxu0 0.0
  %750 = vmatprep.subr.mxu0 0.0
  %751 = vmatpush1.msra.mxu0 %v645
  %752 = vmatprep.subr.mxu0 0.0
  %753 = vmatpush1.msra.mxu0 %v644
  %754 = vmatprep.subr.mxu0 0.0
  %755 = vmatpush1.msra.mxu0 %v643
  %756 = vmatprep.subr.mxu0 0.0
  %757 = vmatpush1.msra.mxu0 %v642
  %758 = vmatprep.subr.mxu0 0.0
  %759 = vmatpush2.msra.mxu0 0.0
  %760 = vmatprep.subr.mxu0 0.0
  %761 = vmatpush2.msra.mxu0 0.0
  %762 = vmatprep.subr.mxu0 0.0
  %763 = vmatpush2.msra.mxu0 0.0
  %764 = vmatprep.subr.mxu0 0.0
  %765 = vmatpush2.msra.mxu0 0.0
  %766 = vmatprep.subr.mxu0 0.0
  %767 = vmatpush2.msra.mxu0 0.0
  %768 = vmatprep.subr.mxu0 0.0
  %769 = vmatpush2.msra.mxu0 0.0
  %770 = vmatprep.subr.mxu0 0.0
  %771 = vmatpush2.msra.mxu0 0.0
  %772 = vmatprep.subr.mxu0 0.0
  %773 = vmatpush2.msra.mxu0 0.0
  %774 = vmatprep.subr.mxu0 0.0
  %775 = vmatpush2.msra.mxu0 0.0
  %776 = vmatprep.subr.mxu0 0.0
  %777 = vmatpush2.msra.mxu0 0.0
  %778 = vmatprep.subr.mxu0 0.0
  %779 = vmatpush2.msra.mxu0 0.0
  %780 = vmatprep.subr.mxu0 0.0
  %781 = vmatpush2.msra.mxu0 0.0
  %782 = vmatprep.subr.mxu0 0.0
  %783 = vmatpush2.msra.mxu0 0.0
  %784 = vmatprep.subr.mxu0 0.0
  %785 = vmatpush2.msra.mxu0 0.0
  %786 = vmatprep.subr.mxu0 0.0
  %787 = vmatpush2.msra.mxu0 0.0
  %788 = vmatprep.subr.mxu0 0.0
  %789 = vmatpush2.msra.mxu0 0.0
  %790 = vmatprep.mubr.f32.mxu0 0.0
  %791 = vmatmul.mubr.f32.gmra.mxu0 %v724
  %v792 = vpop.f32.mrf.mxu0
  %v793 = vadd.f32 %v721, %v792
  %v794 = vpop.f32.mrf.mxu0
  %795 = vdwg.mxu0
  %v796 = vld [vmem:[%s388] sm:$0x1]
  %v798 = vlaneseq
  %v799 = vshrl.u32 %v798, 7
  %v800 = vsub.s32 0, %v799
  %v801 = vrot.slane %v796, %v800
  %v803 = vadd.f32 %v793, %v801
  %v804 = vld [vmem:[%s397] sm:$0x3]
  %v805 = vxor.u32 %v803, 2147483648
  %v806 = vmul.f32 %v805, 1.442695
  %v807 = vpow.pop %v806
  %v808 = vadd.f32 %v807, 1.0
  %v809 = vrcp.pop %v808
  %v810 = vmul.f32 1.0, %v809
  %v811 = vtanh.pop %v803
  %813 = vrot.lane.b32.xlu0 %v804, 32
  %v814 = vpop.permute.xlu0 %813
  %v816 = vmul.f32 %v810, %v814
  %818 = vrot.lane.b32.xlu0 %v811, 64
  %v819 = vpop.permute.xlu0 %818
  %v821 = vmul.f32 %v810, %v819
  %823 = vrot.lane.b32.xlu0 %v821, 32
  %v824 = vpop.permute.xlu0 %823
  %v826 = vadd.f32 %v816, %v824
  %v827 = vtanh.pop %v826
  %829 = vrot.lane.b32.xlu0 %v827, 64
  %v830 = vpop.permute.xlu0 %829
  %v832 = vmul.f32 %v810, %v830
  %834 = vrot.lane.b32.xlu0 %v832, 32
  %v835 = vpop.permute.xlu0 %834
  %837 = vst.msk [vmem:[%s236] sm:$0x3] %vm224, %v835
  %839 = vrot.lane.b32.xlu0 %v826, 96
  %v840 = vpop.permute.xlu0 %839
  %842 = vst.msk [vmem:[%s397] sm:$0x3] %vm224, %v840
  %s843 = scalar_lea.vmem %s4, 2
  %844 = vst.msk [vmem:[%s843] sm:$0x3] %vm224, %v835
  %s845 = scalar_lea.vmem %s0, 4
  %v846 = vld [vmem:[%s845] sm:$0x3]
  %v847 = vld [vmem:[%s1] sm:$0xff]
  %v848 = vld [vmem:[%s1 + $0x8] sm:$0xff]
  %v849 = vld [vmem:[%s1 + $0x10] sm:$0xff]
  %v850 = vld [vmem:[%s1 + $0x18] sm:$0xff]
  %v851 = vld [vmem:[#allocation2] sm:$0x3]
  %v852 = vld [vmem:[%s2] sm:$0xff]
  %v853 = vld [vmem:[%s2 + $0x8] sm:$0xff]
  %v854 = vld [vmem:[%s2 + $0x10] sm:$0xff]
  %v855 = vld [vmem:[%s2 + $0x18] sm:$0xff]
  %v857 = vsel %vm36, %v851, 0
  %859 = vmatprep.subr.mxu0 0.0
  %860 = vmatpush1.msra.mxu0 0.0
  %861 = vmatprep.subr.mxu0 0.0
  %862 = vmatpush1.msra.mxu0 0.0
  %863 = vmatprep.subr.mxu0 0.0
  %864 = vmatpush1.msra.mxu0 0.0
  %865 = vmatprep.subr.mxu0 0.0
  %866 = vmatpush1.msra.mxu0 0.0
  %867 = vmatprep.subr.mxu0 0.0
  %868 = vmatpush1.msra.mxu0 0.0
  %869 = vmatprep.subr.mxu0 0.0
  %870 = vmatpush1.msra.mxu0 0.0
  %871 = vmatprep.subr.mxu0 0.0
  %872 = vmatpush1.msra.mxu0 0.0
  %873 = vmatprep.subr.mxu0 0.0
  %874 = vmatpush1.msra.mxu0 0.0
  %875 = vmatprep.subr.mxu0 0.0
  %876 = vmatpush1.msra.mxu0 0.0
  %877 = vmatprep.subr.mxu0 0.0
  %878 = vmatpush1.msra.mxu0 0.0
  %879 = vmatprep.subr.mxu0 0.0
  %880 = vmatpush1.msra.mxu0 0.0
  %881 = vmatprep.subr.mxu0 0.0
  %882 = vmatpush1.msra.mxu0 0.0
  %883 = vmatprep.subr.mxu0 0.0
  %884 = vmatpush1.msra.mxu0 %v855
  %885 = vmatprep.subr.mxu0 0.0
  %886 = vmatpush1.msra.mxu0 %v854
  %887 = vmatprep.subr.mxu0 0.0
  %888 = vmatpush1.msra.mxu0 %v853
  %889 = vmatprep.subr.mxu0 0.0
  %890 = vmatpush1.msra.mxu0 %v852
  %891 = vmatprep.subr.mxu0 0.0
  %892 = vmatpush2.msra.mxu0 0.0
  %893 = vmatprep.subr.mxu0 0.0
  %894 = vmatpush2.msra.mxu0 0.0
  %895 = vmatprep.subr.mxu0 0.0
  %896 = vmatpush2.msra.mxu0 0.0
  %897 = vmatprep.subr.mxu0 0.0
  %898 = vmatpush2.msra.mxu0 0.0
  %899 = vmatprep.subr.mxu0 0.0
  %900 = vmatpush2.msra.mxu0 0.0
  %901 = vmatprep.subr.mxu0 0.0
  %902 = vmatpush2.msra.mxu0 0.0
  %903 = vmatprep.subr.mxu0 0.0
  %904 = vmatpush2.msra.mxu0 0.0
  %905 = vmatprep.subr.mxu0 0.0
  %906 = vmatpush2.msra.mxu0 0.0
  %907 = vmatprep.subr.mxu0 0.0
  %908 = vmatpush2.msra.mxu0 0.0
  %909 = vmatprep.subr.mxu0 0.0
  %910 = vmatpush2.msra.mxu0 0.0
  %911 = vmatprep.subr.mxu0 0.0
  %912 = vmatpush2.msra.mxu0 0.0
  %913 = vmatprep.subr.mxu0 0.0
  %914 = vmatpush2.msra.mxu0 0.0
  %915 = vmatprep.subr.mxu0 0.0
  %916 = vmatpush2.msra.mxu0 0.0
  %917 = vmatprep.subr.mxu0 0.0
  %918 = vmatpush2.msra.mxu0 0.0
  %919 = vmatprep.subr.mxu0 0.0
  %920 = vmatpush2.msra.mxu0 0.0
  %921 = vmatprep.subr.mxu0 0.0
  %922 = vmatpush2.msra.mxu0 0.0
  %923 = vmatprep.mubr.f32.mxu0 0.0
  %924 = vmatmul.mubr.f32.gmra.mxu0 %v857
  %v925 = vpop.f32.mrf.mxu0
  %v926 = vadd.f32 0.0, %v925
  %v927 = vpop.f32.mrf.mxu0
  %928 = vdwg.mxu0
  %v930 = vsel %vm36, %v846, 0
  %932 = vmatprep.subr.mxu0 0.0
  %933 = vmatpush1.msra.mxu0 0.0
  %934 = vmatprep.subr.mxu0 0.0
  %935 = vmatpush1.msra.mxu0 0.0
  %936 = vmatprep.subr.mxu0 0.0
  %937 = vmatpush1.msra.mxu0 0.0
  %938 = vmatprep.subr.mxu0 0.0
  %939 = vmatpush1.msra.mxu0 0.0
  %940 = vmatprep.subr.mxu0 0.0
  %941 = vmatpush1.msra.mxu0 0.0
  %942 = vmatprep.subr.mxu0 0.0
  %943 = vmatpush1.msra.mxu0 0.0
  %944 = vmatprep.subr.mxu0 0.0
  %945 = vmatpush1.msra.mxu0 0.0
  %946 = vmatprep.subr.mxu0 0.0
  %947 = vmatpush1.msra.mxu0 0.0
  %948 = vmatprep.subr.mxu0 0.0
  %949 = vmatpush1.msra.mxu0 0.0
  %950 = vmatprep.subr.mxu0 0.0
  %951 = vmatpush1.msra.mxu0 0.0
  %952 = vmatprep.subr.mxu0 0.0
  %953 = vmatpush1.msra.mxu0 0.0
  %954 = vmatprep.subr.mxu0 0.0
  %955 = vmatpush1.msra.mxu0 0.0
  %956 = vmatprep.subr.mxu0 0.0
  %957 = vmatpush1.msra.mxu0 %v850
  %958 = vmatprep.subr.mxu0 0.0
  %959 = vmatpush1.msra.mxu0 %v849
  %960 = vmatprep.subr.mxu0 0.0
  %961 = vmatpush1.msra.mxu0 %v848
  %962 = vmatprep.subr.mxu0 0.0
  %963 = vmatpush1.msra.mxu0 %v847
  %964 = vmatprep.subr.mxu0 0.0
  %965 = vmatpush2.msra.mxu0 0.0
  %966 = vmatprep.subr.mxu0 0.0
  %967 = vmatpush2.msra.mxu0 0.0
  %968 = vmatprep.subr.mxu0 0.0
  %969 = vmatpush2.msra.mxu0 0.0
  %970 = vmatprep.subr.mxu0 0.0
  %971 = vmatpush2.msra.mxu0 0.0
  %972 = vmatprep.subr.mxu0 0.0
  %973 = vmatpush2.msra.mxu0 0.0
  %974 = vmatprep.subr.mxu0 0.0
  %975 = vmatpush2.msra.mxu0 0.0
  %976 = vmatprep.subr.mxu0 0.0
  %977 = vmatpush2.msra.mxu0 0.0
  %978 = vmatprep.subr.mxu0 0.0
  %979 = vmatpush2.msra.mxu0 0.0
  %980 = vmatprep.subr.mxu0 0.0
  %981 = vmatpush2.msra.mxu0 0.0
  %982 = vmatprep.subr.mxu0 0.0
  %983 = vmatpush2.msra.mxu0 0.0
  %984 = vmatprep.subr.mxu0 0.0
  %985 = vmatpush2.msra.mxu0 0.0
  %986 = vmatprep.subr.mxu0 0.0
  %987 = vmatpush2.msra.mxu0 0.0
  %988 = vmatprep.subr.mxu0 0.0
  %989 = vmatpush2.msra.mxu0 0.0
  %990 = vmatprep.subr.mxu0 0.0
  %991 = vmatpush2.msra.mxu0 0.0
  %992 = vmatprep.subr.mxu0 0.0
  %993 = vmatpush2.msra.mxu0 0.0
  %994 = vmatprep.subr.mxu0 0.0
  %995 = vmatpush2.msra.mxu0 0.0
  %996 = vmatprep.mubr.f32.mxu0 0.0
  %997 = vmatmul.mubr.f32.gmra.mxu0 %v930
  %v998 = vpop.f32.mrf.mxu0
  %v999 = vadd.f32 %v926, %v998
  %v1000 = vpop.f32.mrf.mxu0
  %1001 = vdwg.mxu0
  %v1002 = vld [vmem:[%s3] sm:$0x1]
  %v1004 = vlaneseq
  %v1005 = vshrl.u32 %v1004, 7
  %v1006 = vsub.s32 0, %v1005
  %v1007 = vrot.slane %v1002, %v1006
  %v1009 = vadd.f32 %v999, %v1007
  %v1010 = vld [vmem:[#allocation3] sm:$0x3]
  %v1011 = vxor.u32 %v1009, 2147483648
  %v1012 = vmul.f32 %v1011, 1.442695
  %v1013 = vpow.pop %v1012
  %v1014 = vadd.f32 %v1013, 1.0
  %v1015 = vrcp.pop %v1014
  %v1016 = vmul.f32 1.0, %v1015
  %v1017 = vtanh.pop %v1009
  %1019 = vrot.lane.b32.xlu0 %v1010, 32
  %v1020 = vpop.permute.xlu0 %1019
  %v1022 = vmul.f32 %v1016, %v1020
  %1024 = vrot.lane.b32.xlu0 %v1017, 64
  %v1025 = vpop.permute.xlu0 %1024
  %v1027 = vmul.f32 %v1016, %v1025
  %1029 = vrot.lane.b32.xlu0 %v1027, 32
  %v1030 = vpop.permute.xlu0 %1029
  %v1032 = vadd.f32 %v1022, %v1030
  %v1033 = vtanh.pop %v1032
  %1035 = vrot.lane.b32.xlu0 %v1033, 64
  %v1036 = vpop.permute.xlu0 %1035
  %v1038 = vmul.f32 %v1016, %v1036
  %1040 = vrot.lane.b32.xlu0 %v1038, 32
  %v1041 = vpop.permute.xlu0 %1040
  %1043 = vst.msk [vmem:[#allocation2] sm:$0x3] %vm224, %v1041
  %1045 = vrot.lane.b32.xlu0 %v1032, 96
  %v1046 = vpop.permute.xlu0 %1045
  %1048 = vst.msk [vmem:[#allocation3] sm:$0x3] %vm224, %v1046
  %v1049 = vld [vmem:[%s231] sm:$0xff]
  %v1050 = vld [vmem:[%s231 + $0x8] sm:$0xff]
  %v1051 = vld [vmem:[%s231 + $0x10] sm:$0xff]
  %v1052 = vld [vmem:[%s231 + $0x18] sm:$0xff]
  %v1053 = vld [vmem:[%s236] sm:$0x3]
  %v1054 = vld [vmem:[%s238] sm:$0xff]
  %v1055 = vld [vmem:[%s238 + $0x8] sm:$0xff]
  %v1056 = vld [vmem:[%s238 + $0x10] sm:$0xff]
  %v1057 = vld [vmem:[%s238 + $0x18] sm:$0xff]
  %v1059 = vsel %vm36, %v1053, 0
  %1061 = vmatprep.subr.mxu0 0.0
  %1062 = vmatpush1.msra.mxu0 0.0
  %1063 = vmatprep.subr.mxu0 0.0
  %1064 = vmatpush1.msra.mxu0 0.0
  %1065 = vmatprep.subr.mxu0 0.0
  %1066 = vmatpush1.msra.mxu0 0.0
  %1067 = vmatprep.subr.mxu0 0.0
  %1068 = vmatpush1.msra.mxu0 0.0
  %1069 = vmatprep.subr.mxu0 0.0
  %1070 = vmatpush1.msra.mxu0 0.0
  %1071 = vmatprep.subr.mxu0 0.0
  %1072 = vmatpush1.msra.mxu0 0.0
  %1073 = vmatprep.subr.mxu0 0.0
  %1074 = vmatpush1.msra.mxu0 0.0
  %1075 = vmatprep.subr.mxu0 0.0
  %1076 = vmatpush1.msra.mxu0 0.0
  %1077 = vmatprep.subr.mxu0 0.0
  %1078 = vmatpush1.msra.mxu0 0.0
  %1079 = vmatprep.subr.mxu0 0.0
  %1080 = vmatpush1.msra.mxu0 0.0
  %1081 = vmatprep.subr.mxu0 0.0
  %1082 = vmatpush1.msra.mxu0 0.0
  %1083 = vmatprep.subr.mxu0 0.0
  %1084 = vmatpush1.msra.mxu0 0.0
  %1085 = vmatprep.subr.mxu0 0.0
  %1086 = vmatpush1.msra.mxu0 %v1057
  %1087 = vmatprep.subr.mxu0 0.0
  %1088 = vmatpush1.msra.mxu0 %v1056
  %1089 = vmatprep.subr.mxu0 0.0
  %1090 = vmatpush1.msra.mxu0 %v1055
  %1091 = vmatprep.subr.mxu0 0.0
  %1092 = vmatpush1.msra.mxu0 %v1054
  %1093 = vmatprep.subr.mxu0 0.0
  %1094 = vmatpush2.msra.mxu0 0.0
  %1095 = vmatprep.subr.mxu0 0.0
  %1096 = vmatpush2.msra.mxu0 0.0
  %1097 = vmatprep.subr.mxu0 0.0
  %1098 = vmatpush2.msra.mxu0 0.0
  %1099 = vmatprep.subr.mxu0 0.0
  %1100 = vmatpush2.msra.mxu0 0.0
  %1101 = vmatprep.subr.mxu0 0.0
  %1102 = vmatpush2.msra.mxu0 0.0
  %1103 = vmatprep.subr.mxu0 0.0
  %1104 = vmatpush2.msra.mxu0 0.0
  %1105 = vmatprep.subr.mxu0 0.0
  %1106 = vmatpush2.msra.mxu0 0.0
  %1107 = vmatprep.subr.mxu0 0.0
  %1108 = vmatpush2.msra.mxu0 0.0
  %1109 = vmatprep.subr.mxu0 0.0
  %1110 = vmatpush2.msra.mxu0 0.0
  %1111 = vmatprep.subr.mxu0 0.0
  %1112 = vmatpush2.msra.mxu0 0.0
  %1113 = vmatprep.subr.mxu0 0.0
  %1114 = vmatpush2.msra.mxu0 0.0
  %1115 = vmatprep.subr.mxu0 0.0
  %1116 = vmatpush2.msra.mxu0 0.0
  %1117 = vmatprep.subr.mxu0 0.0
  %1118 = vmatpush2.msra.mxu0 0.0
  %1119 = vmatprep.subr.mxu0 0.0
  %1120 = vmatpush2.msra.mxu0 0.0
  %1121 = vmatprep.subr.mxu0 0.0
  %1122 = vmatpush2.msra.mxu0 0.0
  %1123 = vmatprep.subr.mxu0 0.0
  %1124 = vmatpush2.msra.mxu0 0.0
  %1125 = vmatprep.mubr.f32.mxu0 0.0
  %1126 = vmatmul.mubr.f32.gmra.mxu0 %v1059
  %v1127 = vpop.f32.mrf.mxu0
  %v1128 = vadd.f32 0.0, %v1127
  %v1129 = vpop.f32.mrf.mxu0
  %1130 = vdwg.mxu0
  %v1131 = vsel %vm36, %v1041, 0
  %1133 = vmatprep.subr.mxu0 0.0
  %1134 = vmatpush1.msra.mxu0 0.0
  %1135 = vmatprep.subr.mxu0 0.0
  %1136 = vmatpush1.msra.mxu0 0.0
  %1137 = vmatprep.subr.mxu0 0.0
  %1138 = vmatpush1.msra.mxu0 0.0
  %1139 = vmatprep.subr.mxu0 0.0
  %1140 = vmatpush1.msra.mxu0 0.0
  %1141 = vmatprep.subr.mxu0 0.0
  %1142 = vmatpush1.msra.mxu0 0.0
  %1143 = vmatprep.subr.mxu0 0.0
  %1144 = vmatpush1.msra.mxu0 0.0
  %1145 = vmatprep.subr.mxu0 0.0
  %1146 = vmatpush1.msra.mxu0 0.0
  %1147 = vmatprep.subr.mxu0 0.0
  %1148 = vmatpush1.msra.mxu0 0.0
  %1149 = vmatprep.subr.mxu0 0.0
  %1150 = vmatpush1.msra.mxu0 0.0
  %1151 = vmatprep.subr.mxu0 0.0
  %1152 = vmatpush1.msra.mxu0 0.0
  %1153 = vmatprep.subr.mxu0 0.0
  %1154 = vmatpush1.msra.mxu0 0.0
  %1155 = vmatprep.subr.mxu0 0.0
  %1156 = vmatpush1.msra.mxu0 0.0
  %1157 = vmatprep.subr.mxu0 0.0
  %1158 = vmatpush1.msra.mxu0 %v1052
  %1159 = vmatprep.subr.mxu0 0.0
  %1160 = vmatpush1.msra.mxu0 %v1051
  %1161 = vmatprep.subr.mxu0 0.0
  %1162 = vmatpush1.msra.mxu0 %v1050
  %1163 = vmatprep.subr.mxu0 0.0
  %1164 = vmatpush1.msra.mxu0 %v1049
  %1165 = vmatprep.subr.mxu0 0.0
  %1166 = vmatpush2.msra.mxu0 0.0
  %1167 = vmatprep.subr.mxu0 0.0
  %1168 = vmatpush2.msra.mxu0 0.0
  %1169 = vmatprep.subr.mxu0 0.0
  %1170 = vmatpush2.msra.mxu0 0.0
  %1171 = vmatprep.subr.mxu0 0.0
  %1172 = vmatpush2.msra.mxu0 0.0
  %1173 = vmatprep.subr.mxu0 0.0
  %1174 = vmatpush2.msra.mxu0 0.0
  %1175 = vmatprep.subr.mxu0 0.0
  %1176 = vmatpush2.msra.mxu0 0.0
  %1177 = vmatprep.subr.mxu0 0.0
  %1178 = vmatpush2.msra.mxu0 0.0
  %1179 = vmatprep.subr.mxu0 0.0
  %1180 = vmatpush2.msra.mxu0 0.0
  %1181 = vmatprep.subr.mxu0 0.0
  %1182 = vmatpush2.msra.mxu0 0.0
  %1183 = vmatprep.subr.mxu0 0.0
  %1184 = vmatpush2.msra.mxu0 0.0
  %1185 = vmatprep.subr.mxu0 0.0
  %1186 = vmatpush2.msra.mxu0 0.0
  %1187 = vmatprep.subr.mxu0 0.0
  %1188 = vmatpush2.msra.mxu0 0.0
  %1189 = vmatprep.subr.mxu0 0.0
  %1190 = vmatpush2.msra.mxu0 0.0
  %1191 = vmatprep.subr.mxu0 0.0
  %1192 = vmatpush2.msra.mxu0 0.0
  %1193 = vmatprep.subr.mxu0 0.0
  %1194 = vmatpush2.msra.mxu0 0.0
  %1195 = vmatprep.subr.mxu0 0.0
  %1196 = vmatpush2.msra.mxu0 0.0
  %1197 = vmatprep.mubr.f32.mxu0 0.0
  %1198 = vmatmul.mubr.f32.gmra.mxu0 %v1131
  %v1199 = vpop.f32.mrf.mxu0
  %v1200 = vadd.f32 %v1128, %v1199
  %v1201 = vpop.f32.mrf.mxu0
  %1202 = vdwg.mxu0
  %v1203 = vld [vmem:[%s388] sm:$0x1]
  %v1205 = vlaneseq
  %v1206 = vshrl.u32 %v1205, 7
  %v1207 = vsub.s32 0, %v1206
  %v1208 = vrot.slane %v1203, %v1207
  %v1210 = vadd.f32 %v1200, %v1208
  %v1211 = vld [vmem:[%s397] sm:$0x3]
  %v1212 = vxor.u32 %v1210, 2147483648
  %v1213 = vmul.f32 %v1212, 1.442695
  %v1214 = vpow.pop %v1213
  %v1215 = vadd.f32 %v1214, 1.0
  %v1216 = vrcp.pop %v1215
  %v1217 = vmul.f32 1.0, %v1216
  %v1218 = vtanh.pop %v1210
  %1220 = vrot.lane.b32.xlu0 %v1211, 32
  %v1221 = vpop.permute.xlu0 %1220
  %v1223 = vmul.f32 %v1217, %v1221
  %1225 = vrot.lane.b32.xlu0 %v1218, 64
  %v1226 = vpop.permute.xlu0 %1225
  %v1228 = vmul.f32 %v1217, %v1226
  %1230 = vrot.lane.b32.xlu0 %v1228, 32
  %v1231 = vpop.permute.xlu0 %1230
  %v1233 = vadd.f32 %v1223, %v1231
  %v1234 = vtanh.pop %v1233
  %1236 = vrot.lane.b32.xlu0 %v1234, 64
  %v1237 = vpop.permute.xlu0 %1236
  %v1239 = vmul.f32 %v1217, %v1237
  %1241 = vrot.lane.b32.xlu0 %v1239, 32
  %v1242 = vpop.permute.xlu0 %1241
  %1244 = vst.msk [vmem:[%s236] sm:$0x3] %vm224, %v1242
  %1246 = vrot.lane.b32.xlu0 %v1233, 96
  %v1247 = vpop.permute.xlu0 %1246
  %1249 = vst.msk [vmem:[%s397] sm:$0x3] %vm224, %v1247
  %s1250 = scalar_lea.vmem %s4, 4
  %1251 = vst.msk [vmem:[%s1250] sm:$0x3] %vm224, %v1242
  %s1252 = scalar_lea.vmem %s0, 6
  %v1253 = vld [vmem:[%s1252] sm:$0x3]
  %v1254 = vld [vmem:[%s1] sm:$0xff]
  %v1255 = vld [vmem:[%s1 + $0x8] sm:$0xff]
  %v1256 = vld [vmem:[%s1 + $0x10] sm:$0xff]
  %v1257 = vld [vmem:[%s1 + $0x18] sm:$0xff]
  %v1258 = vld [vmem:[#allocation2] sm:$0x3]
  %v1259 = vld [vmem:[%s2] sm:$0xff]
  %v1260 = vld [vmem:[%s2 + $0x8] sm:$0xff]
  %v1261 = vld [vmem:[%s2 + $0x10] sm:$0xff]
  %v1262 = vld [vmem:[%s2 + $0x18] sm:$0xff]
  %v1264 = vsel %vm36, %v1258, 0
  %1266 = vmatprep.subr.mxu0 0.0
  %1267 = vmatpush1.msra.mxu0 0.0
  %1268 = vmatprep.subr.mxu0 0.0
  %1269 = vmatpush1.msra.mxu0 0.0
  %1270 = vmatprep.subr.mxu0 0.0
  %1271 = vmatpush1.msra.mxu0 0.0
  %1272 = vmatprep.subr.mxu0 0.0
  %1273 = vmatpush1.msra.mxu0 0.0
  %1274 = vmatprep.subr.mxu0 0.0
  %1275 = vmatpush1.msra.mxu0 0.0
  %1276 = vmatprep.subr.mxu0 0.0
  %1277 = vmatpush1.msra.mxu0 0.0
  %1278 = vmatprep.subr.mxu0 0.0
  %1279 = vmatpush1.msra.mxu0 0.0
  %1280 = vmatprep.subr.mxu0 0.0
  %1281 = vmatpush1.msra.mxu0 0.0
  %1282 = vmatprep.subr.mxu0 0.0
  %1283 = vmatpush1.msra.mxu0 0.0
  %1284 = vmatprep.subr.mxu0 0.0
  %1285 = vmatpush1.msra.mxu0 0.0
  %1286 = vmatprep.subr.mxu0 0.0
  %1287 = vmatpush1.msra.mxu0 0.0
  %1288 = vmatprep.subr.mxu0 0.0
  %1289 = vmatpush1.msra.mxu0 0.0
  %1290 = vmatprep.subr.mxu0 0.0
  %1291 = vmatpush1.msra.mxu0 %v1262
  %1292 = vmatprep.subr.mxu0 0.0
  %1293 = vmatpush1.msra.mxu0 %v1261
  %1294 = vmatprep.subr.mxu0 0.0
  %1295 = vmatpush1.msra.mxu0 %v1260
  %1296 = vmatprep.subr.mxu0 0.0
  %1297 = vmatpush1.msra.mxu0 %v1259
  %1298 = vmatprep.subr.mxu0 0.0
  %1299 = vmatpush2.msra.mxu0 0.0
  %1300 = vmatprep.subr.mxu0 0.0
  %1301 = vmatpush2.msra.mxu0 0.0
  %1302 = vmatprep.subr.mxu0 0.0
  %1303 = vmatpush2.msra.mxu0 0.0
  %1304 = vmatprep.subr.mxu0 0.0
  %1305 = vmatpush2.msra.mxu0 0.0
  %1306 = vmatprep.subr.mxu0 0.0
  %1307 = vmatpush2.msra.mxu0 0.0
  %1308 = vmatprep.subr.mxu0 0.0
  %1309 = vmatpush2.msra.mxu0 0.0
  %1310 = vmatprep.subr.mxu0 0.0
  %1311 = vmatpush2.msra.mxu0 0.0
  %1312 = vmatprep.subr.mxu0 0.0
  %1313 = vmatpush2.msra.mxu0 0.0
  %1314 = vmatprep.subr.mxu0 0.0
  %1315 = vmatpush2.msra.mxu0 0.0
  %1316 = vmatprep.subr.mxu0 0.0
  %1317 = vmatpush2.msra.mxu0 0.0
  %1318 = vmatprep.subr.mxu0 0.0
  %1319 = vmatpush2.msra.mxu0 0.0
  %1320 = vmatprep.subr.mxu0 0.0
  %1321 = vmatpush2.msra.mxu0 0.0
  %1322 = vmatprep.subr.mxu0 0.0
  %1323 = vmatpush2.msra.mxu0 0.0
  %1324 = vmatprep.subr.mxu0 0.0
  %1325 = vmatpush2.msra.mxu0 0.0
  %1326 = vmatprep.subr.mxu0 0.0
  %1327 = vmatpush2.msra.mxu0 0.0
  %1328 = vmatprep.subr.mxu0 0.0
  %1329 = vmatpush2.msra.mxu0 0.0
  %1330 = vmatprep.mubr.f32.mxu0 0.0
  %1331 = vmatmul.mubr.f32.gmra.mxu0 %v1264
  %v1332 = vpop.f32.mrf.mxu0
  %v1333 = vadd.f32 0.0, %v1332
  %v1334 = vpop.f32.mrf.mxu0
  %1335 = vdwg.mxu0
  %v1337 = vsel %vm36, %v1253, 0
  %1339 = vmatprep.subr.mxu0 0.0
  %1340 = vmatpush1.msra.mxu0 0.0
  %1341 = vmatprep.subr.mxu0 0.0
  %1342 = vmatpush1.msra.mxu0 0.0
  %1343 = vmatprep.subr.mxu0 0.0
  %1344 = vmatpush1.msra.mxu0 0.0
  %1345 = vmatprep.subr.mxu0 0.0
  %1346 = vmatpush1.msra.mxu0 0.0
  %1347 = vmatprep.subr.mxu0 0.0
  %1348 = vmatpush1.msra.mxu0 0.0
  %1349 = vmatprep.subr.mxu0 0.0
  %1350 = vmatpush1.msra.mxu0 0.0
  %1351 = vmatprep.subr.mxu0 0.0
  %1352 = vmatpush1.msra.mxu0 0.0
  %1353 = vmatprep.subr.mxu0 0.0
  %1354 = vmatpush1.msra.mxu0 0.0
  %1355 = vmatprep.subr.mxu0 0.0
  %1356 = vmatpush1.msra.mxu0 0.0
  %1357 = vmatprep.subr.mxu0 0.0
  %1358 = vmatpush1.msra.mxu0 0.0
  %1359 = vmatprep.subr.mxu0 0.0
  %1360 = vmatpush1.msra.mxu0 0.0
  %1361 = vmatprep.subr.mxu0 0.0
  %1362 = vmatpush1.msra.mxu0 0.0
  %1363 = vmatprep.subr.mxu0 0.0
  %1364 = vmatpush1.msra.mxu0 %v1257
  %1365 = vmatprep.subr.mxu0 0.0
  %1366 = vmatpush1.msra.mxu0 %v1256
  %1367 = vmatprep.subr.mxu0 0.0
  %1368 = vmatpush1.msra.mxu0 %v1255
  %1369 = vmatprep.subr.mxu0 0.0
  %1370 = vmatpush1.msra.mxu0 %v1254
  %1371 = vmatprep.subr.mxu0 0.0
  %1372 = vmatpush2.msra.mxu0 0.0
  %1373 = vmatprep.subr.mxu0 0.0
  %1374 = vmatpush2.msra.mxu0 0.0
  %1375 = vmatprep.subr.mxu0 0.0
  %1376 = vmatpush2.msra.mxu0 0.0
  %1377 = vmatprep.subr.mxu0 0.0
  %1378 = vmatpush2.msra.mxu0 0.0
  %1379 = vmatprep.subr.mxu0 0.0
  %1380 = vmatpush2.msra.mxu0 0.0
  %1381 = vmatprep.subr.mxu0 0.0
  %1382 = vmatpush2.msra.mxu0 0.0
  %1383 = vmatprep.subr.mxu0 0.0
  %1384 = vmatpush2.msra.mxu0 0.0
  %1385 = vmatprep.subr.mxu0 0.0
  %1386 = vmatpush2.msra.mxu0 0.0
  %1387 = vmatprep.subr.mxu0 0.0
  %1388 = vmatpush2.msra.mxu0 0.0
  %1389 = vmatprep.subr.mxu0 0.0
  %1390 = vmatpush2.msra.mxu0 0.0
  %1391 = vmatprep.subr.mxu0 0.0
  %1392 = vmatpush2.msra.mxu0 0.0
  %1393 = vmatprep.subr.mxu0 0.0
  %1394 = vmatpush2.msra.mxu0 0.0
  %1395 = vmatprep.subr.mxu0 0.0
  %1396 = vmatpush2.msra.mxu0 0.0
  %1397 = vmatprep.subr.mxu0 0.0
  %1398 = vmatpush2.msra.mxu0 0.0
  %1399 = vmatprep.subr.mxu0 0.0
  %1400 = vmatpush2.msra.mxu0 0.0
  %1401 = vmatprep.subr.mxu0 0.0
  %1402 = vmatpush2.msra.mxu0 0.0
  %1403 = vmatprep.mubr.f32.mxu0 0.0
  %1404 = vmatmul.mubr.f32.gmra.mxu0 %v1337
  %v1405 = vpop.f32.mrf.mxu0
  %v1406 = vadd.f32 %v1333, %v1405
  %v1407 = vpop.f32.mrf.mxu0
  %1408 = vdwg.mxu0
  %v1409 = vld [vmem:[%s3] sm:$0x1]
  %v1411 = vlaneseq
  %v1412 = vshrl.u32 %v1411, 7
  %v1413 = vsub.s32 0, %v1412
  %v1414 = vrot.slane %v1409, %v1413
  %v1416 = vadd.f32 %v1406, %v1414
  %v1417 = vld [vmem:[#allocation3] sm:$0x3]
  %v1418 = vxor.u32 %v1416, 2147483648
  %v1419 = vmul.f32 %v1418, 1.442695
  %v1420 = vpow.pop %v1419
  %v1421 = vadd.f32 %v1420, 1.0
  %v1422 = vrcp.pop %v1421
  %v1423 = vmul.f32 1.0, %v1422
  %v1424 = vtanh.pop %v1416
  %1426 = vrot.lane.b32.xlu0 %v1417, 32
  %v1427 = vpop.permute.xlu0 %1426
  %v1429 = vmul.f32 %v1423, %v1427
  %1431 = vrot.lane.b32.xlu0 %v1424, 64
  %v1432 = vpop.permute.xlu0 %1431
  %v1434 = vmul.f32 %v1423, %v1432
  %1436 = vrot.lane.b32.xlu0 %v1434, 32
  %v1437 = vpop.permute.xlu0 %1436
  %v1439 = vadd.f32 %v1429, %v1437
  %v1440 = vtanh.pop %v1439
  %1442 = vrot.lane.b32.xlu0 %v1440, 64
  %v1443 = vpop.permute.xlu0 %1442
  %v1445 = vmul.f32 %v1423, %v1443
  %1447 = vrot.lane.b32.xlu0 %v1445, 32
  %v1448 = vpop.permute.xlu0 %1447
  %1450 = vst.msk [vmem:[#allocation2] sm:$0x3] %vm224, %v1448
  %1452 = vrot.lane.b32.xlu0 %v1439, 96
  %v1453 = vpop.permute.xlu0 %1452
  %1455 = vst.msk [vmem:[#allocation3] sm:$0x3] %vm224, %v1453
  %v1456 = vld [vmem:[%s231] sm:$0xff]
  %v1457 = vld [vmem:[%s231 + $0x8] sm:$0xff]
  %v1458 = vld [vmem:[%s231 + $0x10] sm:$0xff]
  %v1459 = vld [vmem:[%s231 + $0x18] sm:$0xff]
  %v1460 = vld [vmem:[%s236] sm:$0x3]
  %v1461 = vld [vmem:[%s238] sm:$0xff]
  %v1462 = vld [vmem:[%s238 + $0x8] sm:$0xff]
  %v1463 = vld [vmem:[%s238 + $0x10] sm:$0xff]
  %v1464 = vld [vmem:[%s238 + $0x18] sm:$0xff]
  %v1466 = vsel %vm36, %v1460, 0
  %1468 = vmatprep.subr.mxu0 0.0
  %1469 = vmatpush1.msra.mxu0 0.0
  %1470 = vmatprep.subr.mxu0 0.0
  %1471 = vmatpush1.msra.mxu0 0.0
  %1472 = vmatprep.subr.mxu0 0.0
  %1473 = vmatpush1.msra.mxu0 0.0
  %1474 = vmatprep.subr.mxu0 0.0
  %1475 = vmatpush1.msra.mxu0 0.0
  %1476 = vmatprep.subr.mxu0 0.0
  %1477 = vmatpush1.msra.mxu0 0.0
  %1478 = vmatprep.subr.mxu0 0.0
  %1479 = vmatpush1.msra.mxu0 0.0
  %1480 = vmatprep.subr.mxu0 0.0
  %1481 = vmatpush1.msra.mxu0 0.0
  %1482 = vmatprep.subr.mxu0 0.0
  %1483 = vmatpush1.msra.mxu0 0.0
  %1484 = vmatprep.subr.mxu0 0.0
  %1485 = vmatpush1.msra.mxu0 0.0
  %1486 = vmatprep.subr.mxu0 0.0
  %1487 = vmatpush1.msra.mxu0 0.0
  %1488 = vmatprep.subr.mxu0 0.0
  %1489 = vmatpush1.msra.mxu0 0.0
  %1490 = vmatprep.subr.mxu0 0.0
  %1491 = vmatpush1.msra.mxu0 0.0
  %1492 = vmatprep.subr.mxu0 0.0
  %1493 = vmatpush1.msra.mxu0 %v1464
  %1494 = vmatprep.subr.mxu0 0.0
  %1495 = vmatpush1.msra.mxu0 %v1463
  %1496 = vmatprep.subr.mxu0 0.0
  %1497 = vmatpush1.msra.mxu0 %v1462
  %1498 = vmatprep.subr.mxu0 0.0
  %1499 = vmatpush1.msra.mxu0 %v1461
  %1500 = vmatprep.subr.mxu0 0.0
  %1501 = vmatpush2.msra.mxu0 0.0
  %1502 = vmatprep.subr.mxu0 0.0
  %1503 = vmatpush2.msra.mxu0 0.0
  %1504 = vmatprep.subr.mxu0 0.0
  %1505 = vmatpush2.msra.mxu0 0.0
  %1506 = vmatprep.subr.mxu0 0.0
  %1507 = vmatpush2.msra.mxu0 0.0
  %1508 = vmatprep.subr.mxu0 0.0
  %1509 = vmatpush2.msra.mxu0 0.0
  %1510 = vmatprep.subr.mxu0 0.0
  %1511 = vmatpush2.msra.mxu0 0.0
  %1512 = vmatprep.subr.mxu0 0.0
  %1513 = vmatpush2.msra.mxu0 0.0
  %1514 = vmatprep.subr.mxu0 0.0
  %1515 = vmatpush2.msra.mxu0 0.0
  %1516 = vmatprep.subr.mxu0 0.0
  %1517 = vmatpush2.msra.mxu0 0.0
  %1518 = vmatprep.subr.mxu0 0.0
  %1519 = vmatpush2.msra.mxu0 0.0
  %1520 = vmatprep.subr.mxu0 0.0
  %1521 = vmatpush2.msra.mxu0 0.0
  %1522 = vmatprep.subr.mxu0 0.0
  %1523 = vmatpush2.msra.mxu0 0.0
  %1524 = vmatprep.subr.mxu0 0.0
  %1525 = vmatpush2.msra.mxu0 0.0
  %1526 = vmatprep.subr.mxu0 0.0
  %1527 = vmatpush2.msra.mxu0 0.0
  %1528 = vmatprep.subr.mxu0 0.0
  %1529 = vmatpush2.msra.mxu0 0.0
  %1530 = vmatprep.subr.mxu0 0.0
  %1531 = vmatpush2.msra.mxu0 0.0
  %1532 = vmatprep.mubr.f32.mxu0 0.0
  %1533 = vmatmul.mubr.f32.gmra.mxu0 %v1466
  %v1534 = vpop.f32.mrf.mxu0
  %v1535 = vadd.f32 0.0, %v1534
  %v1536 = vpop.f32.mrf.mxu0
  %1537 = vdwg.mxu0
  %v1538 = vsel %vm36, %v1448, 0
  %1540 = vmatprep.subr.mxu0 0.0
  %1541 = vmatpush1.msra.mxu0 0.0
  %1542 = vmatprep.subr.mxu0 0.0
  %1543 = vmatpush1.msra.mxu0 0.0
  %1544 = vmatprep.subr.mxu0 0.0
  %1545 = vmatpush1.msra.mxu0 0.0
  %1546 = vmatprep.subr.mxu0 0.0
  %1547 = vmatpush1.msra.mxu0 0.0
  %1548 = vmatprep.subr.mxu0 0.0
  %1549 = vmatpush1.msra.mxu0 0.0
  %1550 = vmatprep.subr.mxu0 0.0
  %1551 = vmatpush1.msra.mxu0 0.0
  %1552 = vmatprep.subr.mxu0 0.0
  %1553 = vmatpush1.msra.mxu0 0.0
  %1554 = vmatprep.subr.mxu0 0.0
  %1555 = vmatpush1.msra.mxu0 0.0
  %1556 = vmatprep.subr.mxu0 0.0
  %1557 = vmatpush1.msra.mxu0 0.0
  %1558 = vmatprep.subr.mxu0 0.0
  %1559 = vmatpush1.msra.mxu0 0.0
  %1560 = vmatprep.subr.mxu0 0.0
  %1561 = vmatpush1.msra.mxu0 0.0
  %1562 = vmatprep.subr.mxu0 0.0
  %1563 = vmatpush1.msra.mxu0 0.0
  %1564 = vmatprep.subr.mxu0 0.0
  %1565 = vmatpush1.msra.mxu0 %v1459
  %1566 = vmatprep.subr.mxu0 0.0
  %1567 = vmatpush1.msra.mxu0 %v1458
  %1568 = vmatprep.subr.mxu0 0.0
  %1569 = vmatpush1.msra.mxu0 %v1457
  %1570 = vmatprep.subr.mxu0 0.0
  %1571 = vmatpush1.msra.mxu0 %v1456
  %1572 = vmatprep.subr.mxu0 0.0
  %1573 = vmatpush2.msra.mxu0 0.0
  %1574 = vmatprep.subr.mxu0 0.0
  %1575 = vmatpush2.msra.mxu0 0.0
  %1576 = vmatprep.subr.mxu0 0.0
  %1577 = vmatpush2.msra.mxu0 0.0
  %1578 = vmatprep.subr.mxu0 0.0
  %1579 = vmatpush2.msra.mxu0 0.0
  %1580 = vmatprep.subr.mxu0 0.0
  %1581 = vmatpush2.msra.mxu0 0.0
  %1582 = vmatprep.subr.mxu0 0.0
  %1583 = vmatpush2.msra.mxu0 0.0
  %1584 = vmatprep.subr.mxu0 0.0
  %1585 = vmatpush2.msra.mxu0 0.0
  %1586 = vmatprep.subr.mxu0 0.0
  %1587 = vmatpush2.msra.mxu0 0.0
  %1588 = vmatprep.subr.mxu0 0.0
  %1589 = vmatpush2.msra.mxu0 0.0
  %1590 = vmatprep.subr.mxu0 0.0
  %1591 = vmatpush2.msra.mxu0 0.0
  %1592 = vmatprep.subr.mxu0 0.0
  %1593 = vmatpush2.msra.mxu0 0.0
  %1594 = vmatprep.subr.mxu0 0.0
  %1595 = vmatpush2.msra.mxu0 0.0
  %1596 = vmatprep.subr.mxu0 0.0
  %1597 = vmatpush2.msra.mxu0 0.0
  %1598 = vmatprep.subr.mxu0 0.0
  %1599 = vmatpush2.msra.mxu0 0.0
  %1600 = vmatprep.subr.mxu0 0.0
  %1601 = vmatpush2.msra.mxu0 0.0
  %1602 = vmatprep.subr.mxu0 0.0
  %1603 = vmatpush2.msra.mxu0 0.0
  %1604 = vmatprep.mubr.f32.mxu0 0.0
  %1605 = vmatmul.mubr.f32.gmra.mxu0 %v1538
  %v1606 = vpop.f32.mrf.mxu0
  %v1607 = vadd.f32 %v1535, %v1606
  %v1608 = vpop.f32.mrf.mxu0
  %1609 = vdwg.mxu0
  %v1610 = vld [vmem:[%s388] sm:$0x1]
  %v1612 = vlaneseq
  %v1613 = vshrl.u32 %v1612, 7
  %v1614 = vsub.s32 0, %v1613
  %v1615 = vrot.slane %v1610, %v1614
  %v1617 = vadd.f32 %v1607, %v1615
  %v1618 = vld [vmem:[%s397] sm:$0x3]
  %v1619 = vxor.u32 %v1617, 2147483648
  %v1620 = vmul.f32 %v1619, 1.442695
  %v1621 = vpow.pop %v1620
  %v1622 = vadd.f32 %v1621, 1.0
  %v1623 = vrcp.pop %v1622
  %v1624 = vmul.f32 1.0, %v1623
  %v1625 = vtanh.pop %v1617
  %1627 = vrot.lane.b32.xlu0 %v1618, 32
  %v1628 = vpop.permute.xlu0 %1627
  %v1630 = vmul.f32 %v1624, %v1628
  %1632 = vrot.lane.b32.xlu0 %v1625, 64
  %v1633 = vpop.permute.xlu0 %1632
  %v1635 = vmul.f32 %v1624, %v1633
  %1637 = vrot.lane.b32.xlu0 %v1635, 32
  %v1638 = vpop.permute.xlu0 %1637
  %v1640 = vadd.f32 %v1630, %v1638
  %v1641 = vtanh.pop %v1640
  %1643 = vrot.lane.b32.xlu0 %v1641, 64
  %v1644 = vpop.permute.xlu0 %1643
  %v1646 = vmul.f32 %v1624, %v1644
  %1648 = vrot.lane.b32.xlu0 %v1646, 32
  %v1649 = vpop.permute.xlu0 %1648
  %1651 = vst.msk [vmem:[%s236] sm:$0x3] %vm224, %v1649
  %1653 = vrot.lane.b32.xlu0 %v1640, 96
  %v1654 = vpop.permute.xlu0 %1653
  %1656 = vst.msk [vmem:[%s397] sm:$0x3] %vm224, %v1654
  %s1657 = scalar_lea.vmem %s4, 6
  %1658 = vst.msk [vmem:[%s1657] sm:$0x3] %vm224, %v1649
  %s1659 = scalar_lea.vmem %s0, 8
  %v1660 = vld [vmem:[%s1659] sm:$0x3]
  %v1661 = vld [vmem:[%s1] sm:$0xff]
  %v1662 = vld [vmem:[%s1 + $0x8] sm:$0xff]
  %v1663 = vld [vmem:[%s1 + $0x10] sm:$0xff]
  %v1664 = vld [vmem:[%s1 + $0x18] sm:$0xff]
  %v1665 = vld [vmem:[#allocation2] sm:$0x3]
  %v1666 = vld [vmem:[%s2] sm:$0xff]
  %v1667 = vld [vmem:[%s2 + $0x8] sm:$0xff]
  %v1668 = vld [vmem:[%s2 + $0x10] sm:$0xff]
  %v1669 = vld [vmem:[%s2 + $0x18] sm:$0xff]
  %v1671 = vsel %vm36, %v1665, 0
  %1673 = vmatprep.subr.mxu0 0.0
  %1674 = vmatpush1.msra.mxu0 0.0
  %1675 = vmatprep.subr.mxu0 0.0
  %1676 = vmatpush1.msra.mxu0 0.0
  %1677 = vmatprep.subr.mxu0 0.0
  %1678 = vmatpush1.msra.mxu0 0.0
  %1679 = vmatprep.subr.mxu0 0.0
  %1680 = vmatpush1.msra.mxu0 0.0
  %1681 = vmatprep.subr.mxu0 0.0
  %1682 = vmatpush1.msra.mxu0 0.0
  %1683 = vmatprep.subr.mxu0 0.0
  %1684 = vmatpush1.msra.mxu0 0.0
  %1685 = vmatprep.subr.mxu0 0.0
  %1686 = vmatpush1.msra.mxu0 0.0
  %1687 = vmatprep.subr.mxu0 0.0
  %1688 = vmatpush1.msra.mxu0 0.0
  %1689 = vmatprep.subr.mxu0 0.0
  %1690 = vmatpush1.msra.mxu0 0.0
  %1691 = vmatprep.subr.mxu0 0.0
  %1692 = vmatpush1.msra.mxu0 0.0
  %1693 = vmatprep.subr.mxu0 0.0
  %1694 = vmatpush1.msra.mxu0 0.0
  %1695 = vmatprep.subr.mxu0 0.0
  %1696 = vmatpush1.msra.mxu0 0.0
  %1697 = vmatprep.subr.mxu0 0.0
  %1698 = vmatpush1.msra.mxu0 %v1669
  %1699 = vmatprep.subr.mxu0 0.0
  %1700 = vmatpush1.msra.mxu0 %v1668
  %1701 = vmatprep.subr.mxu0 0.0
  %1702 = vmatpush1.msra.mxu0 %v1667
  %1703 = vmatprep.subr.mxu0 0.0
  %1704 = vmatpush1.msra.mxu0 %v1666
  %1705 = vmatprep.subr.mxu0 0.0
  %1706 = vmatpush2.msra.mxu0 0.0
  %1707 = vmatprep.subr.mxu0 0.0
  %1708 = vmatpush2.msra.mxu0 0.0
  %1709 = vmatprep.subr.mxu0 0.0
  %1710 = vmatpush2.msra.mxu0 0.0
  %1711 = vmatprep.subr.mxu0 0.0
  %1712 = vmatpush2.msra.mxu0 0.0
  %1713 = vmatprep.subr.mxu0 0.0
  %1714 = vmatpush2.msra.mxu0 0.0
  %1715 = vmatprep.subr.mxu0 0.0
  %1716 = vmatpush2.msra.mxu0 0.0
  %1717 = vmatprep.subr.mxu0 0.0
  %1718 = vmatpush2.msra.mxu0 0.0
  %1719 = vmatprep.subr.mxu0 0.0
  %1720 = vmatpush2.msra.mxu0 0.0
  %1721 = vmatprep.subr.mxu0 0.0
  %1722 = vmatpush2.msra.mxu0 0.0
  %1723 = vmatprep.subr.mxu0 0.0
  %1724 = vmatpush2.msra.mxu0 0.0
  %1725 = vmatprep.subr.mxu0 0.0
  %1726 = vmatpush2.msra.mxu0 0.0
  %1727 = vmatprep.subr.mxu0 0.0
  %1728 = vmatpush2.msra.mxu0 0.0
  %1729 = vmatprep.subr.mxu0 0.0
  %1730 = vmatpush2.msra.mxu0 0.0
  %1731 = vmatprep.subr.mxu0 0.0
  %1732 = vmatpush2.msra.mxu0 0.0
  %1733 = vmatprep.subr.mxu0 0.0
  %1734 = vmatpush2.msra.mxu0 0.0
  %1735 = vmatprep.subr.mxu0 0.0
  %1736 = vmatpush2.msra.mxu0 0.0
  %1737 = vmatprep.mubr.f32.mxu0 0.0
  %1738 = vmatmul.mubr.f32.gmra.mxu0 %v1671
  %v1739 = vpop.f32.mrf.mxu0
  %v1740 = vadd.f32 0.0, %v1739
  %v1741 = vpop.f32.mrf.mxu0
  %1742 = vdwg.mxu0
  %v1744 = vsel %vm36, %v1660, 0
  %1746 = vmatprep.subr.mxu0 0.0
  %1747 = vmatpush1.msra.mxu0 0.0
  %1748 = vmatprep.subr.mxu0 0.0
  %1749 = vmatpush1.msra.mxu0 0.0
  %1750 = vmatprep.subr.mxu0 0.0
  %1751 = vmatpush1.msra.mxu0 0.0
  %1752 = vmatprep.subr.mxu0 0.0
  %1753 = vmatpush1.msra.mxu0 0.0
  %1754 = vmatprep.subr.mxu0 0.0
  %1755 = vmatpush1.msra.mxu0 0.0
  %1756 = vmatprep.subr.mxu0 0.0
  %1757 = vmatpush1.msra.mxu0 0.0
  %1758 = vmatprep.subr.mxu0 0.0
  %1759 = vmatpush1.msra.mxu0 0.0
  %1760 = vmatprep.subr.mxu0 0.0
  %1761 = vmatpush1.msra.mxu0 0.0
  %1762 = vmatprep.subr.mxu0 0.0
  %1763 = vmatpush1.msra.mxu0 0.0
  %1764 = vmatprep.subr.mxu0 0.0
  %1765 = vmatpush1.msra.mxu0 0.0
  %1766 = vmatprep.subr.mxu0 0.0
  %1767 = vmatpush1.msra.mxu0 0.0
  %1768 = vmatprep.subr.mxu0 0.0
  %1769 = vmatpush1.msra.mxu0 0.0
  %1770 = vmatprep.subr.mxu0 0.0
  %1771 = vmatpush1.msra.mxu0 %v1664
  %1772 = vmatprep.subr.mxu0 0.0
  %1773 = vmatpush1.msra.mxu0 %v1663
  %1774 = vmatprep.subr.mxu0 0.0
  %1775 = vmatpush1.msra.mxu0 %v1662
  %1776 = vmatprep.subr.mxu0 0.0
  %1777 = vmatpush1.msra.mxu0 %v1661
  %1778 = vmatprep.subr.mxu0 0.0
  %1779 = vmatpush2.msra.mxu0 0.0
  %1780 = vmatprep.subr.mxu0 0.0
  %1781 = vmatpush2.msra.mxu0 0.0
  %1782 = vmatprep.subr.mxu0 0.0
  %1783 = vmatpush2.msra.mxu0 0.0
  %1784 = vmatprep.subr.mxu0 0.0
  %1785 = vmatpush2.msra.mxu0 0.0
  %1786 = vmatprep.subr.mxu0 0.0
  %1787 = vmatpush2.msra.mxu0 0.0
  %1788 = vmatprep.subr.mxu0 0.0
  %1789 = vmatpush2.msra.mxu0 0.0
  %1790 = vmatprep.subr.mxu0 0.0
  %1791 = vmatpush2.msra.mxu0 0.0
  %1792 = vmatprep.subr.mxu0 0.0
  %1793 = vmatpush2.msra.mxu0 0.0
  %1794 = vmatprep.subr.mxu0 0.0
  %1795 = vmatpush2.msra.mxu0 0.0
  %1796 = vmatprep.subr.mxu0 0.0
  %1797 = vmatpush2.msra.mxu0 0.0
  %1798 = vmatprep.subr.mxu0 0.0
  %1799 = vmatpush2.msra.mxu0 0.0
  %1800 = vmatprep.subr.mxu0 0.0
  %1801 = vmatpush2.msra.mxu0 0.0
  %1802 = vmatprep.subr.mxu0 0.0
  %1803 = vmatpush2.msra.mxu0 0.0
  %1804 = vmatprep.subr.mxu0 0.0
  %1805 = vmatpush2.msra.mxu0 0.0
  %1806 = vmatprep.subr.mxu0 0.0
  %1807 = vmatpush2.msra.mxu0 0.0
  %1808 = vmatprep.subr.mxu0 0.0
  %1809 = vmatpush2.msra.mxu0 0.0
  %1810 = vmatprep.mubr.f32.mxu0 0.0
  %1811 = vmatmul.mubr.f32.gmra.mxu0 %v1744
  %v1812 = vpop.f32.mrf.mxu0
  %v1813 = vadd.f32 %v1740, %v1812
  %v1814 = vpop.f32.mrf.mxu0
  %1815 = vdwg.mxu0
  %v1816 = vld [vmem:[%s3] sm:$0x1]
  %v1818 = vlaneseq
  %v1819 = vshrl.u32 %v1818, 7
  %v1820 = vsub.s32 0, %v1819
  %v1821 = vrot.slane %v1816, %v1820
  %v1823 = vadd.f32 %v1813, %v1821
  %v1824 = vld [vmem:[#allocation3] sm:$0x3]
  %v1825 = vxor.u32 %v1823, 2147483648
  %v1826 = vmul.f32 %v1825, 1.442695
  %v1827 = vpow.pop %v1826
  %v1828 = vadd.f32 %v1827, 1.0
  %v1829 = vrcp.pop %v1828
  %v1830 = vmul.f32 1.0, %v1829
  %v1831 = vtanh.pop %v1823
  %1833 = vrot.lane.b32.xlu0 %v1824, 32
  %v1834 = vpop.permute.xlu0 %1833
  %v1836 = vmul.f32 %v1830, %v1834
  %1838 = vrot.lane.b32.xlu0 %v1831, 64
  %v1839 = vpop.permute.xlu0 %1838
  %v1841 = vmul.f32 %v1830, %v1839
  %1843 = vrot.lane.b32.xlu0 %v1841, 32
  %v1844 = vpop.permute.xlu0 %1843
  %v1846 = vadd.f32 %v1836, %v1844
  %v1847 = vtanh.pop %v1846
  %1849 = vrot.lane.b32.xlu0 %v1847, 64
  %v1850 = vpop.permute.xlu0 %1849
  %v1852 = vmul.f32 %v1830, %v1850
  %1854 = vrot.lane.b32.xlu0 %v1852, 32
  %v1855 = vpop.permute.xlu0 %1854
  %1857 = vst.msk [vmem:[#allocation2] sm:$0x3] %vm224, %v1855
  %1859 = vrot.lane.b32.xlu0 %v1846, 96
  %v1860 = vpop.permute.xlu0 %1859
  %1862 = vst.msk [vmem:[#allocation3] sm:$0x3] %vm224, %v1860
  %v1863 = vld [vmem:[%s231] sm:$0xff]
  %v1864 = vld [vmem:[%s231 + $0x8] sm:$0xff]
  %v1865 = vld [vmem:[%s231 + $0x10] sm:$0xff]
  %v1866 = vld [vmem:[%s231 + $0x18] sm:$0xff]
  %v1867 = vld [vmem:[%s236] sm:$0x3]
  %v1868 = vld [vmem:[%s238] sm:$0xff]
  %v1869 = vld [vmem:[%s238 + $0x8] sm:$0xff]
  %v1870 = vld [vmem:[%s238 + $0x10] sm:$0xff]
  %v1871 = vld [vmem:[%s238 + $0x18] sm:$0xff]
  %v1873 = vsel %vm36, %v1867, 0
  %1875 = vmatprep.subr.mxu0 0.0
  %1876 = vmatpush1.msra.mxu0 0.0
  %1877 = vmatprep.subr.mxu0 0.0
  %1878 = vmatpush1.msra.mxu0 0.0
  %1879 = vmatprep.subr.mxu0 0.0
  %1880 = vmatpush1.msra.mxu0 0.0
  %1881 = vmatprep.subr.mxu0 0.0
  %1882 = vmatpush1.msra.mxu0 0.0
  %1883 = vmatprep.subr.mxu0 0.0
  %1884 = vmatpush1.msra.mxu0 0.0
  %1885 = vmatprep.subr.mxu0 0.0
  %1886 = vmatpush1.msra.mxu0 0.0
  %1887 = vmatprep.subr.mxu0 0.0
  %1888 = vmatpush1.msra.mxu0 0.0
  %1889 = vmatprep.subr.mxu0 0.0
  %1890 = vmatpush1.msra.mxu0 0.0
  %1891 = vmatprep.subr.mxu0 0.0
  %1892 = vmatpush1.msra.mxu0 0.0
  %1893 = vmatprep.subr.mxu0 0.0
  %1894 = vmatpush1.msra.mxu0 0.0
  %1895 = vmatprep.subr.mxu0 0.0
  %1896 = vmatpush1.msra.mxu0 0.0
  %1897 = vmatprep.subr.mxu0 0.0
  %1898 = vmatpush1.msra.mxu0 0.0
  %1899 = vmatprep.subr.mxu0 0.0
  %1900 = vmatpush1.msra.mxu0 %v1871
  %1901 = vmatprep.subr.mxu0 0.0
  %1902 = vmatpush1.msra.mxu0 %v1870
  %1903 = vmatprep.subr.mxu0 0.0
  %1904 = vmatpush1.msra.mxu0 %v1869
  %1905 = vmatprep.subr.mxu0 0.0
  %1906 = vmatpush1.msra.mxu0 %v1868
  %1907 = vmatprep.subr.mxu0 0.0
  %1908 = vmatpush2.msra.mxu0 0.0
  %1909 = vmatprep.subr.mxu0 0.0
  %1910 = vmatpush2.msra.mxu0 0.0
  %1911 = vmatprep.subr.mxu0 0.0
  %1912 = vmatpush2.msra.mxu0 0.0
  %1913 = vmatprep.subr.mxu0 0.0
  %1914 = vmatpush2.msra.mxu0 0.0
  %1915 = vmatprep.subr.mxu0 0.0
  %1916 = vmatpush2.msra.mxu0 0.0
  %1917 = vmatprep.subr.mxu0 0.0
  %1918 = vmatpush2.msra.mxu0 0.0
  %1919 = vmatprep.subr.mxu0 0.0
  %1920 = vmatpush2.msra.mxu0 0.0
  %1921 = vmatprep.subr.mxu0 0.0
  %1922 = vmatpush2.msra.mxu0 0.0
  %1923 = vmatprep.subr.mxu0 0.0
  %1924 = vmatpush2.msra.mxu0 0.0
  %1925 = vmatprep.subr.mxu0 0.0
  %1926 = vmatpush2.msra.mxu0 0.0
  %1927 = vmatprep.subr.mxu0 0.0
  %1928 = vmatpush2.msra.mxu0 0.0
  %1929 = vmatprep.subr.mxu0 0.0
  %1930 = vmatpush2.msra.mxu0 0.0
  %1931 = vmatprep.subr.mxu0 0.0
  %1932 = vmatpush2.msra.mxu0 0.0
  %1933 = vmatprep.subr.mxu0 0.0
  %1934 = vmatpush2.msra.mxu0 0.0
  %1935 = vmatprep.subr.mxu0 0.0
  %1936 = vmatpush2.msra.mxu0 0.0
  %1937 = vmatprep.subr.mxu0 0.0
  %1938 = vmatpush2.msra.mxu0 0.0
  %1939 = vmatprep.mubr.f32.mxu0 0.0
  %1940 = vmatmul.mubr.f32.gmra.mxu0 %v1873
  %v1941 = vpop.f32.mrf.mxu0
  %v1942 = vadd.f32 0.0, %v1941
  %v1943 = vpop.f32.mrf.mxu0
  %1944 = vdwg.mxu0
  %v1945 = vsel %vm36, %v1855, 0
  %1947 = vmatprep.subr.mxu0 0.0
  %1948 = vmatpush1.msra.mxu0 0.0
  %1949 = vmatprep.subr.mxu0 0.0
  %1950 = vmatpush1.msra.mxu0 0.0
  %1951 = vmatprep.subr.mxu0 0.0
  %1952 = vmatpush1.msra.mxu0 0.0
  %1953 = vmatprep.subr.mxu0 0.0
  %1954 = vmatpush1.msra.mxu0 0.0
  %1955 = vmatprep.subr.mxu0 0.0
  %1956 = vmatpush1.msra.mxu0 0.0
  %1957 = vmatprep.subr.mxu0 0.0
  %1958 = vmatpush1.msra.mxu0 0.0
  %1959 = vmatprep.subr.mxu0 0.0
  %1960 = vmatpush1.msra.mxu0 0.0
  %1961 = vmatprep.subr.mxu0 0.0
  %1962 = vmatpush1.msra.mxu0 0.0
  %1963 = vmatprep.subr.mxu0 0.0
  %1964 = vmatpush1.msra.mxu0 0.0
  %1965 = vmatprep.subr.mxu0 0.0
  %1966 = vmatpush1.msra.mxu0 0.0
  %1967 = vmatprep.subr.mxu0 0.0
  %1968 = vmatpush1.msra.mxu0 0.0
  %1969 = vmatprep.subr.mxu0 0.0
  %1970 = vmatpush1.msra.mxu0 0.0
  %1971 = vmatprep.subr.mxu0 0.0
  %1972 = vmatpush1.msra.mxu0 %v1866
  %1973 = vmatprep.subr.mxu0 0.0
  %1974 = vmatpush1.msra.mxu0 %v1865
  %1975 = vmatprep.subr.mxu0 0.0
  %1976 = vmatpush1.msra.mxu0 %v1864
  %1977 = vmatprep.subr.mxu0 0.0
  %1978 = vmatpush1.msra.mxu0 %v1863
  %1979 = vmatprep.subr.mxu0 0.0
  %1980 = vmatpush2.msra.mxu0 0.0
  %1981 = vmatprep.subr.mxu0 0.0
  %1982 = vmatpush2.msra.mxu0 0.0
  %1983 = vmatprep.subr.mxu0 0.0
  %1984 = vmatpush2.msra.mxu0 0.0
  %1985 = vmatprep.subr.mxu0 0.0
  %1986 = vmatpush2.msra.mxu0 0.0
  %1987 = vmatprep.subr.mxu0 0.0
  %1988 = vmatpush2.msra.mxu0 0.0
  %1989 = vmatprep.subr.mxu0 0.0
  %1990 = vmatpush2.msra.mxu0 0.0
  %1991 = vmatprep.subr.mxu0 0.0
  %1992 = vmatpush2.msra.mxu0 0.0
  %1993 = vmatprep.subr.mxu0 0.0
  %1994 = vmatpush2.msra.mxu0 0.0
  %1995 = vmatprep.subr.mxu0 0.0
  %1996 = vmatpush2.msra.mxu0 0.0
  %1997 = vmatprep.subr.mxu0 0.0
  %1998 = vmatpush2.msra.mxu0 0.0
  %1999 = vmatprep.subr.mxu0 0.0
  %2000 = vmatpush2.msra.mxu0 0.0
  %2001 = vmatprep.subr.mxu0 0.0
  %2002 = vmatpush2.msra.mxu0 0.0
  %2003 = vmatprep.subr.mxu0 0.0
  %2004 = vmatpush2.msra.mxu0 0.0
  %2005 = vmatprep.subr.mxu0 0.0
  %2006 = vmatpush2.msra.mxu0 0.0
  %2007 = vmatprep.subr.mxu0 0.0
  %2008 = vmatpush2.msra.mxu0 0.0
  %2009 = vmatprep.subr.mxu0 0.0
  %2010 = vmatpush2.msra.mxu0 0.0
  %2011 = vmatprep.mubr.f32.mxu0 0.0
  %2012 = vmatmul.mubr.f32.gmra.mxu0 %v1945
  %v2013 = vpop.f32.mrf.mxu0
  %v2014 = vadd.f32 %v1942, %v2013
  %v2015 = vpop.f32.mrf.mxu0
  %2016 = vdwg.mxu0
  %v2017 = vld [vmem:[%s388] sm:$0x1]
  %v2019 = vlaneseq
  %v2020 = vshrl.u32 %v2019, 7
  %v2021 = vsub.s32 0, %v2020
  %v2022 = vrot.slane %v2017, %v2021
  %v2024 = vadd.f32 %v2014, %v2022
  %v2025 = vld [vmem:[%s397] sm:$0x3]
  %v2026 = vxor.u32 %v2024, 2147483648
  %v2027 = vmul.f32 %v2026, 1.442695
  %v2028 = vpow.pop %v2027
  %v2029 = vadd.f32 %v2028, 1.0
  %v2030 = vrcp.pop %v2029
  %v2031 = vmul.f32 1.0, %v2030
  %v2032 = vtanh.pop %v2024
  %2034 = vrot.lane.b32.xlu0 %v2025, 32
  %v2035 = vpop.permute.xlu0 %2034
  %v2037 = vmul.f32 %v2031, %v2035
  %2039 = vrot.lane.b32.xlu0 %v2032, 64
  %v2040 = vpop.permute.xlu0 %2039
  %v2042 = vmul.f32 %v2031, %v2040
  %2044 = vrot.lane.b32.xlu0 %v2042, 32
  %v2045 = vpop.permute.xlu0 %2044
  %v2047 = vadd.f32 %v2037, %v2045
  %v2048 = vtanh.pop %v2047
  %2050 = vrot.lane.b32.xlu0 %v2048, 64
  %v2051 = vpop.permute.xlu0 %2050
  %v2053 = vmul.f32 %v2031, %v2051
  %2055 = vrot.lane.b32.xlu0 %v2053, 32
  %v2056 = vpop.permute.xlu0 %2055
  %2058 = vst.msk [vmem:[%s236] sm:$0x3] %vm224, %v2056
  %2060 = vrot.lane.b32.xlu0 %v2047, 96
  %v2061 = vpop.permute.xlu0 %2060
  %2063 = vst.msk [vmem:[%s397] sm:$0x3] %vm224, %v2061
  %s2064 = scalar_lea.vmem %s4, 8
  %2065 = vst.msk [vmem:[%s2064] sm:$0x3] %vm224, %v2056
  %s2066 = scalar_lea.vmem %s0, 10
  %v2067 = vld [vmem:[%s2066] sm:$0x3]
  %v2068 = vld [vmem:[%s1] sm:$0xff]
  %v2069 = vld [vmem:[%s1 + $0x8] sm:$0xff]
  %v2070 = vld [vmem:[%s1 + $0x10] sm:$0xff]
  %v2071 = vld [vmem:[%s1 + $0x18] sm:$0xff]
  %v2072 = vld [vmem:[#allocation2] sm:$0x3]
  %v2073 = vld [vmem:[%s2] sm:$0xff]
  %v2074 = vld [vmem:[%s2 + $0x8] sm:$0xff]
  %v2075 = vld [vmem:[%s2 + $0x10] sm:$0xff]
  %v2076 = vld [vmem:[%s2 + $0x18] sm:$0xff]
  %v2078 = vsel %vm36, %v2072, 0
  %2080 = vmatprep.subr.mxu0 0.0
  %2081 = vmatpush1.msra.mxu0 0.0
  %2082 = vmatprep.subr.mxu0 0.0
  %2083 = vmatpush1.msra.mxu0 0.0
  %2084 = vmatprep.subr.mxu0 0.0
  %2085 = vmatpush1.msra.mxu0 0.0
  %2086 = vmatprep.subr.mxu0 0.0
  %2087 = vmatpush1.msra.mxu0 0.0
  %2088 = vmatprep.subr.mxu0 0.0
  %2089 = vmatpush1.msra.mxu0 0.0
  %2090 = vmatprep.subr.mxu0 0.0
  %2091 = vmatpush1.msra.mxu0 0.0
  %2092 = vmatprep.subr.mxu0 0.0
  %2093 = vmatpush1.msra.mxu0 0.0
  %2094 = vmatprep.subr.mxu0 0.0
  %2095 = vmatpush1.msra.mxu0 0.0
  %2096 = vmatprep.subr.mxu0 0.0
  %2097 = vmatpush1.msra.mxu0 0.0
  %2098 = vmatprep.subr.mxu0 0.0
  %2099 = vmatpush1.msra.mxu0 0.0
  %2100 = vmatprep.subr.mxu0 0.0
  %2101 = vmatpush1.msra.mxu0 0.0
  %2102 = vmatprep.subr.mxu0 0.0
  %2103 = vmatpush1.msra.mxu0 0.0
  %2104 = vmatprep.subr.mxu0 0.0
  %2105 = vmatpush1.msra.mxu0 %v2076
  %2106 = vmatprep.subr.mxu0 0.0
  %2107 = vmatpush1.msra.mxu0 %v2075
  %2108 = vmatprep.subr.mxu0 0.0
  %2109 = vmatpush1.msra.mxu0 %v2074
  %2110 = vmatprep.subr.mxu0 0.0
  %2111 = vmatpush1.msra.mxu0 %v2073
  %2112 = vmatprep.subr.mxu0 0.0
  %2113 = vmatpush2.msra.mxu0 0.0
  %2114 = vmatprep.subr.mxu0 0.0
  %2115 = vmatpush2.msra.mxu0 0.0
  %2116 = vmatprep.subr.mxu0 0.0
  %2117 = vmatpush2.msra.mxu0 0.0
  %2118 = vmatprep.subr.mxu0 0.0
  %2119 = vmatpush2.msra.mxu0 0.0
  %2120 = vmatprep.subr.mxu0 0.0
  %2121 = vmatpush2.msra.mxu0 0.0
  %2122 = vmatprep.subr.mxu0 0.0
  %2123 = vmatpush2.msra.mxu0 0.0
  %2124 = vmatprep.subr.mxu0 0.0
  %2125 = vmatpush2.msra.mxu0 0.0
  %2126 = vmatprep.subr.mxu0 0.0
  %2127 = vmatpush2.msra.mxu0 0.0
  %2128 = vmatprep.subr.mxu0 0.0
  %2129 = vmatpush2.msra.mxu0 0.0
  %2130 = vmatprep.subr.mxu0 0.0
  %2131 = vmatpush2.msra.mxu0 0.0
  %2132 = vmatprep.subr.mxu0 0.0
  %2133 = vmatpush2.msra.mxu0 0.0
  %2134 = vmatprep.subr.mxu0 0.0
  %2135 = vmatpush2.msra.mxu0 0.0
  %2136 = vmatprep.subr.mxu0 0.0
  %2137 = vmatpush2.msra.mxu0 0.0
  %2138 = vmatprep.subr.mxu0 0.0
  %2139 = vmatpush2.msra.mxu0 0.0
  %2140 = vmatprep.subr.mxu0 0.0
  %2141 = vmatpush2.msra.mxu0 0.0
  %2142 = vmatprep.subr.mxu0 0.0
  %2143 = vmatpush2.msra.mxu0 0.0
  %2144 = vmatprep.mubr.f32.mxu0 0.0
  %2145 = vmatmul.mubr.f32.gmra.mxu0 %v2078
  %v2146 = vpop.f32.mrf.mxu0
  %v2147 = vadd.f32 0.0, %v2146
  %v2148 = vpop.f32.mrf.mxu0
  %2149 = vdwg.mxu0
  %v2151 = vsel %vm36, %v2067, 0
  %2153 = vmatprep.subr.mxu0 0.0
  %2154 = vmatpush1.msra.mxu0 0.0
  %2155 = vmatprep.subr.mxu0 0.0
  %2156 = vmatpush1.msra.mxu0 0.0
  %2157 = vmatprep.subr.mxu0 0.0
  %2158 = vmatpush1.msra.mxu0 0.0
  %2159 = vmatprep.subr.mxu0 0.0
  %2160 = vmatpush1.msra.mxu0 0.0
  %2161 = vmatprep.subr.mxu0 0.0
  %2162 = vmatpush1.msra.mxu0 0.0
  %2163 = vmatprep.subr.mxu0 0.0
  %2164 = vmatpush1.msra.mxu0 0.0
  %2165 = vmatprep.subr.mxu0 0.0
  %2166 = vmatpush1.msra.mxu0 0.0
  %2167 = vmatprep.subr.mxu0 0.0
  %2168 = vmatpush1.msra.mxu0 0.0
  %2169 = vmatprep.subr.mxu0 0.0
  %2170 = vmatpush1.msra.mxu0 0.0
  %2171 = vmatprep.subr.mxu0 0.0
  %2172 = vmatpush1.msra.mxu0 0.0
  %2173 = vmatprep.subr.mxu0 0.0
  %2174 = vmatpush1.msra.mxu0 0.0
  %2175 = vmatprep.subr.mxu0 0.0
  %2176 = vmatpush1.msra.mxu0 0.0
  %2177 = vmatprep.subr.mxu0 0.0
  %2178 = vmatpush1.msra.mxu0 %v2071
  %2179 = vmatprep.subr.mxu0 0.0
  %2180 = vmatpush1.msra.mxu0 %v2070
  %2181 = vmatprep.subr.mxu0 0.0
  %2182 = vmatpush1.msra.mxu0 %v2069
  %2183 = vmatprep.subr.mxu0 0.0
  %2184 = vmatpush1.msra.mxu0 %v2068
  %2185 = vmatprep.subr.mxu0 0.0
  %2186 = vmatpush2.msra.mxu0 0.0
  %2187 = vmatprep.subr.mxu0 0.0
  %2188 = vmatpush2.msra.mxu0 0.0
  %2189 = vmatprep.subr.mxu0 0.0
  %2190 = vmatpush2.msra.mxu0 0.0
  %2191 = vmatprep.subr.mxu0 0.0
  %2192 = vmatpush2.msra.mxu0 0.0
  %2193 = vmatprep.subr.mxu0 0.0
  %2194 = vmatpush2.msra.mxu0 0.0
  %2195 = vmatprep.subr.mxu0 0.0
  %2196 = vmatpush2.msra.mxu0 0.0
  %2197 = vmatprep.subr.mxu0 0.0
  %2198 = vmatpush2.msra.mxu0 0.0
  %2199 = vmatprep.subr.mxu0 0.0
  %2200 = vmatpush2.msra.mxu0 0.0
  %2201 = vmatprep.subr.mxu0 0.0
  %2202 = vmatpush2.msra.mxu0 0.0
  %2203 = vmatprep.subr.mxu0 0.0
  %2204 = vmatpush2.msra.mxu0 0.0
  %2205 = vmatprep.subr.mxu0 0.0
  %2206 = vmatpush2.msra.mxu0 0.0
  %2207 = vmatprep.subr.mxu0 0.0
  %2208 = vmatpush2.msra.mxu0 0.0
  %2209 = vmatprep.subr.mxu0 0.0
  %2210 = vmatpush2.msra.mxu0 0.0
  %2211 = vmatprep.subr.mxu0 0.0
  %2212 = vmatpush2.msra.mxu0 0.0
  %2213 = vmatprep.subr.mxu0 0.0
  %2214 = vmatpush2.msra.mxu0 0.0
  %2215 = vmatprep.subr.mxu0 0.0
  %2216 = vmatpush2.msra.mxu0 0.0
  %2217 = vmatprep.mubr.f32.mxu0 0.0
  %2218 = vmatmul.mubr.f32.gmra.mxu0 %v2151
  %v2219 = vpop.f32.mrf.mxu0
  %v2220 = vadd.f32 %v2147, %v2219
  %v2221 = vpop.f32.mrf.mxu0
  %2222 = vdwg.mxu0
  %v2223 = vld [vmem:[%s3] sm:$0x1]
  %v2225 = vlaneseq
  %v2226 = vshrl.u32 %v2225, 7
  %v2227 = vsub.s32 0, %v2226
  %v2228 = vrot.slane %v2223, %v2227
  %v2230 = vadd.f32 %v2220, %v2228
  %v2231 = vld [vmem:[#allocation3] sm:$0x3]
  %v2232 = vxor.u32 %v2230, 2147483648
  %v2233 = vmul.f32 %v2232, 1.442695
  %v2234 = vpow.pop %v2233
  %v2235 = vadd.f32 %v2234, 1.0
  %v2236 = vrcp.pop %v2235
  %v2237 = vmul.f32 1.0, %v2236
  %v2238 = vtanh.pop %v2230
  %2240 = vrot.lane.b32.xlu0 %v2231, 32
  %v2241 = vpop.permute.xlu0 %2240
  %v2243 = vmul.f32 %v2237, %v2241
  %2245 = vrot.lane.b32.xlu0 %v2238, 64
  %v2246 = vpop.permute.xlu0 %2245
  %v2248 = vmul.f32 %v2237, %v2246
  %2250 = vrot.lane.b32.xlu0 %v2248, 32
  %v2251 = vpop.permute.xlu0 %2250
  %v2253 = vadd.f32 %v2243, %v2251
  %v2254 = vtanh.pop %v2253
  %2256 = vrot.lane.b32.xlu0 %v2254, 64
  %v2257 = vpop.permute.xlu0 %2256
  %v2259 = vmul.f32 %v2237, %v2257
  %2261 = vrot.lane.b32.xlu0 %v2259, 32
  %v2262 = vpop.permute.xlu0 %2261
  %2264 = vst.msk [vmem:[#allocation2] sm:$0x3] %vm224, %v2262
  %2266 = vrot.lane.b32.xlu0 %v2253, 96
  %v2267 = vpop.permute.xlu0 %2266
  %2269 = vst.msk [vmem:[#allocation3] sm:$0x3] %vm224, %v2267
  %v2270 = vld [vmem:[%s231] sm:$0xff]
  %v2271 = vld [vmem:[%s231 + $0x8] sm:$0xff]
  %v2272 = vld [vmem:[%s231 + $0x10] sm:$0xff]
  %v2273 = vld [vmem:[%s231 + $0x18] sm:$0xff]
  %v2274 = vld [vmem:[%s236] sm:$0x3]
  %v2275 = vld [vmem:[%s238] sm:$0xff]
  %v2276 = vld [vmem:[%s238 + $0x8] sm:$0xff]
  %v2277 = vld [vmem:[%s238 + $0x10] sm:$0xff]
  %v2278 = vld [vmem:[%s238 + $0x18] sm:$0xff]
  %v2280 = vsel %vm36, %v2274, 0
  %2282 = vmatprep.subr.mxu0 0.0
  %2283 = vmatpush1.msra.mxu0 0.0
  %2284 = vmatprep.subr.mxu0 0.0
  %2285 = vmatpush1.msra.mxu0 0.0
  %2286 = vmatprep.subr.mxu0 0.0
  %2287 = vmatpush1.msra.mxu0 0.0
  %2288 = vmatprep.subr.mxu0 0.0
  %2289 = vmatpush1.msra.mxu0 0.0
  %2290 = vmatprep.subr.mxu0 0.0
  %2291 = vmatpush1.msra.mxu0 0.0
  %2292 = vmatprep.subr.mxu0 0.0
  %2293 = vmatpush1.msra.mxu0 0.0
  %2294 = vmatprep.subr.mxu0 0.0
  %2295 = vmatpush1.msra.mxu0 0.0
  %2296 = vmatprep.subr.mxu0 0.0
  %2297 = vmatpush1.msra.mxu0 0.0
  %2298 = vmatprep.subr.mxu0 0.0
  %2299 = vmatpush1.msra.mxu0 0.0
  %2300 = vmatprep.subr.mxu0 0.0
  %2301 = vmatpush1.msra.mxu0 0.0
  %2302 = vmatprep.subr.mxu0 0.0
  %2303 = vmatpush1.msra.mxu0 0.0
  %2304 = vmatprep.subr.mxu0 0.0
  %2305 = vmatpush1.msra.mxu0 0.0
  %2306 = vmatprep.subr.mxu0 0.0
  %2307 = vmatpush1.msra.mxu0 %v2278
  %2308 = vmatprep.subr.mxu0 0.0
  %2309 = vmatpush1.msra.mxu0 %v2277
  %2310 = vmatprep.subr.mxu0 0.0
  %2311 = vmatpush1.msra.mxu0 %v2276
  %2312 = vmatprep.subr.mxu0 0.0
  %2313 = vmatpush1.msra.mxu0 %v2275
  %2314 = vmatprep.subr.mxu0 0.0
  %2315 = vmatpush2.msra.mxu0 0.0
  %2316 = vmatprep.subr.mxu0 0.0
  %2317 = vmatpush2.msra.mxu0 0.0
  %2318 = vmatprep.subr.mxu0 0.0
  %2319 = vmatpush2.msra.mxu0 0.0
  %2320 = vmatprep.subr.mxu0 0.0
  %2321 = vmatpush2.msra.mxu0 0.0
  %2322 = vmatprep.subr.mxu0 0.0
  %2323 = vmatpush2.msra.mxu0 0.0
  %2324 = vmatprep.subr.mxu0 0.0
  %2325 = vmatpush2.msra.mxu0 0.0
  %2326 = vmatprep.subr.mxu0 0.0
  %2327 = vmatpush2.msra.mxu0 0.0
  %2328 = vmatprep.subr.mxu0 0.0
  %2329 = vmatpush2.msra.mxu0 0.0
  %2330 = vmatprep.subr.mxu0 0.0
  %2331 = vmatpush2.msra.mxu0 0.0
  %2332 = vmatprep.subr.mxu0 0.0
  %2333 = vmatpush2.msra.mxu0 0.0
  %2334 = vmatprep.subr.mxu0 0.0
  %2335 = vmatpush2.msra.mxu0 0.0
  %2336 = vmatprep.subr.mxu0 0.0
  %2337 = vmatpush2.msra.mxu0 0.0
  %2338 = vmatprep.subr.mxu0 0.0
  %2339 = vmatpush2.msra.mxu0 0.0
  %2340 = vmatprep.subr.mxu0 0.0
  %2341 = vmatpush2.msra.mxu0 0.0
  %2342 = vmatprep.subr.mxu0 0.0
  %2343 = vmatpush2.msra.mxu0 0.0
  %2344 = vmatprep.subr.mxu0 0.0
  %2345 = vmatpush2.msra.mxu0 0.0
  %2346 = vmatprep.mubr.f32.mxu0 0.0
  %2347 = vmatmul.mubr.f32.gmra.mxu0 %v2280
  %v2348 = vpop.f32.mrf.mxu0
  %v2349 = vadd.f32 0.0, %v2348
  %v2350 = vpop.f32.mrf.mxu0
  %2351 = vdwg.mxu0
  %v2352 = vsel %vm36, %v2262, 0
  %2354 = vmatprep.subr.mxu0 0.0
  %2355 = vmatpush1.msra.mxu0 0.0
  %2356 = vmatprep.subr.mxu0 0.0
  %2357 = vmatpush1.msra.mxu0 0.0
  %2358 = vmatprep.subr.mxu0 0.0
  %2359 = vmatpush1.msra.mxu0 0.0
  %2360 = vmatprep.subr.mxu0 0.0
  %2361 = vmatpush1.msra.mxu0 0.0
  %2362 = vmatprep.subr.mxu0 0.0
  %2363 = vmatpush1.msra.mxu0 0.0
  %2364 = vmatprep.subr.mxu0 0.0
  %2365 = vmatpush1.msra.mxu0 0.0
  %2366 = vmatprep.subr.mxu0 0.0
  %2367 = vmatpush1.msra.mxu0 0.0
  %2368 = vmatprep.subr.mxu0 0.0
  %2369 = vmatpush1.msra.mxu0 0.0
  %2370 = vmatprep.subr.mxu0 0.0
  %2371 = vmatpush1.msra.mxu0 0.0
  %2372 = vmatprep.subr.mxu0 0.0
  %2373 = vmatpush1.msra.mxu0 0.0
  %2374 = vmatprep.subr.mxu0 0.0
  %2375 = vmatpush1.msra.mxu0 0.0
  %2376 = vmatprep.subr.mxu0 0.0
  %2377 = vmatpush1.msra.mxu0 0.0
  %2378 = vmatprep.subr.mxu0 0.0
  %2379 = vmatpush1.msra.mxu0 %v2273
  %2380 = vmatprep.subr.mxu0 0.0
  %2381 = vmatpush1.msra.mxu0 %v2272
  %2382 = vmatprep.subr.mxu0 0.0
  %2383 = vmatpush1.msra.mxu0 %v2271
  %2384 = vmatprep.subr.mxu0 0.0
  %2385 = vmatpush1.msra.mxu0 %v2270
  %2386 = vmatprep.subr.mxu0 0.0
  %2387 = vmatpush2.msra.mxu0 0.0
  %2388 = vmatprep.subr.mxu0 0.0
  %2389 = vmatpush2.msra.mxu0 0.0
  %2390 = vmatprep.subr.mxu0 0.0
  %2391 = vmatpush2.msra.mxu0 0.0
  %2392 = vmatprep.subr.mxu0 0.0
  %2393 = vmatpush2.msra.mxu0 0.0
  %2394 = vmatprep.subr.mxu0 0.0
  %2395 = vmatpush2.msra.mxu0 0.0
  %2396 = vmatprep.subr.mxu0 0.0
  %2397 = vmatpush2.msra.mxu0 0.0
  %2398 = vmatprep.subr.mxu0 0.0
  %2399 = vmatpush2.msra.mxu0 0.0
  %2400 = vmatprep.subr.mxu0 0.0
  %2401 = vmatpush2.msra.mxu0 0.0
  %2402 = vmatprep.subr.mxu0 0.0
  %2403 = vmatpush2.msra.mxu0 0.0
  %2404 = vmatprep.subr.mxu0 0.0
  %2405 = vmatpush2.msra.mxu0 0.0
  %2406 = vmatprep.subr.mxu0 0.0
  %2407 = vmatpush2.msra.mxu0 0.0
  %2408 = vmatprep.subr.mxu0 0.0
  %2409 = vmatpush2.msra.mxu0 0.0
  %2410 = vmatprep.subr.mxu0 0.0
  %2411 = vmatpush2.msra.mxu0 0.0
  %2412 = vmatprep.subr.mxu0 0.0
  %2413 = vmatpush2.msra.mxu0 0.0
  %2414 = vmatprep.subr.mxu0 0.0
  %2415 = vmatpush2.msra.mxu0 0.0
  %2416 = vmatprep.subr.mxu0 0.0
  %2417 = vmatpush2.msra.mxu0 0.0
  %2418 = vmatprep.mubr.f32.mxu0 0.0
  %2419 = vmatmul.mubr.f32.gmra.mxu0 %v2352
  %v2420 = vpop.f32.mrf.mxu0
  %v2421 = vadd.f32 %v2349, %v2420
  %v2422 = vpop.f32.mrf.mxu0
  %2423 = vdwg.mxu0
  %v2424 = vld [vmem:[%s388] sm:$0x1]
  %v2426 = vlaneseq
  %v2427 = vshrl.u32 %v2426, 7
  %v2428 = vsub.s32 0, %v2427
  %v2429 = vrot.slane %v2424, %v2428
  %v2431 = vadd.f32 %v2421, %v2429
  %v2432 = vld [vmem:[%s397] sm:$0x3]
  %v2433 = vxor.u32 %v2431, 2147483648
  %v2434 = vmul.f32 %v2433, 1.442695
  %v2435 = vpow.pop %v2434
  %v2436 = vadd.f32 %v2435, 1.0
  %v2437 = vrcp.pop %v2436
  %v2438 = vmul.f32 1.0, %v2437
  %v2439 = vtanh.pop %v2431
  %2441 = vrot.lane.b32.xlu0 %v2432, 32
  %v2442 = vpop.permute.xlu0 %2441
  %v2444 = vmul.f32 %v2438, %v2442
  %2446 = vrot.lane.b32.xlu0 %v2439, 64
  %v2447 = vpop.permute.xlu0 %2446
  %v2449 = vmul.f32 %v2438, %v2447
  %2451 = vrot.lane.b32.xlu0 %v2449, 32
  %v2452 = vpop.permute.xlu0 %2451
  %v2454 = vadd.f32 %v2444, %v2452
  %v2455 = vtanh.pop %v2454
  %2457 = vrot.lane.b32.xlu0 %v2455, 64
  %v2458 = vpop.permute.xlu0 %2457
  %v2460 = vmul.f32 %v2438, %v2458
  %2462 = vrot.lane.b32.xlu0 %v2460, 32
  %v2463 = vpop.permute.xlu0 %2462
  %2465 = vst.msk [vmem:[%s236] sm:$0x3] %vm224, %v2463
  %2467 = vrot.lane.b32.xlu0 %v2454, 96
  %v2468 = vpop.permute.xlu0 %2467
  %2470 = vst.msk [vmem:[%s397] sm:$0x3] %vm224, %v2468
  %s2471 = scalar_lea.vmem %s4, 10
  %2472 = vst.msk [vmem:[%s2471] sm:$0x3] %vm224, %v2463
  %s2473 = scalar_lea.vmem %s0, 12
  %v2474 = vld [vmem:[%s2473] sm:$0x3]
  %v2475 = vld [vmem:[%s1] sm:$0xff]
  %v2476 = vld [vmem:[%s1 + $0x8] sm:$0xff]
  %v2477 = vld [vmem:[%s1 + $0x10] sm:$0xff]
  %v2478 = vld [vmem:[%s1 + $0x18] sm:$0xff]
  %v2479 = vld [vmem:[#allocation2] sm:$0x3]
  %v2480 = vld [vmem:[%s2] sm:$0xff]
  %v2481 = vld [vmem:[%s2 + $0x8] sm:$0xff]
  %v2482 = vld [vmem:[%s2 + $0x10] sm:$0xff]
  %v2483 = vld [vmem:[%s2 + $0x18] sm:$0xff]
  %v2485 = vsel %vm36, %v2479, 0
  %2487 = vmatprep.subr.mxu0 0.0
  %2488 = vmatpush1.msra.mxu0 0.0
  %2489 = vmatprep.subr.mxu0 0.0
  %2490 = vmatpush1.msra.mxu0 0.0
  %2491 = vmatprep.subr.mxu0 0.0
  %2492 = vmatpush1.msra.mxu0 0.0
  %2493 = vmatprep.subr.mxu0 0.0
  %2494 = vmatpush1.msra.mxu0 0.0
  %2495 = vmatprep.subr.mxu0 0.0
  %2496 = vmatpush1.msra.mxu0 0.0
  %2497 = vmatprep.subr.mxu0 0.0
  %2498 = vmatpush1.msra.mxu0 0.0
  %2499 = vmatprep.subr.mxu0 0.0
  %2500 = vmatpush1.msra.mxu0 0.0
  %2501 = vmatprep.subr.mxu0 0.0
  %2502 = vmatpush1.msra.mxu0 0.0
  %2503 = vmatprep.subr.mxu0 0.0
  %2504 = vmatpush1.msra.mxu0 0.0
  %2505 = vmatprep.subr.mxu0 0.0
  %2506 = vmatpush1.msra.mxu0 0.0
  %2507 = vmatprep.subr.mxu0 0.0
  %2508 = vmatpush1.msra.mxu0 0.0
  %2509 = vmatprep.subr.mxu0 0.0
  %2510 = vmatpush1.msra.mxu0 0.0
  %2511 = vmatprep.subr.mxu0 0.0
  %2512 = vmatpush1.msra.mxu0 %v2483
  %2513 = vmatprep.subr.mxu0 0.0
  %2514 = vmatpush1.msra.mxu0 %v2482
  %2515 = vmatprep.subr.mxu0 0.0
  %2516 = vmatpush1.msra.mxu0 %v2481
  %2517 = vmatprep.subr.mxu0 0.0
  %2518 = vmatpush1.msra.mxu0 %v2480
  %2519 = vmatprep.subr.mxu0 0.0
  %2520 = vmatpush2.msra.mxu0 0.0
  %2521 = vmatprep.subr.mxu0 0.0
  %2522 = vmatpush2.msra.mxu0 0.0
  %2523 = vmatprep.subr.mxu0 0.0
  %2524 = vmatpush2.msra.mxu0 0.0
  %2525 = vmatprep.subr.mxu0 0.0
  %2526 = vmatpush2.msra.mxu0 0.0
  %2527 = vmatprep.subr.mxu0 0.0
  %2528 = vmatpush2.msra.mxu0 0.0
  %2529 = vmatprep.subr.mxu0 0.0
  %2530 = vmatpush2.msra.mxu0 0.0
  %2531 = vmatprep.subr.mxu0 0.0
  %2532 = vmatpush2.msra.mxu0 0.0
  %2533 = vmatprep.subr.mxu0 0.0
  %2534 = vmatpush2.msra.mxu0 0.0
  %2535 = vmatprep.subr.mxu0 0.0
  %2536 = vmatpush2.msra.mxu0 0.0
  %2537 = vmatprep.subr.mxu0 0.0
  %2538 = vmatpush2.msra.mxu0 0.0
  %2539 = vmatprep.subr.mxu0 0.0
  %2540 = vmatpush2.msra.mxu0 0.0
  %2541 = vmatprep.subr.mxu0 0.0
  %2542 = vmatpush2.msra.mxu0 0.0
  %2543 = vmatprep.subr.mxu0 0.0
  %2544 = vmatpush2.msra.mxu0 0.0
  %2545 = vmatprep.subr.mxu0 0.0
  %2546 = vmatpush2.msra.mxu0 0.0
  %2547 = vmatprep.subr.mxu0 0.0
  %2548 = vmatpush2.msra.mxu0 0.0
  %2549 = vmatprep.subr.mxu0 0.0
  %2550 = vmatpush2.msra.mxu0 0.0
  %2551 = vmatprep.mubr.f32.mxu0 0.0
  %2552 = vmatmul.mubr.f32.gmra.mxu0 %v2485
  %v2553 = vpop.f32.mrf.mxu0
  %v2554 = vadd.f32 0.0, %v2553
  %v2555 = vpop.f32.mrf.mxu0
  %2556 = vdwg.mxu0
  %v2558 = vsel %vm36, %v2474, 0
  %2560 = vmatprep.subr.mxu0 0.0
  %2561 = vmatpush1.msra.mxu0 0.0
  %2562 = vmatprep.subr.mxu0 0.0
  %2563 = vmatpush1.msra.mxu0 0.0
  %2564 = vmatprep.subr.mxu0 0.0
  %2565 = vmatpush1.msra.mxu0 0.0
  %2566 = vmatprep.subr.mxu0 0.0
  %2567 = vmatpush1.msra.mxu0 0.0
  %2568 = vmatprep.subr.mxu0 0.0
  %2569 = vmatpush1.msra.mxu0 0.0
  %2570 = vmatprep.subr.mxu0 0.0
  %2571 = vmatpush1.msra.mxu0 0.0
  %2572 = vmatprep.subr.mxu0 0.0
  %2573 = vmatpush1.msra.mxu0 0.0
  %2574 = vmatprep.subr.mxu0 0.0
  %2575 = vmatpush1.msra.mxu0 0.0
  %2576 = vmatprep.subr.mxu0 0.0
  %2577 = vmatpush1.msra.mxu0 0.0
  %2578 = vmatprep.subr.mxu0 0.0
  %2579 = vmatpush1.msra.mxu0 0.0
  %2580 = vmatprep.subr.mxu0 0.0
  %2581 = vmatpush1.msra.mxu0 0.0
  %2582 = vmatprep.subr.mxu0 0.0
  %2583 = vmatpush1.msra.mxu0 0.0
  %2584 = vmatprep.subr.mxu0 0.0
  %2585 = vmatpush1.msra.mxu0 %v2478
  %2586 = vmatprep.subr.mxu0 0.0
  %2587 = vmatpush1.msra.mxu0 %v2477
  %2588 = vmatprep.subr.mxu0 0.0
  %2589 = vmatpush1.msra.mxu0 %v2476
  %2590 = vmatprep.subr.mxu0 0.0
  %2591 = vmatpush1.msra.mxu0 %v2475
  %2592 = vmatprep.subr.mxu0 0.0
  %2593 = vmatpush2.msra.mxu0 0.0
  %2594 = vmatprep.subr.mxu0 0.0
  %2595 = vmatpush2.msra.mxu0 0.0
  %2596 = vmatprep.subr.mxu0 0.0
  %2597 = vmatpush2.msra.mxu0 0.0
  %2598 = vmatprep.subr.mxu0 0.0
  %2599 = vmatpush2.msra.mxu0 0.0
  %2600 = vmatprep.subr.mxu0 0.0
  %2601 = vmatpush2.msra.mxu0 0.0
  %2602 = vmatprep.subr.mxu0 0.0
  %2603 = vmatpush2.msra.mxu0 0.0
  %2604 = vmatprep.subr.mxu0 0.0
  %2605 = vmatpush2.msra.mxu0 0.0
  %2606 = vmatprep.subr.mxu0 0.0
  %2607 = vmatpush2.msra.mxu0 0.0
  %2608 = vmatprep.subr.mxu0 0.0
  %2609 = vmatpush2.msra.mxu0 0.0
  %2610 = vmatprep.subr.mxu0 0.0
  %2611 = vmatpush2.msra.mxu0 0.0
  %2612 = vmatprep.subr.mxu0 0.0
  %2613 = vmatpush2.msra.mxu0 0.0
  %2614 = vmatprep.subr.mxu0 0.0
  %2615 = vmatpush2.msra.mxu0 0.0
  %2616 = vmatprep.subr.mxu0 0.0
  %2617 = vmatpush2.msra.mxu0 0.0
  %2618 = vmatprep.subr.mxu0 0.0
  %2619 = vmatpush2.msra.mxu0 0.0
  %2620 = vmatprep.subr.mxu0 0.0
  %2621 = vmatpush2.msra.mxu0 0.0
  %2622 = vmatprep.subr.mxu0 0.0
  %2623 = vmatpush2.msra.mxu0 0.0
  %2624 = vmatprep.mubr.f32.mxu0 0.0
  %2625 = vmatmul.mubr.f32.gmra.mxu0 %v2558
  %v2626 = vpop.f32.mrf.mxu0
  %v2627 = vadd.f32 %v2554, %v2626
  %v2628 = vpop.f32.mrf.mxu0
  %2629 = vdwg.mxu0
  %v2630 = vld [vmem:[%s3] sm:$0x1]
  %v2632 = vlaneseq
  %v2633 = vshrl.u32 %v2632, 7
  %v2634 = vsub.s32 0, %v2633
  %v2635 = vrot.slane %v2630, %v2634
  %v2637 = vadd.f32 %v2627, %v2635
  %v2638 = vld [vmem:[#allocation3] sm:$0x3]
  %v2639 = vxor.u32 %v2637, 2147483648
  %v2640 = vmul.f32 %v2639, 1.442695
  %v2641 = vpow.pop %v2640
  %v2642 = vadd.f32 %v2641, 1.0
  %v2643 = vrcp.pop %v2642
  %v2644 = vmul.f32 1.0, %v2643
  %v2645 = vtanh.pop %v2637
  %2647 = vrot.lane.b32.xlu0 %v2638, 32
  %v2648 = vpop.permute.xlu0 %2647
  %v2650 = vmul.f32 %v2644, %v2648
  %2652 = vrot.lane.b32.xlu0 %v2645, 64
  %v2653 = vpop.permute.xlu0 %2652
  %v2655 = vmul.f32 %v2644, %v2653
  %2657 = vrot.lane.b32.xlu0 %v2655, 32
  %v2658 = vpop.permute.xlu0 %2657
  %v2660 = vadd.f32 %v2650, %v2658
  %v2661 = vtanh.pop %v2660
  %2663 = vrot.lane.b32.xlu0 %v2661, 64
  %v2664 = vpop.permute.xlu0 %2663
  %v2666 = vmul.f32 %v2644, %v2664
  %2668 = vrot.lane.b32.xlu0 %v2666, 32
  %v2669 = vpop.permute.xlu0 %2668
  %2671 = vst.msk [vmem:[#allocation2] sm:$0x3] %vm224, %v2669
  %2673 = vrot.lane.b32.xlu0 %v2660, 96
  %v2674 = vpop.permute.xlu0 %2673
  %2676 = vst.msk [vmem:[#allocation3] sm:$0x3] %vm224, %v2674
  %v2677 = vld [vmem:[%s231] sm:$0xff]
  %v2678 = vld [vmem:[%s231 + $0x8] sm:$0xff]
  %v2679 = vld [vmem:[%s231 + $0x10] sm:$0xff]
  %v2680 = vld [vmem:[%s231 + $0x18] sm:$0xff]
  %v2681 = vld [vmem:[%s236] sm:$0x3]
  %v2682 = vld [vmem:[%s238] sm:$0xff]
  %v2683 = vld [vmem:[%s238 + $0x8] sm:$0xff]
  %v2684 = vld [vmem:[%s238 + $0x10] sm:$0xff]
  %v2685 = vld [vmem:[%s238 + $0x18] sm:$0xff]
  %v2687 = vsel %vm36, %v2681, 0
  %2689 = vmatprep.subr.mxu0 0.0
  %2690 = vmatpush1.msra.mxu0 0.0
  %2691 = vmatprep.subr.mxu0 0.0
  %2692 = vmatpush1.msra.mxu0 0.0
  %2693 = vmatprep.subr.mxu0 0.0
  %2694 = vmatpush1.msra.mxu0 0.0
  %2695 = vmatprep.subr.mxu0 0.0
  %2696 = vmatpush1.msra.mxu0 0.0
  %2697 = vmatprep.subr.mxu0 0.0
  %2698 = vmatpush1.msra.mxu0 0.0
  %2699 = vmatprep.subr.mxu0 0.0
  %2700 = vmatpush1.msra.mxu0 0.0
  %2701 = vmatprep.subr.mxu0 0.0
  %2702 = vmatpush1.msra.mxu0 0.0
  %2703 = vmatprep.subr.mxu0 0.0
  %2704 = vmatpush1.msra.mxu0 0.0
  %2705 = vmatprep.subr.mxu0 0.0
  %2706 = vmatpush1.msra.mxu0 0.0
  %2707 = vmatprep.subr.mxu0 0.0
  %2708 = vmatpush1.msra.mxu0 0.0
  %2709 = vmatprep.subr.mxu0 0.0
  %2710 = vmatpush1.msra.mxu0 0.0
  %2711 = vmatprep.subr.mxu0 0.0
  %2712 = vmatpush1.msra.mxu0 0.0
  %2713 = vmatprep.subr.mxu0 0.0
  %2714 = vmatpush1.msra.mxu0 %v2685
  %2715 = vmatprep.subr.mxu0 0.0
  %2716 = vmatpush1.msra.mxu0 %v2684
  %2717 = vmatprep.subr.mxu0 0.0
  %2718 = vmatpush1.msra.mxu0 %v2683
  %2719 = vmatprep.subr.mxu0 0.0
  %2720 = vmatpush1.msra.mxu0 %v2682
  %2721 = vmatprep.subr.mxu0 0.0
  %2722 = vmatpush2.msra.mxu0 0.0
  %2723 = vmatprep.subr.mxu0 0.0
  %2724 = vmatpush2.msra.mxu0 0.0
  %2725 = vmatprep.subr.mxu0 0.0
  %2726 = vmatpush2.msra.mxu0 0.0
  %2727 = vmatprep.subr.mxu0 0.0
  %2728 = vmatpush2.msra.mxu0 0.0
  %2729 = vmatprep.subr.mxu0 0.0
  %2730 = vmatpush2.msra.mxu0 0.0
  %2731 = vmatprep.subr.mxu0 0.0
  %2732 = vmatpush2.msra.mxu0 0.0
  %2733 = vmatprep.subr.mxu0 0.0
  %2734 = vmatpush2.msra.mxu0 0.0
  %2735 = vmatprep.subr.mxu0 0.0
  %2736 = vmatpush2.msra.mxu0 0.0
  %2737 = vmatprep.subr.mxu0 0.0
  %2738 = vmatpush2.msra.mxu0 0.0
  %2739 = vmatprep.subr.mxu0 0.0
  %2740 = vmatpush2.msra.mxu0 0.0
  %2741 = vmatprep.subr.mxu0 0.0
  %2742 = vmatpush2.msra.mxu0 0.0
  %2743 = vmatprep.subr.mxu0 0.0
  %2744 = vmatpush2.msra.mxu0 0.0
  %2745 = vmatprep.subr.mxu0 0.0
  %2746 = vmatpush2.msra.mxu0 0.0
  %2747 = vmatprep.subr.mxu0 0.0
  %2748 = vmatpush2.msra.mxu0 0.0
  %2749 = vmatprep.subr.mxu0 0.0
  %2750 = vmatpush2.msra.mxu0 0.0
  %2751 = vmatprep.subr.mxu0 0.0
  %2752 = vmatpush2.msra.mxu0 0.0
  %2753 = vmatprep.mubr.f32.mxu0 0.0
  %2754 = vmatmul.mubr.f32.gmra.mxu0 %v2687
  %v2755 = vpop.f32.mrf.mxu0
  %v2756 = vadd.f32 0.0, %v2755
  %v2757 = vpop.f32.mrf.mxu0
  %2758 = vdwg.mxu0
  %v2759 = vsel %vm36, %v2669, 0
  %2761 = vmatprep.subr.mxu0 0.0
  %2762 = vmatpush1.msra.mxu0 0.0
  %2763 = vmatprep.subr.mxu0 0.0
  %2764 = vmatpush1.msra.mxu0 0.0
  %2765 = vmatprep.subr.mxu0 0.0
  %2766 = vmatpush1.msra.mxu0 0.0
  %2767 = vmatprep.subr.mxu0 0.0
  %2768 = vmatpush1.msra.mxu0 0.0
  %2769 = vmatprep.subr.mxu0 0.0
  %2770 = vmatpush1.msra.mxu0 0.0
  %2771 = vmatprep.subr.mxu0 0.0
  %2772 = vmatpush1.msra.mxu0 0.0
  %2773 = vmatprep.subr.mxu0 0.0
  %2774 = vmatpush1.msra.mxu0 0.0
  %2775 = vmatprep.subr.mxu0 0.0
  %2776 = vmatpush1.msra.mxu0 0.0
  %2777 = vmatprep.subr.mxu0 0.0
  %2778 = vmatpush1.msra.mxu0 0.0
  %2779 = vmatprep.subr.mxu0 0.0
  %2780 = vmatpush1.msra.mxu0 0.0
  %2781 = vmatprep.subr.mxu0 0.0
  %2782 = vmatpush1.msra.mxu0 0.0
  %2783 = vmatprep.subr.mxu0 0.0
  %2784 = vmatpush1.msra.mxu0 0.0
  %2785 = vmatprep.subr.mxu0 0.0
  %2786 = vmatpush1.msra.mxu0 %v2680
  %2787 = vmatprep.subr.mxu0 0.0
  %2788 = vmatpush1.msra.mxu0 %v2679
  %2789 = vmatprep.subr.mxu0 0.0
  %2790 = vmatpush1.msra.mxu0 %v2678
  %2791 = vmatprep.subr.mxu0 0.0
  %2792 = vmatpush1.msra.mxu0 %v2677
  %2793 = vmatprep.subr.mxu0 0.0
  %2794 = vmatpush2.msra.mxu0 0.0
  %2795 = vmatprep.subr.mxu0 0.0
  %2796 = vmatpush2.msra.mxu0 0.0
  %2797 = vmatprep.subr.mxu0 0.0
  %2798 = vmatpush2.msra.mxu0 0.0
  %2799 = vmatprep.subr.mxu0 0.0
  %2800 = vmatpush2.msra.mxu0 0.0
  %2801 = vmatprep.subr.mxu0 0.0
  %2802 = vmatpush2.msra.mxu0 0.0
  %2803 = vmatprep.subr.mxu0 0.0
  %2804 = vmatpush2.msra.mxu0 0.0
  %2805 = vmatprep.subr.mxu0 0.0
  %2806 = vmatpush2.msra.mxu0 0.0
  %2807 = vmatprep.subr.mxu0 0.0
  %2808 = vmatpush2.msra.mxu0 0.0
  %2809 = vmatprep.subr.mxu0 0.0
  %2810 = vmatpush2.msra.mxu0 0.0
  %2811 = vmatprep.subr.mxu0 0.0
  %2812 = vmatpush2.msra.mxu0 0.0
  %2813 = vmatprep.subr.mxu0 0.0
  %2814 = vmatpush2.msra.mxu0 0.0
  %2815 = vmatprep.subr.mxu0 0.0
  %2816 = vmatpush2.msra.mxu0 0.0
  %2817 = vmatprep.subr.mxu0 0.0
  %2818 = vmatpush2.msra.mxu0 0.0
  %2819 = vmatprep.subr.mxu0 0.0
  %2820 = vmatpush2.msra.mxu0 0.0
  %2821 = vmatprep.subr.mxu0 0.0
  %2822 = vmatpush2.msra.mxu0 0.0
  %2823 = vmatprep.subr.mxu0 0.0
  %2824 = vmatpush2.msra.mxu0 0.0
  %2825 = vmatprep.mubr.f32.mxu0 0.0
  %2826 = vmatmul.mubr.f32.gmra.mxu0 %v2759
  %v2827 = vpop.f32.mrf.mxu0
  %v2828 = vadd.f32 %v2756, %v2827
  %v2829 = vpop.f32.mrf.mxu0
  %2830 = vdwg.mxu0
  %v2831 = vld [vmem:[%s388] sm:$0x1]
  %v2833 = vlaneseq
  %v2834 = vshrl.u32 %v2833, 7
  %v2835 = vsub.s32 0, %v2834
  %v2836 = vrot.slane %v2831, %v2835
  %v2838 = vadd.f32 %v2828, %v2836
  %v2839 = vld [vmem:[%s397] sm:$0x3]
  %v2840 = vxor.u32 %v2838, 2147483648
  %v2841 = vmul.f32 %v2840, 1.442695
  %v2842 = vpow.pop %v2841
  %v2843 = vadd.f32 %v2842, 1.0
  %v2844 = vrcp.pop %v2843
  %v2845 = vmul.f32 1.0, %v2844
  %v2846 = vtanh.pop %v2838
  %2848 = vrot.lane.b32.xlu0 %v2839, 32
  %v2849 = vpop.permute.xlu0 %2848
  %v2851 = vmul.f32 %v2845, %v2849
  %2853 = vrot.lane.b32.xlu0 %v2846, 64
  %v2854 = vpop.permute.xlu0 %2853
  %v2856 = vmul.f32 %v2845, %v2854
  %2858 = vrot.lane.b32.xlu0 %v2856, 32
  %v2859 = vpop.permute.xlu0 %2858
  %v2861 = vadd.f32 %v2851, %v2859
  %v2862 = vtanh.pop %v2861
  %2864 = vrot.lane.b32.xlu0 %v2862, 64
  %v2865 = vpop.permute.xlu0 %2864
  %v2867 = vmul.f32 %v2845, %v2865
  %2869 = vrot.lane.b32.xlu0 %v2867, 32
  %v2870 = vpop.permute.xlu0 %2869
  %2872 = vst.msk [vmem:[%s236] sm:$0x3] %vm224, %v2870
  %2874 = vrot.lane.b32.xlu0 %v2861, 96
  %v2875 = vpop.permute.xlu0 %2874
  %2877 = vst.msk [vmem:[%s397] sm:$0x3] %vm224, %v2875
  %s2878 = scalar_lea.vmem %s4, 12
  %2879 = vst.msk [vmem:[%s2878] sm:$0x3] %vm224, %v2870
  %s2880 = scalar_lea.vmem %s0, 14
  %v2881 = vld [vmem:[%s2880] sm:$0x3]
  %v2882 = vld [vmem:[%s1] sm:$0xff]
  %v2883 = vld [vmem:[%s1 + $0x8] sm:$0xff]
  %v2884 = vld [vmem:[%s1 + $0x10] sm:$0xff]
  %v2885 = vld [vmem:[%s1 + $0x18] sm:$0xff]
  %v2886 = vld [vmem:[#allocation2] sm:$0x3]
  %v2887 = vld [vmem:[%s2] sm:$0xff]
  %v2888 = vld [vmem:[%s2 + $0x8] sm:$0xff]
  %v2889 = vld [vmem:[%s2 + $0x10] sm:$0xff]
  %v2890 = vld [vmem:[%s2 + $0x18] sm:$0xff]
  %v2892 = vsel %vm36, %v2886, 0
  %2894 = vmatprep.subr.mxu0 0.0
  %2895 = vmatpush1.msra.mxu0 0.0
  %2896 = vmatprep.subr.mxu0 0.0
  %2897 = vmatpush1.msra.mxu0 0.0
  %2898 = vmatprep.subr.mxu0 0.0
  %2899 = vmatpush1.msra.mxu0 0.0
  %2900 = vmatprep.subr.mxu0 0.0
  %2901 = vmatpush1.msra.mxu0 0.0
  %2902 = vmatprep.subr.mxu0 0.0
  %2903 = vmatpush1.msra.mxu0 0.0
  %2904 = vmatprep.subr.mxu0 0.0
  %2905 = vmatpush1.msra.mxu0 0.0
  %2906 = vmatprep.subr.mxu0 0.0
  %2907 = vmatpush1.msra.mxu0 0.0
  %2908 = vmatprep.subr.mxu0 0.0
  %2909 = vmatpush1.msra.mxu0 0.0
  %2910 = vmatprep.subr.mxu0 0.0
  %2911 = vmatpush1.msra.mxu0 0.0
  %2912 = vmatprep.subr.mxu0 0.0
  %2913 = vmatpush1.msra.mxu0 0.0
  %2914 = vmatprep.subr.mxu0 0.0
  %2915 = vmatpush1.msra.mxu0 0.0
  %2916 = vmatprep.subr.mxu0 0.0
  %2917 = vmatpush1.msra.mxu0 0.0
  %2918 = vmatprep.subr.mxu0 0.0
  %2919 = vmatpush1.msra.mxu0 %v2890
  %2920 = vmatprep.subr.mxu0 0.0
  %2921 = vmatpush1.msra.mxu0 %v2889
  %2922 = vmatprep.subr.mxu0 0.0
  %2923 = vmatpush1.msra.mxu0 %v2888
  %2924 = vmatprep.subr.mxu0 0.0
  %2925 = vmatpush1.msra.mxu0 %v2887
  %2926 = vmatprep.subr.mxu0 0.0
  %2927 = vmatpush2.msra.mxu0 0.0
  %2928 = vmatprep.subr.mxu0 0.0
  %2929 = vmatpush2.msra.mxu0 0.0
  %2930 = vmatprep.subr.mxu0 0.0
  %2931 = vmatpush2.msra.mxu0 0.0
  %2932 = vmatprep.subr.mxu0 0.0
  %2933 = vmatpush2.msra.mxu0 0.0
  %2934 = vmatprep.subr.mxu0 0.0
  %2935 = vmatpush2.msra.mxu0 0.0
  %2936 = vmatprep.subr.mxu0 0.0
  %2937 = vmatpush2.msra.mxu0 0.0
  %2938 = vmatprep.subr.mxu0 0.0
  %2939 = vmatpush2.msra.mxu0 0.0
  %2940 = vmatprep.subr.mxu0 0.0
  %2941 = vmatpush2.msra.mxu0 0.0
  %2942 = vmatprep.subr.mxu0 0.0
  %2943 = vmatpush2.msra.mxu0 0.0
  %2944 = vmatprep.subr.mxu0 0.0
  %2945 = vmatpush2.msra.mxu0 0.0
  %2946 = vmatprep.subr.mxu0 0.0
  %2947 = vmatpush2.msra.mxu0 0.0
  %2948 = vmatprep.subr.mxu0 0.0
  %2949 = vmatpush2.msra.mxu0 0.0
  %2950 = vmatprep.subr.mxu0 0.0
  %2951 = vmatpush2.msra.mxu0 0.0
  %2952 = vmatprep.subr.mxu0 0.0
  %2953 = vmatpush2.msra.mxu0 0.0
  %2954 = vmatprep.subr.mxu0 0.0
  %2955 = vmatpush2.msra.mxu0 0.0
  %2956 = vmatprep.subr.mxu0 0.0
  %2957 = vmatpush2.msra.mxu0 0.0
  %2958 = vmatprep.mubr.f32.mxu0 0.0
  %2959 = vmatmul.mubr.f32.gmra.mxu0 %v2892
  %v2960 = vpop.f32.mrf.mxu0
  %v2961 = vadd.f32 0.0, %v2960
  %v2962 = vpop.f32.mrf.mxu0
  %2963 = vdwg.mxu0
  %v2965 = vsel %vm36, %v2881, 0
  %2967 = vmatprep.subr.mxu0 0.0
  %2968 = vmatpush1.msra.mxu0 0.0
  %2969 = vmatprep.subr.mxu0 0.0
  %2970 = vmatpush1.msra.mxu0 0.0
  %2971 = vmatprep.subr.mxu0 0.0
  %2972 = vmatpush1.msra.mxu0 0.0
  %2973 = vmatprep.subr.mxu0 0.0
  %2974 = vmatpush1.msra.mxu0 0.0
  %2975 = vmatprep.subr.mxu0 0.0
  %2976 = vmatpush1.msra.mxu0 0.0
  %2977 = vmatprep.subr.mxu0 0.0
  %2978 = vmatpush1.msra.mxu0 0.0
  %2979 = vmatprep.subr.mxu0 0.0
  %2980 = vmatpush1.msra.mxu0 0.0
  %2981 = vmatprep.subr.mxu0 0.0
  %2982 = vmatpush1.msra.mxu0 0.0
  %2983 = vmatprep.subr.mxu0 0.0
  %2984 = vmatpush1.msra.mxu0 0.0
  %2985 = vmatprep.subr.mxu0 0.0
  %2986 = vmatpush1.msra.mxu0 0.0
  %2987 = vmatprep.subr.mxu0 0.0
  %2988 = vmatpush1.msra.mxu0 0.0
  %2989 = vmatprep.subr.mxu0 0.0
  %2990 = vmatpush1.msra.mxu0 0.0
  %2991 = vmatprep.subr.mxu0 0.0
  %2992 = vmatpush1.msra.mxu0 %v2885
  %2993 = vmatprep.subr.mxu0 0.0
  %2994 = vmatpush1.msra.mxu0 %v2884
  %2995 = vmatprep.subr.mxu0 0.0
  %2996 = vmatpush1.msra.mxu0 %v2883
  %2997 = vmatprep.subr.mxu0 0.0
  %2998 = vmatpush1.msra.mxu0 %v2882
  %2999 = vmatprep.subr.mxu0 0.0
  %3000 = vmatpush2.msra.mxu0 0.0
  %3001 = vmatprep.subr.mxu0 0.0
  %3002 = vmatpush2.msra.mxu0 0.0
  %3003 = vmatprep.subr.mxu0 0.0
  %3004 = vmatpush2.msra.mxu0 0.0
  %3005 = vmatprep.subr.mxu0 0.0
  %3006 = vmatpush2.msra.mxu0 0.0
  %3007 = vmatprep.subr.mxu0 0.0
  %3008 = vmatpush2.msra.mxu0 0.0
  %3009 = vmatprep.subr.mxu0 0.0
  %3010 = vmatpush2.msra.mxu0 0.0
  %3011 = vmatprep.subr.mxu0 0.0
  %3012 = vmatpush2.msra.mxu0 0.0
  %3013 = vmatprep.subr.mxu0 0.0
  %3014 = vmatpush2.msra.mxu0 0.0
  %3015 = vmatprep.subr.mxu0 0.0
  %3016 = vmatpush2.msra.mxu0 0.0
  %3017 = vmatprep.subr.mxu0 0.0
  %3018 = vmatpush2.msra.mxu0 0.0
  %3019 = vmatprep.subr.mxu0 0.0
  %3020 = vmatpush2.msra.mxu0 0.0
  %3021 = vmatprep.subr.mxu0 0.0
  %3022 = vmatpush2.msra.mxu0 0.0
  %3023 = vmatprep.subr.mxu0 0.0
  %3024 = vmatpush2.msra.mxu0 0.0
  %3025 = vmatprep.subr.mxu0 0.0
  %3026 = vmatpush2.msra.mxu0 0.0
  %3027 = vmatprep.subr.mxu0 0.0
  %3028 = vmatpush2.msra.mxu0 0.0
  %3029 = vmatprep.subr.mxu0 0.0
  %3030 = vmatpush2.msra.mxu0 0.0
  %3031 = vmatprep.mubr.f32.mxu0 0.0
  %3032 = vmatmul.mubr.f32.gmra.mxu0 %v2965
  %v3033 = vpop.f32.mrf.mxu0
  %v3034 = vadd.f32 %v2961, %v3033
  %v3035 = vpop.f32.mrf.mxu0
  %3036 = vdwg.mxu0
  %v3037 = vld [vmem:[%s3] sm:$0x1]
  %v3039 = vlaneseq
  %v3040 = vshrl.u32 %v3039, 7
  %v3041 = vsub.s32 0, %v3040
  %v3042 = vrot.slane %v3037, %v3041
  %v3044 = vadd.f32 %v3034, %v3042
  %v3045 = vld [vmem:[#allocation3] sm:$0x3]
  %v3046 = vxor.u32 %v3044, 2147483648
  %v3047 = vmul.f32 %v3046, 1.442695
  %v3048 = vpow.pop %v3047
  %v3049 = vadd.f32 %v3048, 1.0
  %v3050 = vrcp.pop %v3049
  %v3051 = vmul.f32 1.0, %v3050
  %v3052 = vtanh.pop %v3044
  %3054 = vrot.lane.b32.xlu0 %v3045, 32
  %v3055 = vpop.permute.xlu0 %3054
  %v3057 = vmul.f32 %v3051, %v3055
  %3059 = vrot.lane.b32.xlu0 %v3052, 64
  %v3060 = vpop.permute.xlu0 %3059
  %v3062 = vmul.f32 %v3051, %v3060
  %3064 = vrot.lane.b32.xlu0 %v3062, 32
  %v3065 = vpop.permute.xlu0 %3064
  %v3067 = vadd.f32 %v3057, %v3065
  %v3068 = vtanh.pop %v3067
  %3070 = vrot.lane.b32.xlu0 %v3068, 64
  %v3071 = vpop.permute.xlu0 %3070
  %v3073 = vmul.f32 %v3051, %v3071
  %3075 = vrot.lane.b32.xlu0 %v3073, 32
  %v3076 = vpop.permute.xlu0 %3075
  %3078 = vst.msk [vmem:[#allocation2] sm:$0x3] %vm224, %v3076
  %3080 = vrot.lane.b32.xlu0 %v3067, 96
  %v3081 = vpop.permute.xlu0 %3080
  %3083 = vst.msk [vmem:[#allocation3] sm:$0x3] %vm224, %v3081
  %v3084 = vld [vmem:[%s231] sm:$0xff]
  %v3085 = vld [vmem:[%s231 + $0x8] sm:$0xff]
  %v3086 = vld [vmem:[%s231 + $0x10] sm:$0xff]
  %v3087 = vld [vmem:[%s231 + $0x18] sm:$0xff]
  %v3088 = vld [vmem:[%s236] sm:$0x3]
  %v3089 = vld [vmem:[%s238] sm:$0xff]
  %v3090 = vld [vmem:[%s238 + $0x8] sm:$0xff]
  %v3091 = vld [vmem:[%s238 + $0x10] sm:$0xff]
  %v3092 = vld [vmem:[%s238 + $0x18] sm:$0xff]
  %v3094 = vsel %vm36, %v3088, 0
  %3096 = vmatprep.subr.mxu0 0.0
  %3097 = vmatpush1.msra.mxu0 0.0
  %3098 = vmatprep.subr.mxu0 0.0
  %3099 = vmatpush1.msra.mxu0 0.0
  %3100 = vmatprep.subr.mxu0 0.0
  %3101 = vmatpush1.msra.mxu0 0.0
  %3102 = vmatprep.subr.mxu0 0.0
  %3103 = vmatpush1.msra.mxu0 0.0
  %3104 = vmatprep.subr.mxu0 0.0
  %3105 = vmatpush1.msra.mxu0 0.0
  %3106 = vmatprep.subr.mxu0 0.0
  %3107 = vmatpush1.msra.mxu0 0.0
  %3108 = vmatprep.subr.mxu0 0.0
  %3109 = vmatpush1.msra.mxu0 0.0
  %3110 = vmatprep.subr.mxu0 0.0
  %3111 = vmatpush1.msra.mxu0 0.0
  %3112 = vmatprep.subr.mxu0 0.0
  %3113 = vmatpush1.msra.mxu0 0.0
  %3114 = vmatprep.subr.mxu0 0.0
  %3115 = vmatpush1.msra.mxu0 0.0
  %3116 = vmatprep.subr.mxu0 0.0
  %3117 = vmatpush1.msra.mxu0 0.0
  %3118 = vmatprep.subr.mxu0 0.0
  %3119 = vmatpush1.msra.mxu0 0.0
  %3120 = vmatprep.subr.mxu0 0.0
  %3121 = vmatpush1.msra.mxu0 %v3092
  %3122 = vmatprep.subr.mxu0 0.0
  %3123 = vmatpush1.msra.mxu0 %v3091
  %3124 = vmatprep.subr.mxu0 0.0
  %3125 = vmatpush1.msra.mxu0 %v3090
  %3126 = vmatprep.subr.mxu0 0.0
  %3127 = vmatpush1.msra.mxu0 %v3089
  %3128 = vmatprep.subr.mxu0 0.0
  %3129 = vmatpush2.msra.mxu0 0.0
  %3130 = vmatprep.subr.mxu0 0.0
  %3131 = vmatpush2.msra.mxu0 0.0
  %3132 = vmatprep.subr.mxu0 0.0
  %3133 = vmatpush2.msra.mxu0 0.0
  %3134 = vmatprep.subr.mxu0 0.0
  %3135 = vmatpush2.msra.mxu0 0.0
  %3136 = vmatprep.subr.mxu0 0.0
  %3137 = vmatpush2.msra.mxu0 0.0
  %3138 = vmatprep.subr.mxu0 0.0
  %3139 = vmatpush2.msra.mxu0 0.0
  %3140 = vmatprep.subr.mxu0 0.0
  %3141 = vmatpush2.msra.mxu0 0.0
  %3142 = vmatprep.subr.mxu0 0.0
  %3143 = vmatpush2.msra.mxu0 0.0
  %3144 = vmatprep.subr.mxu0 0.0
  %3145 = vmatpush2.msra.mxu0 0.0
  %3146 = vmatprep.subr.mxu0 0.0
  %3147 = vmatpush2.msra.mxu0 0.0
  %3148 = vmatprep.subr.mxu0 0.0
  %3149 = vmatpush2.msra.mxu0 0.0
  %3150 = vmatprep.subr.mxu0 0.0
  %3151 = vmatpush2.msra.mxu0 0.0
  %3152 = vmatprep.subr.mxu0 0.0
  %3153 = vmatpush2.msra.mxu0 0.0
  %3154 = vmatprep.subr.mxu0 0.0
  %3155 = vmatpush2.msra.mxu0 0.0
  %3156 = vmatprep.subr.mxu0 0.0
  %3157 = vmatpush2.msra.mxu0 0.0
  %3158 = vmatprep.subr.mxu0 0.0
  %3159 = vmatpush2.msra.mxu0 0.0
  %3160 = vmatprep.mubr.f32.mxu0 0.0
  %3161 = vmatmul.mubr.f32.gmra.mxu0 %v3094
  %v3162 = vpop.f32.mrf.mxu0
  %v3163 = vadd.f32 0.0, %v3162
  %v3164 = vpop.f32.mrf.mxu0
  %3165 = vdwg.mxu0
  %v3166 = vsel %vm36, %v3076, 0
  %3168 = vmatprep.subr.mxu0 0.0
  %3169 = vmatpush1.msra.mxu0 0.0
  %3170 = vmatprep.subr.mxu0 0.0
  %3171 = vmatpush1.msra.mxu0 0.0
  %3172 = vmatprep.subr.mxu0 0.0
  %3173 = vmatpush1.msra.mxu0 0.0
  %3174 = vmatprep.subr.mxu0 0.0
  %3175 = vmatpush1.msra.mxu0 0.0
  %3176 = vmatprep.subr.mxu0 0.0
  %3177 = vmatpush1.msra.mxu0 0.0
  %3178 = vmatprep.subr.mxu0 0.0
  %3179 = vmatpush1.msra.mxu0 0.0
  %3180 = vmatprep.subr.mxu0 0.0
  %3181 = vmatpush1.msra.mxu0 0.0
  %3182 = vmatprep.subr.mxu0 0.0
  %3183 = vmatpush1.msra.mxu0 0.0
  %3184 = vmatprep.subr.mxu0 0.0
  %3185 = vmatpush1.msra.mxu0 0.0
  %3186 = vmatprep.subr.mxu0 0.0
  %3187 = vmatpush1.msra.mxu0 0.0
  %3188 = vmatprep.subr.mxu0 0.0
  %3189 = vmatpush1.msra.mxu0 0.0
  %3190 = vmatprep.subr.mxu0 0.0
  %3191 = vmatpush1.msra.mxu0 0.0
  %3192 = vmatprep.subr.mxu0 0.0
  %3193 = vmatpush1.msra.mxu0 %v3087
  %3194 = vmatprep.subr.mxu0 0.0
  %3195 = vmatpush1.msra.mxu0 %v3086
  %3196 = vmatprep.subr.mxu0 0.0
  %3197 = vmatpush1.msra.mxu0 %v3085
  %3198 = vmatprep.subr.mxu0 0.0
  %3199 = vmatpush1.msra.mxu0 %v3084
  %3200 = vmatprep.subr.mxu0 0.0
  %3201 = vmatpush2.msra.mxu0 0.0
  %3202 = vmatprep.subr.mxu0 0.0
  %3203 = vmatpush2.msra.mxu0 0.0
  %3204 = vmatprep.subr.mxu0 0.0
  %3205 = vmatpush2.msra.mxu0 0.0
  %3206 = vmatprep.subr.mxu0 0.0
  %3207 = vmatpush2.msra.mxu0 0.0
  %3208 = vmatprep.subr.mxu0 0.0
  %3209 = vmatpush2.msra.mxu0 0.0
  %3210 = vmatprep.subr.mxu0 0.0
  %3211 = vmatpush2.msra.mxu0 0.0
  %3212 = vmatprep.subr.mxu0 0.0
  %3213 = vmatpush2.msra.mxu0 0.0
  %3214 = vmatprep.subr.mxu0 0.0
  %3215 = vmatpush2.msra.mxu0 0.0
  %3216 = vmatprep.subr.mxu0 0.0
  %3217 = vmatpush2.msra.mxu0 0.0
  %3218 = vmatprep.subr.mxu0 0.0
  %3219 = vmatpush2.msra.mxu0 0.0
  %3220 = vmatprep.subr.mxu0 0.0
  %3221 = vmatpush2.msra.mxu0 0.0
  %3222 = vmatprep.subr.mxu0 0.0
  %3223 = vmatpush2.msra.mxu0 0.0
  %3224 = vmatprep.subr.mxu0 0.0
  %3225 = vmatpush2.msra.mxu0 0.0
  %3226 = vmatprep.subr.mxu0 0.0
  %3227 = vmatpush2.msra.mxu0 0.0
  %3228 = vmatprep.subr.mxu0 0.0
  %3229 = vmatpush2.msra.mxu0 0.0
  %3230 = vmatprep.subr.mxu0 0.0
  %3231 = vmatpush2.msra.mxu0 0.0
  %3232 = vmatprep.mubr.f32.mxu0 0.0
  %3233 = vmatmul.mubr.f32.gmra.mxu0 %v3166
  %v3234 = vpop.f32.mrf.mxu0
  %v3235 = vadd.f32 %v3163, %v3234
  %v3236 = vpop.f32.mrf.mxu0
  %3237 = vdwg.mxu0
  %v3238 = vld [vmem:[%s388] sm:$0x1]
  %v3240 = vlaneseq
  %v3241 = vshrl.u32 %v3240, 7
  %v3242 = vsub.s32 0, %v3241
  %v3243 = vrot.slane %v3238, %v3242
  %v3245 = vadd.f32 %v3235, %v3243
  %v3246 = vld [vmem:[%s397] sm:$0x3]
  %v3247 = vxor.u32 %v3245, 2147483648
  %v3248 = vmul.f32 %v3247, 1.442695
  %v3249 = vpow.pop %v3248
  %v3250 = vadd.f32 %v3249, 1.0
  %v3251 = vrcp.pop %v3250
  %v3252 = vmul.f32 1.0, %v3251
  %v3253 = vtanh.pop %v3245
  %3255 = vrot.lane.b32.xlu0 %v3246, 32
  %v3256 = vpop.permute.xlu0 %3255
  %v3258 = vmul.f32 %v3252, %v3256
  %3260 = vrot.lane.b32.xlu0 %v3253, 64
  %v3261 = vpop.permute.xlu0 %3260
  %v3263 = vmul.f32 %v3252, %v3261
  %3265 = vrot.lane.b32.xlu0 %v3263, 32
  %v3266 = vpop.permute.xlu0 %3265
  %v3268 = vadd.f32 %v3258, %v3266
  %v3269 = vtanh.pop %v3268
  %3271 = vrot.lane.b32.xlu0 %v3269, 64
  %v3272 = vpop.permute.xlu0 %3271
  %v3274 = vmul.f32 %v3252, %v3272
  %3276 = vrot.lane.b32.xlu0 %v3274, 32
  %v3277 = vpop.permute.xlu0 %3276
  %3279 = vst.msk [vmem:[%s236] sm:$0x3] %vm224, %v3277
  %3281 = vrot.lane.b32.xlu0 %v3268, 96
  %v3282 = vpop.permute.xlu0 %3281
  %3284 = vst.msk [vmem:[%s397] sm:$0x3] %vm224, %v3282
  %s3285 = scalar_lea.vmem %s4, 14
  %3286 = vst.msk [vmem:[%s3285] sm:$0x3] %vm224, %v3277
  // Predicated region
  $region22: #{seq_model_loss_pallas.2} parent=0 // pred_check
    _
  $region23: #{seq_model_loss_pallas.2} parent=0 // pred_check_branch
    %3288 = sbr.rel (0) target = $region25
  $region24: #{seq_model_loss_pallas.2} parent=0 // pred_region
    _
  $region25: #{seq_model_loss_pallas.2} parent=0 // pred_fallthru
    _
  // Predicated region
  $region26: #{seq_model_loss_pallas.2} parent=0 // pred_check
    _
  $region27: #{seq_model_loss_pallas.2} parent=0 // pred_check_branch
    %3290 = sbr.rel (0) target = $region29
  $region28: #{seq_model_loss_pallas.2} parent=0 // pred_region
    _
  $region29: #{seq_model_loss_pallas.2} parent=0 // pred_fallthru
    _

</llo_original>
